<compile_context>
chip_gen: v6e
topology: v6e:2x2x1
jax: 0.10.0
libtpu: 0.0.40
codegen_flags: <defaults>
</compile_context>

<pallas_src>
import jax
import jax.numpy as jnp
from jax import lax
from jax.experimental import pallas as pl
from jax.experimental.pallas import tpu as pltpu


# ----------------------------------------------------------------------------
# Pallas kernel: one grid step == one LSTM layer over the full sequence.
# ----------------------------------------------------------------------------
def encoder_lstm_kernel(x_ref, wih_ref, whh_ref, b_ref,
                        y_ref, hN_ref, cN_ref, gx_scr):
  """One LSTM layer (time-major) per grid step.

  x_ref  : (T, Bp, H)   layer-0 input, features zero-padded E -> H  (f32)
  wih_ref: (1, H, 4H)   this layer's input-projection weights       (bf16)
  whh_ref: (1, H, 4H)   this layer's recurrent weights              (bf16)
  b_ref  : (1, 1, 4H)   b_ih + b_hh                                 (f32)
  y_ref  : (T, Bp, H)   inter-layer activations / final outputs     (f32,
                        resident in VMEM across the whole layer grid)
  hN_ref : (1, Bp, H)   final hidden state of this layer            (f32)
  cN_ref : (1, Bp, H)   final cell state of this layer              (f32)
  gx_scr : (T, Bp, 4H)  VMEM scratch for the hoisted input projection
  """
  layer = pl.program_id(0)
  T, Bp, H = y_ref.shape

  # Layer 0 reads the (padded) embedded input; deeper layers read the previous
  # layer's activations, which already live in y_ref.
  @pl.when(layer == 0)
  def _():
    y_ref[...] = x_ref[...]

  wih = wih_ref[0]                              # (H, 4H)  bf16
  whh = whh_ref[0]                              # (H, 4H)  bf16
  bias = b_ref[0]                               # (1, 4H)  f32

  # Hoisted input projection + bias: ONE MXU GEMM over M = T*Bp rows, staged
  # in VMEM scratch so the unrolled time loop reads aligned (Bp, 4H) slabs.
  layer_in = y_ref[...].reshape(T * Bp, H).astype(jnp.bfloat16)
  gx_scr[...] = (
      jnp.dot(layer_in, wih, preferred_element_type=jnp.float32) + bias
  ).reshape(T, Bp, 4 * H)

  # t = 0: h = c = 0, so skip the recurrent matmul entirely (exact).
  g0 = gx_scr[0]                                # (Bp, 4H) f32
  i_g = jax.nn.sigmoid(g0[:, 0 * H:1 * H])
  g_g = jnp.tanh(g0[:, 2 * H:3 * H])
  o_g = jax.nn.sigmoid(g0[:, 3 * H:4 * H])
  c = i_g * g_g
  h = o_g * jnp.tanh(c)
  y_ref[0] = h

  # Fully unrolled serial recurrence (T is static & small): gives the LLO
  # scheduler cross-step visibility for MXU / EUP / VPU overlap.
  for t in range(1, T):
    gates = gx_scr[t] + jnp.dot(h.astype(jnp.bfloat16), whh,
                                preferred_element_type=jnp.float32)
    i_g = jax.nn.sigmoid(gates[:, 0 * H:1 * H])
    f_g = jax.nn.sigmoid(gates[:, 1 * H:2 * H])
    g_g = jnp.tanh(gates[:, 2 * H:3 * H])
    o_g = jax.nn.sigmoid(gates[:, 3 * H:4 * H])
    c = f_g * c + i_g * g_g
    h = o_g * jnp.tanh(c)
    y_ref[t] = h                                # dense (Bp, H) unmasked store

  hN_ref[0] = h
  cN_ref[0] = c


def _round_up(x, m):
  return (x + m - 1) // m * m


def encoder_lstm_fused(x_tm, lstm_params):
  """Run all LSTM layers in one pallas_call with a layer grid.

  x_tm: (T, B, E) time-major f32 input.
  Returns y (T, B, H), h_final (L, B, H), c_final (L, B, H).
  """
  T, B, E = x_tm.shape
  w_ih_s = lstm_params["w_ih_s"]                # (L, H, 4H) bf16
  w_hh_s = lstm_params["w_hh_s"]                # (L, H, 4H) bf16
  b_s = lstm_params["b_s"]                      # (L, 1, 4H) f32
  L, H, H4 = w_hh_s.shape

  # Pad batch to the f32 sublane size and layer-0 features up to H so every
  # layer shares one uniform block shape and all reshapes are layout-free.
  Bp = max(8, _round_up(B, 8))
  x_p = jnp.pad(x_tm, ((0, 0), (0, Bp - B), (0, H - E)))

  y_p, h_p, c_p = pl.pallas_call(
      encoder_lstm_kernel,
      out_shape=(
          jax.ShapeDtypeStruct((T, Bp, H), jnp.float32),   # y (time-major)
          jax.ShapeDtypeStruct((L, Bp, H), jnp.float32),   # h_T per layer
          jax.ShapeDtypeStruct((L, Bp, H), jnp.float32),   # c_T per layer
      ),
      grid_spec=pltpu.PrefetchScalarGridSpec(
          num_scalar_prefetch=0,
          grid=(L,),
          in_specs=[
              pl.BlockSpec((T, Bp, H), lambda l: (0, 0, 0)),   # x (resident)
              pl.BlockSpec((1, H, H4), lambda l: (l, 0, 0)),   # W_ih[l]
              pl.BlockSpec((1, H, H4), lambda l: (l, 0, 0)),   # W_hh[l]
              pl.BlockSpec((1, 1, H4), lambda l: (l, 0, 0)),   # bias[l]
          ],
          out_specs=(
              pl.BlockSpec((T, Bp, H), lambda l: (0, 0, 0)),   # y (resident)
              pl.BlockSpec((1, Bp, H), lambda l: (l, 0, 0)),   # h_T[l]
              pl.BlockSpec((1, Bp, H), lambda l: (l, 0, 0)),   # c_T[l]
          ),
          scratch_shapes=[
              pltpu.VMEM((T, Bp, H4), jnp.float32),            # gx staging
          ],
      ),
      compiler_params=pltpu.CompilerParams(
          dimension_semantics=("arbitrary",)),
  )(x_p, w_ih_s, w_hh_s, b_s)

  # Strip the batch padding.
  return y_p[:, :B, :], h_p[:, :B, :], c_p[:, :B, :]


# ----------------------------------------------------------------------------
# Encoder: parameter init + forward wrapper.
# ----------------------------------------------------------------------------
def init_encoder_params(key, vocab_size, embed_size, hidden_size, num_layers):
  # The fused layout stages layer-0 input in the (T, Bp, H) activation buffer,
  # so it requires embed_size <= hidden_size (true for this module: 128 <= 256).
  assert embed_size <= hidden_size

  params = {}
  key, k_emb = jax.random.split(key)
  params["embedding"] = jax.random.normal(
      k_emb, (vocab_size, embed_size), jnp.float32)     # nn.Embedding: N(0,1)

  H = hidden_size
  bound = 1.0 / jnp.sqrt(H)
  w_ih_list, w_hh_list, b_list = [], [], []
  for layer in range(num_layers):
    d_in = embed_size if layer == 0 else H
    key, k1, k2, k3, k4 = jax.random.split(key, 5)
    w_ih = jax.random.uniform(k1, (4 * H, d_in), jnp.float32, -bound, bound)
    w_hh = jax.random.uniform(k2, (4 * H, H), jnp.float32, -bound, bound)
    b_ih = jax.random.uniform(k3, (4 * H,), jnp.float32, -bound, bound)
    b_hh = jax.random.uniform(k4, (4 * H,), jnp.float32, -bound, bound)

    w_ih_t = w_ih.T                                     # (d_in, 4H)
    if d_in < H:                                        # zero-pad layer-0 rows
      w_ih_t = jnp.pad(w_ih_t, ((0, H - d_in), (0, 0)))
    w_ih_list.append(w_ih_t)
    w_hh_list.append(w_hh.T)                            # (H, 4H)
    b_list.append((b_ih + b_hh)[None, :])               # (1, 4H)

  params["lstm"] = {
      # bf16 weight storage: halves weight DMA / VMEM; MXU accumulates in f32.
      "w_ih_s": jnp.stack(w_ih_list).astype(jnp.bfloat16),   # (L, H, 4H)
      "w_hh_s": jnp.stack(w_hh_list).astype(jnp.bfloat16),   # (L, H, 4H)
      "b_s": jnp.stack(b_list),                               # (L, 1, 4H) f32
  }
  return params


@jax.jit
def encoder_forward(params, x_tokens):
  """x_tokens: (B, T) int32 -> (outputs (B,T,H), (h (L,B,H), c (L,B,H)))."""
  # Embedding gather (glue; the hot path is the fused LSTM Pallas kernel).
  embedded = jnp.take(params["embedding"], x_tokens, axis=0)  # (B, T, E)
  x_tm = jnp.transpose(embedded, (1, 0, 2))                   # (T, B, E)

  y_tm, h, c = encoder_lstm_fused(x_tm, params["lstm"])

  outputs = jnp.transpose(y_tm, (1, 0, 2))                    # (B, T, H)
  return outputs, (h, c)


# ----------------------------------------------------------------------------
# Pure-JAX reference (correctness check).  Mirrors the kernel's MXU numerics:
# bf16 matmul operands with f32 accumulation — which is also what TPU default
# matmul precision does for f32 operands.
# ----------------------------------------------------------------------------
def lstm_layer_ref(x_tm, w_ih_t, w_hh_t, bias):
  H = w_hh_t.shape[0]
  B = x_tm.shape[1]

  def step(carry, x_t):
    h, c = carry
    gx = jnp.dot(x_t.astype(jnp.bfloat16), w_ih_t,
                 preferred_element_type=jnp.float32) + bias
    gates = gx + jnp.dot(h.astype(jnp.bfloat16), w_hh_t,
                         preferred_element_type=jnp.float32)
    i_g = jax.nn.sigmoid(gates[:, 0 * H:1 * H])
    f_g = jax.nn.sigmoid(gates[:, 1 * H:2 * H])
    g_g = jnp.tanh(gates[:, 2 * H:3 * H])
    o_g = jax.nn.sigmoid(gates[:, 3 * H:4 * H])
    c_new = f_g * c + i_g * g_g
    h_new = o_g * jnp.tanh(c_new)
    return (h_new, c_new), h_new

  init = (jnp.zeros((B, H), jnp.float32), jnp.zeros((B, H), jnp.float32))
  (h_T, c_T), y_tm = lax.scan(step, init, x_tm)
  return y_tm, h_T, c_T


def encoder_forward_ref(params, x_tokens):
  embedded = jnp.take(params["embedding"], x_tokens, axis=0)
  x_tm = jnp.transpose(embedded, (1, 0, 2))
  lstm = params["lstm"]
  L = lstm["w_hh_s"].shape[0]

  layer_in = x_tm
  h_finals, c_finals = [], []
  for l in range(L):
    d_in = layer_in.shape[-1]
    w_ih_t = lstm["w_ih_s"][l, :d_in, :]        # drop zero-padded rows
    w_hh_t = lstm["w_hh_s"][l]
    bias = lstm["b_s"][l]
    y_tm, h_T, c_T = lstm_layer_ref(layer_in, w_ih_t, w_hh_t, bias)
    h_finals.append(h_T)
    c_finals.append(c_T)
    layer_in = y_tm
  return (jnp.transpose(layer_in, (1, 0, 2)),
          (jnp.stack(h_finals, 0), jnp.stack(c_finals, 0)))


# ----------------------------------------------------------------------------
if __name__ == "__main__":
  VOCAB = 50
  EMBED = 128
  HIDDEN = 256
  NUM_LAYERS = 3
  BATCH = 2
  SEQ = 8

  key = jax.random.PRNGKey(0)
  key, k_tok, k_par = jax.random.split(key, 3)

  x = jax.random.randint(k_tok, (BATCH, SEQ), 0, VOCAB, dtype=jnp.int32)
  params = init_encoder_params(k_par, VOCAB, EMBED, HIDDEN, NUM_LAYERS)

  outputs, (h, c) = encoder_forward(params, x)
  jax.block_until_ready((outputs, h, c))

  # Sanity check against a pure-JAX reference implementation.
  ref_out, (ref_h, ref_c) = encoder_forward_ref(params, x)
  assert outputs.shape == (BATCH, SEQ, HIDDEN)
  assert h.shape == (NUM_LAYERS, BATCH, HIDDEN)
  assert c.shape == (NUM_LAYERS, BATCH, HIDDEN)
  assert jnp.allclose(outputs, ref_out, atol=1e-4, rtol=1e-4)
  assert jnp.allclose(h, ref_h, atol=1e-4, rtol=1e-4)
  assert jnp.allclose(c, ref_c, atol=1e-4, rtol=1e-4)

  print("KERNEL_OK")
</pallas_src>

<mosaic_0001>
module attributes {stable_mosaic.version = 11 : i64} {
  func.func @encoder_lstm_kernel(%arg0: i32, %arg1: memref<8x8x256xf32, #tpu.memory_space<vmem>>, %arg2: memref<1x256x1024xbf16, #tpu.memory_space<vmem>>, %arg3: memref<1x256x1024xbf16, #tpu.memory_space<vmem>>, %arg4: memref<1x1x1024xf32, #tpu.memory_space<vmem>>, %arg5: memref<8x8x256xf32, #tpu.memory_space<vmem>>, %arg6: memref<1x8x256xf32, #tpu.memory_space<vmem>>, %arg7: memref<1x8x256xf32, #tpu.memory_space<vmem>>, %arg8: memref<8x8x1024xf32, #tpu.memory_space<vmem>>) attributes {dimension_semantics = [#tpu.dimension_semantics<arbitrary>], iteration_bounds = array<i64: 3>, scalar_prefetch = 0 : i64, scratch_operands = 1 : i64, tpu.core_type = #tpu.core_type<tc>, window_params = [{pipeline_mode = #tpu.pipeline_mode<synchronous>, transform_indices = @transform_0, window_bounds = array<i64: 8, 8, 256>}, {transform_indices = @transform_1, window_bounds = array<i64: 1, 256, 1024>}, {transform_indices = @transform_2, window_bounds = array<i64: 1, 256, 1024>}, {transform_indices = @transform_3, window_bounds = array<i64: 1, 1, 1024>}, {pipeline_mode = #tpu.pipeline_mode<synchronous>, transform_indices = @transform_4, window_bounds = array<i64: 8, 8, 256>}, {transform_indices = @transform_5, window_bounds = array<i64: 1, 8, 256>}, {transform_indices = @transform_6, window_bounds = array<i64: 1, 8, 256>}]} {
    %c0_i32 = arith.constant 0 : i32
    %0 = arith.cmpi eq, %arg0, %c0_i32 : i32
    %1 = arith.extui %0 : i1 to i32
    %c0_i32_0 = arith.constant 0 : i32
    %2 = arith.cmpi ne, %1, %c0_i32_0 : i32
    scf.if %2 {
      %c0_92 = arith.constant 0 : index
      %c0_93 = arith.constant 0 : index
      %c0_94 = arith.constant 0 : index
      %276 = vector.load %arg1[%c0_92, %c0_93, %c0_94] : memref<8x8x256xf32, #tpu.memory_space<vmem>>, vector<8x8x256xf32>
      %c0_95 = arith.constant 0 : index
      %c0_96 = arith.constant 0 : index
      %c0_97 = arith.constant 0 : index
      %277 = vector.load %arg5[%c0_95, %c0_96, %c0_97] : memref<8x8x256xf32, #tpu.memory_space<vmem>>, vector<8x8x256xf32>
      tpu.vector_store %arg5[%c0_95, %c0_96, %c0_97], %276 {strides = array<i32>} : memref<8x8x256xf32, #tpu.memory_space<vmem>>, vector<8x8x256xf32>,
    } else {
    }
    %c0 = arith.constant 0 : index
    %c0_1 = arith.constant 0 : index
    %c0_2 = arith.constant 0 : index
    %3 = vector.load %arg2[%c0, %c0_1, %c0_2] : memref<1x256x1024xbf16, #tpu.memory_space<vmem>>, vector<1x256x1024xbf16>
    %4 = vector.shape_cast %3 : vector<1x256x1024xbf16> to vector<256x1024xbf16>
    %c0_3 = arith.constant 0 : index
    %c0_4 = arith.constant 0 : index
    %c0_5 = arith.constant 0 : index
    %5 = vector.load %arg3[%c0_3, %c0_4, %c0_5] : memref<1x256x1024xbf16, #tpu.memory_space<vmem>>, vector<1x256x1024xbf16>
    %6 = vector.shape_cast %5 : vector<1x256x1024xbf16> to vector<256x1024xbf16>
    %c0_6 = arith.constant 0 : index
    %c0_7 = arith.constant 0 : index
    %c0_8 = arith.constant 0 : index
    %7 = vector.load %arg4[%c0_6, %c0_7, %c0_8] : memref<1x1x1024xf32, #tpu.memory_space<vmem>>, vector<1x1x1024xf32>
    %8 = vector.shape_cast %7 : vector<1x1x1024xf32> to vector<1x1024xf32>
    %c0_9 = arith.constant 0 : index
    %c0_10 = arith.constant 0 : index
    %c0_11 = arith.constant 0 : index
    %9 = vector.load %arg5[%c0_9, %c0_10, %c0_11] : memref<8x8x256xf32, #tpu.memory_space<vmem>>, vector<8x8x256xf32>
    %10 = vector.shape_cast %9 : vector<8x8x256xf32> to vector<64x256xf32>
    %11 = arith.truncf %10 : vector<64x256xf32> to vector<64x256xbf16>
    %cst = arith.constant dense<0.000000e+00> : vector<64x1024xf32>
    %12 = tpu.matmul %11, %4, %cst {dimension_numbers = #tpu.dot_dimension_numbers<[1], [0], [0], [1], [0, 0, 1, 1], [], []>} : vector<64x256xbf16>, vector<256x1024xbf16>, vector<64x1024xf32> -> vector<64x1024xf32>
    %13 = vector.broadcast %8 : vector<1x1024xf32> to vector<64x1024xf32>
    %14 = arith.addf %12, %13 : vector<64x1024xf32>
    %15 = vector.shape_cast %14 : vector<64x1024xf32> to vector<8x8x1024xf32>
    %c0_12 = arith.constant 0 : index
    %c0_13 = arith.constant 0 : index
    %c0_14 = arith.constant 0 : index
    %16 = vector.load %arg8[%c0_12, %c0_13, %c0_14] : memref<8x8x1024xf32, #tpu.memory_space<vmem>>, vector<8x8x1024xf32>
    tpu.vector_store %arg8[%c0_12, %c0_13, %c0_14], %15 {strides = array<i32>} : memref<8x8x1024xf32, #tpu.memory_space<vmem>>, vector<8x8x1024xf32>,
    %c0_15 = arith.constant 0 : index
    %c0_16 = arith.constant 0 : index
    %c0_17 = arith.constant 0 : index
    %17 = vector.load %arg8[%c0_15, %c0_16, %c0_17] : memref<8x8x1024xf32, #tpu.memory_space<vmem>>, vector<1x8x1024xf32>
    %18 = vector.shape_cast %17 : vector<1x8x1024xf32> to vector<8x1024xf32>
    %19 = vector.extract_strided_slice %18 {offsets = [0, 0], sizes = [8, 256], strides = [1, 1]} : vector<8x1024xf32> to vector<8x256xf32>
    %20 = arith.negf %19 : vector<8x256xf32>
    %21 = math.exp %20 : vector<8x256xf32>
    %cst_18 = arith.constant 1.000000e+00 : f32
    %22 = vector.broadcast %cst_18 : f32 to vector<8x256xf32>
    %23 = arith.addf %22, %21 : vector<8x256xf32>
    %24 = arith.divf %22, %23 : vector<8x256xf32>
    %25 = vector.extract_strided_slice %18 {offsets = [0, 512], sizes = [8, 256], strides = [1, 1]} : vector<8x1024xf32> to vector<8x256xf32>
    %26 = math.tanh %25 : vector<8x256xf32>
    %27 = vector.extract_strided_slice %18 {offsets = [0, 768], sizes = [8, 256], strides = [1, 1]} : vector<8x1024xf32> to vector<8x256xf32>
    %28 = arith.negf %27 : vector<8x256xf32>
    %29 = math.exp %28 : vector<8x256xf32>
    %cst_19 = arith.constant 1.000000e+00 : f32
    %30 = vector.broadcast %cst_19 : f32 to vector<8x256xf32>
    %31 = arith.addf %30, %29 : vector<8x256xf32>
    %32 = arith.divf %30, %31 : vector<8x256xf32>
    %33 = arith.mulf %24, %26 : vector<8x256xf32>
    %34 = math.tanh %33 : vector<8x256xf32>
    %35 = arith.mulf %32, %34 : vector<8x256xf32>
    %c0_20 = arith.constant 0 : index
    %c0_21 = arith.constant 0 : index
    %c0_22 = arith.constant 0 : index
    %36 = vector.load %arg5[%c0_20, %c0_21, %c0_22] : memref<8x8x256xf32, #tpu.memory_space<vmem>>, vector<1x8x256xf32>
    %37 = vector.shape_cast %36 : vector<1x8x256xf32> to vector<8x256xf32>
    %38 = vector.shape_cast %35 : vector<8x256xf32> to vector<1x8x256xf32>
    tpu.vector_store %arg5[%c0_20, %c0_21, %c0_22], %38 {strides = array<i32>} : memref<8x8x256xf32, #tpu.memory_space<vmem>>, vector<1x8x256xf32>,
    %c1 = arith.constant 1 : index
    %c0_23 = arith.constant 0 : index
    %c0_24 = arith.constant 0 : index
    %39 = vector.load %arg8[%c1, %c0_23, %c0_24] : memref<8x8x1024xf32, #tpu.memory_space<vmem>>, vector<1x8x1024xf32>
    %40 = vector.shape_cast %39 : vector<1x8x1024xf32> to vector<8x1024xf32>
    %41 = arith.truncf %35 : vector<8x256xf32> to vector<8x256xbf16>
    %cst_25 = arith.constant dense<0.000000e+00> : vector<8x1024xf32>
    %42 = tpu.matmul %41, %6, %cst_25 {dimension_numbers = #tpu.dot_dimension_numbers<[1], [0], [0], [1], [0, 0, 1, 1], [], []>} : vector<8x256xbf16>, vector<256x1024xbf16>, vector<8x1024xf32> -> vector<8x1024xf32>
    %43 = arith.addf %40, %42 : vector<8x1024xf32>
    %44 = vector.extract_strided_slice %43 {offsets = [0, 0], sizes = [8, 256], strides = [1, 1]} : vector<8x1024xf32> to vector<8x256xf32>
    %45 = arith.negf %44 : vector<8x256xf32>
    %46 = math.exp %45 : vector<8x256xf32>
    %cst_26 = arith.constant 1.000000e+00 : f32
    %47 = vector.broadcast %cst_26 : f32 to vector<8x256xf32>
    %48 = arith.addf %47, %46 : vector<8x256xf32>
    %49 = arith.divf %47, %48 : vector<8x256xf32>
    %50 = vector.extract_strided_slice %43 {offsets = [0, 256], sizes = [8, 256], strides = [1, 1]} : vector<8x1024xf32> to vector<8x256xf32>
    %51 = arith.negf %50 : vector<8x256xf32>
    %52 = math.exp %51 : vector<8x256xf32>
    %cst_27 = arith.constant 1.000000e+00 : f32
    %53 = vector.broadcast %cst_27 : f32 to vector<8x256xf32>
    %54 = arith.addf %53, %52 : vector<8x256xf32>
    %55 = arith.divf %53, %54 : vector<8x256xf32>
    %56 = vector.extract_strided_slice %43 {offsets = [0, 512], sizes = [8, 256], strides = [1, 1]} : vector<8x1024xf32> to vector<8x256xf32>
    %57 = math.tanh %56 : vector<8x256xf32>
    %58 = vector.extract_strided_slice %43 {offsets = [0, 768], sizes = [8, 256], strides = [1, 1]} : vector<8x1024xf32> to vector<8x256xf32>
    %59 = arith.negf %58 : vector<8x256xf32>
    %60 = math.exp %59 : vector<8x256xf32>
    %cst_28 = arith.constant 1.000000e+00 : f32
    %61 = vector.broadcast %cst_28 : f32 to vector<8x256xf32>
    %62 = arith.addf %61, %60 : vector<8x256xf32>
    %63 = arith.divf %61, %62 : vector<8x256xf32>
    %64 = arith.mulf %55, %33 : vector<8x256xf32>
    %65 = arith.mulf %49, %57 : vector<8x256xf32>
    %66 = arith.addf %64, %65 : vector<8x256xf32>
    %67 = math.tanh %66 : vector<8x256xf32>
    %68 = arith.mulf %63, %67 : vector<8x256xf32>
    %c1_29 = arith.constant 1 : index
    %c0_30 = arith.constant 0 : index
    %c0_31 = arith.constant 0 : index
    %69 = vector.load %arg5[%c1_29, %c0_30, %c0_31] : memref<8x8x256xf32, #tpu.memory_space<vmem>>, vector<1x8x256xf32>
    %70 = vector.shape_cast %69 : vector<1x8x256xf32> to vector<8x256xf32>
    %71 = vector.shape_cast %68 : vector<8x256xf32> to vector<1x8x256xf32>
    tpu.vector_store %arg5[%c1_29, %c0_30, %c0_31], %71 {strides = array<i32>} : memref<8x8x256xf32, #tpu.memory_space<vmem>>, vector<1x8x256xf32>,
    %c2 = arith.constant 2 : index
    %c0_32 = arith.constant 0 : index
    %c0_33 = arith.constant 0 : index
    %72 = vector.load %arg8[%c2, %c0_32, %c0_33] : memref<8x8x1024xf32, #tpu.memory_space<vmem>>, vector<1x8x1024xf32>
    %73 = vector.shape_cast %72 : vector<1x8x1024xf32> to vector<8x1024xf32>
    %74 = arith.truncf %68 : vector<8x256xf32> to vector<8x256xbf16>
    %cst_34 = arith.constant dense<0.000000e+00> : vector<8x1024xf32>
    %75 = tpu.matmul %74, %6, %cst_34 {dimension_numbers = #tpu.dot_dimension_numbers<[1], [0], [0], [1], [0, 0, 1, 1], [], []>} : vector<8x256xbf16>, vector<256x1024xbf16>, vector<8x1024xf32> -> vector<8x1024xf32>
    %76 = arith.addf %73, %75 : vector<8x1024xf32>
    %77 = vector.extract_strided_slice %76 {offsets = [0, 0], sizes = [8, 256], strides = [1, 1]} : vector<8x1024xf32> to vector<8x256xf32>
    %78 = arith.negf %77 : vector<8x256xf32>
    %79 = math.exp %78 : vector<8x256xf32>
    %cst_35 = arith.constant 1.000000e+00 : f32
    %80 = vector.broadcast %cst_35 : f32 to vector<8x256xf32>
    %81 = arith.addf %80, %79 : vector<8x256xf32>
    %82 = arith.divf %80, %81 : vector<8x256xf32>
    %83 = vector.extract_strided_slice %76 {offsets = [0, 256], sizes = [8, 256], strides = [1, 1]} : vector<8x1024xf32> to vector<8x256xf32>
    %84 = arith.negf %83 : vector<8x256xf32>
    %85 = math.exp %84 : vector<8x256xf32>
    %cst_36 = arith.constant 1.000000e+00 : f32
    %86 = vector.broadcast %cst_36 : f32 to vector<8x256xf32>
    %87 = arith.addf %86, %85 : vector<8x256xf32>
    %88 = arith.divf %86, %87 : vector<8x256xf32>
    %89 = vector.extract_strided_slice %76 {offsets = [0, 512], sizes = [8, 256], strides = [1, 1]} : vector<8x1024xf32> to vector<8x256xf32>
    %90 = math.tanh %89 : vector<8x256xf32>
    %91 = vector.extract_strided_slice %76 {offsets = [0, 768], sizes = [8, 256], strides = [1, 1]} : vector<8x1024xf32> to vector<8x256xf32>
    %92 = arith.negf %91 : vector<8x256xf32>
    %93 = math.exp %92 : vector<8x256xf32>
    %cst_37 = arith.constant 1.000000e+00 : f32
    %94 = vector.broadcast %cst_37 : f32 to vector<8x256xf32>
    %95 = arith.addf %94, %93 : vector<8x256xf32>
    %96 = arith.divf %94, %95 : vector<8x256xf32>
    %97 = arith.mulf %88, %66 : vector<8x256xf32>
    %98 = arith.mulf %82, %90 : vector<8x256xf32>
    %99 = arith.addf %97, %98 : vector<8x256xf32>
    %100 = math.tanh %99 : vector<8x256xf32>
    %101 = arith.mulf %96, %100 : vector<8x256xf32>
    %c2_38 = arith.constant 2 : index
    %c0_39 = arith.constant 0 : index
    %c0_40 = arith.constant 0 : index
    %102 = vector.load %arg5[%c2_38, %c0_39, %c0_40] : memref<8x8x256xf32, #tpu.memory_space<vmem>>, vector<1x8x256xf32>
    %103 = vector.shape_cast %102 : vector<1x8x256xf32> to vector<8x256xf32>
    %104 = vector.shape_cast %101 : vector<8x256xf32> to vector<1x8x256xf32>
    tpu.vector_store %arg5[%c2_38, %c0_39, %c0_40], %104 {strides = array<i32>} : memref<8x8x256xf32, #tpu.memory_space<vmem>>, vector<1x8x256xf32>,
    %c3 = arith.constant 3 : index
    %c0_41 = arith.constant 0 : index
    %c0_42 = arith.constant 0 : index
    %105 = vector.load %arg8[%c3, %c0_41, %c0_42] : memref<8x8x1024xf32, #tpu.memory_space<vmem>>, vector<1x8x1024xf32>
    %106 = vector.shape_cast %105 : vector<1x8x1024xf32> to vector<8x1024xf32>
    %107 = arith.truncf %101 : vector<8x256xf32> to vector<8x256xbf16>
    %cst_43 = arith.constant dense<0.000000e+00> : vector<8x1024xf32>
    %108 = tpu.matmul %107, %6, %cst_43 {dimension_numbers = #tpu.dot_dimension_numbers<[1], [0], [0], [1], [0, 0, 1, 1], [], []>} : vector<8x256xbf16>, vector<256x1024xbf16>, vector<8x1024xf32> -> vector<8x1024xf32>
    %109 = arith.addf %106, %108 : vector<8x1024xf32>
    %110 = vector.extract_strided_slice %109 {offsets = [0, 0], sizes = [8, 256], strides = [1, 1]} : vector<8x1024xf32> to vector<8x256xf32>
    %111 = arith.negf %110 : vector<8x256xf32>
    %112 = math.exp %111 : vector<8x256xf32>
    %cst_44 = arith.constant 1.000000e+00 : f32
    %113 = vector.broadcast %cst_44 : f32 to vector<8x256xf32>
    %114 = arith.addf %113, %112 : vector<8x256xf32>
    %115 = arith.divf %113, %114 : vector<8x256xf32>
    %116 = vector.extract_strided_slice %109 {offsets = [0, 256], sizes = [8, 256], strides = [1, 1]} : vector<8x1024xf32> to vector<8x256xf32>
    %117 = arith.negf %116 : vector<8x256xf32>
    %118 = math.exp %117 : vector<8x256xf32>
    %cst_45 = arith.constant 1.000000e+00 : f32
    %119 = vector.broadcast %cst_45 : f32 to vector<8x256xf32>
    %120 = arith.addf %119, %118 : vector<8x256xf32>
    %121 = arith.divf %119, %120 : vector<8x256xf32>
    %122 = vector.extract_strided_slice %109 {offsets = [0, 512], sizes = [8, 256], strides = [1, 1]} : vector<8x1024xf32> to vector<8x256xf32>
    %123 = math.tanh %122 : vector<8x256xf32>
    %124 = vector.extract_strided_slice %109 {offsets = [0, 768], sizes = [8, 256], strides = [1, 1]} : vector<8x1024xf32> to vector<8x256xf32>
    %125 = arith.negf %124 : vector<8x256xf32>
    %126 = math.exp %125 : vector<8x256xf32>
    %cst_46 = arith.constant 1.000000e+00 : f32
    %127 = vector.broadcast %cst_46 : f32 to vector<8x256xf32>
    %128 = arith.addf %127, %126 : vector<8x256xf32>
    %129 = arith.divf %127, %128 : vector<8x256xf32>
    %130 = arith.mulf %121, %99 : vector<8x256xf32>
    %131 = arith.mulf %115, %123 : vector<8x256xf32>
    %132 = arith.addf %130, %131 : vector<8x256xf32>
    %133 = math.tanh %132 : vector<8x256xf32>
    %134 = arith.mulf %129, %133 : vector<8x256xf32>
    %c3_47 = arith.constant 3 : index
    %c0_48 = arith.constant 0 : index
    %c0_49 = arith.constant 0 : index
    %135 = vector.load %arg5[%c3_47, %c0_48, %c0_49] : memref<8x8x256xf32, #tpu.memory_space<vmem>>, vector<1x8x256xf32>
    %136 = vector.shape_cast %135 : vector<1x8x256xf32> to vector<8x256xf32>
    %137 = vector.shape_cast %134 : vector<8x256xf32> to vector<1x8x256xf32>
    tpu.vector_store %arg5[%c3_47, %c0_48, %c0_49], %137 {strides = array<i32>} : memref<8x8x256xf32, #tpu.memory_space<vmem>>, vector<1x8x256xf32>,
    %c4 = arith.constant 4 : index
    %c0_50 = arith.constant 0 : index
    %c0_51 = arith.constant 0 : index
    %138 = vector.load %arg8[%c4, %c0_50, %c0_51] : memref<8x8x1024xf32, #tpu.memory_space<vmem>>, vector<1x8x1024xf32>
    %139 = vector.shape_cast %138 : vector<1x8x1024xf32> to vector<8x1024xf32>
    %140 = arith.truncf %134 : vector<8x256xf32> to vector<8x256xbf16>
    %cst_52 = arith.constant dense<0.000000e+00> : vector<8x1024xf32>
    %141 = tpu.matmul %140, %6, %cst_52 {dimension_numbers = #tpu.dot_dimension_numbers<[1], [0], [0], [1], [0, 0, 1, 1], [], []>} : vector<8x256xbf16>, vector<256x1024xbf16>, vector<8x1024xf32> -> vector<8x1024xf32>
    %142 = arith.addf %139, %141 : vector<8x1024xf32>
    %143 = vector.extract_strided_slice %142 {offsets = [0, 0], sizes = [8, 256], strides = [1, 1]} : vector<8x1024xf32> to vector<8x256xf32>
    %144 = arith.negf %143 : vector<8x256xf32>
    %145 = math.exp %144 : vector<8x256xf32>
    %cst_53 = arith.constant 1.000000e+00 : f32
    %146 = vector.broadcast %cst_53 : f32 to vector<8x256xf32>
    %147 = arith.addf %146, %145 : vector<8x256xf32>
    %148 = arith.divf %146, %147 : vector<8x256xf32>
    %149 = vector.extract_strided_slice %142 {offsets = [0, 256], sizes = [8, 256], strides = [1, 1]} : vector<8x1024xf32> to vector<8x256xf32>
    %150 = arith.negf %149 : vector<8x256xf32>
    %151 = math.exp %150 : vector<8x256xf32>
    %cst_54 = arith.constant 1.000000e+00 : f32
    %152 = vector.broadcast %cst_54 : f32 to vector<8x256xf32>
    %153 = arith.addf %152, %151 : vector<8x256xf32>
    %154 = arith.divf %152, %153 : vector<8x256xf32>
    %155 = vector.extract_strided_slice %142 {offsets = [0, 512], sizes = [8, 256], strides = [1, 1]} : vector<8x1024xf32> to vector<8x256xf32>
    %156 = math.tanh %155 : vector<8x256xf32>
    %157 = vector.extract_strided_slice %142 {offsets = [0, 768], sizes = [8, 256], strides = [1, 1]} : vector<8x1024xf32> to vector<8x256xf32>
    %158 = arith.negf %157 : vector<8x256xf32>
    %159 = math.exp %158 : vector<8x256xf32>
    %cst_55 = arith.constant 1.000000e+00 : f32
    %160 = vector.broadcast %cst_55 : f32 to vector<8x256xf32>
    %161 = arith.addf %160, %159 : vector<8x256xf32>
    %162 = arith.divf %160, %161 : vector<8x256xf32>
    %163 = arith.mulf %154, %132 : vector<8x256xf32>
    %164 = arith.mulf %148, %156 : vector<8x256xf32>
    %165 = arith.addf %163, %164 : vector<8x256xf32>
    %166 = math.tanh %165 : vector<8x256xf32>
    %167 = arith.mulf %162, %166 : vector<8x256xf32>
    %c4_56 = arith.constant 4 : index
    %c0_57 = arith.constant 0 : index
    %c0_58 = arith.constant 0 : index
    %168 = vector.load %arg5[%c4_56, %c0_57, %c0_58] : memref<8x8x256xf32, #tpu.memory_space<vmem>>, vector<1x8x256xf32>
    %169 = vector.shape_cast %168 : vector<1x8x256xf32> to vector<8x256xf32>
    %170 = vector.shape_cast %167 : vector<8x256xf32> to vector<1x8x256xf32>
    tpu.vector_store %arg5[%c4_56, %c0_57, %c0_58], %170 {strides = array<i32>} : memref<8x8x256xf32, #tpu.memory_space<vmem>>, vector<1x8x256xf32>,
    %c5 = arith.constant 5 : index
    %c0_59 = arith.constant 0 : index
    %c0_60 = arith.constant 0 : index
    %171 = vector.load %arg8[%c5, %c0_59, %c0_60] : memref<8x8x1024xf32, #tpu.memory_space<vmem>>, vector<1x8x1024xf32>
    %172 = vector.shape_cast %171 : vector<1x8x1024xf32> to vector<8x1024xf32>
    %173 = arith.truncf %167 : vector<8x256xf32> to vector<8x256xbf16>
    %cst_61 = arith.constant dense<0.000000e+00> : vector<8x1024xf32>
    %174 = tpu.matmul %173, %6, %cst_61 {dimension_numbers = #tpu.dot_dimension_numbers<[1], [0], [0], [1], [0, 0, 1, 1], [], []>} : vector<8x256xbf16>, vector<256x1024xbf16>, vector<8x1024xf32> -> vector<8x1024xf32>
    %175 = arith.addf %172, %174 : vector<8x1024xf32>
    %176 = vector.extract_strided_slice %175 {offsets = [0, 0], sizes = [8, 256], strides = [1, 1]} : vector<8x1024xf32> to vector<8x256xf32>
    %177 = arith.negf %176 : vector<8x256xf32>
    %178 = math.exp %177 : vector<8x256xf32>
    %cst_62 = arith.constant 1.000000e+00 : f32
    %179 = vector.broadcast %cst_62 : f32 to vector<8x256xf32>
    %180 = arith.addf %179, %178 : vector<8x256xf32>
    %181 = arith.divf %179, %180 : vector<8x256xf32>
    %182 = vector.extract_strided_slice %175 {offsets = [0, 256], sizes = [8, 256], strides = [1, 1]} : vector<8x1024xf32> to vector<8x256xf32>
    %183 = arith.negf %182 : vector<8x256xf32>
    %184 = math.exp %183 : vector<8x256xf32>
    %cst_63 = arith.constant 1.000000e+00 : f32
    %185 = vector.broadcast %cst_63 : f32 to vector<8x256xf32>
    %186 = arith.addf %185, %184 : vector<8x256xf32>
    %187 = arith.divf %185, %186 : vector<8x256xf32>
    %188 = vector.extract_strided_slice %175 {offsets = [0, 512], sizes = [8, 256], strides = [1, 1]} : vector<8x1024xf32> to vector<8x256xf32>
    %189 = math.tanh %188 : vector<8x256xf32>
    %190 = vector.extract_strided_slice %175 {offsets = [0, 768], sizes = [8, 256], strides = [1, 1]} : vector<8x1024xf32> to vector<8x256xf32>
    %191 = arith.negf %190 : vector<8x256xf32>
    %192 = math.exp %191 : vector<8x256xf32>
    %cst_64 = arith.constant 1.000000e+00 : f32
    %193 = vector.broadcast %cst_64 : f32 to vector<8x256xf32>
    %194 = arith.addf %193, %192 : vector<8x256xf32>
    %195 = arith.divf %193, %194 : vector<8x256xf32>
    %196 = arith.mulf %187, %165 : vector<8x256xf32>
    %197 = arith.mulf %181, %189 : vector<8x256xf32>
    %198 = arith.addf %196, %197 : vector<8x256xf32>
    %199 = math.tanh %198 : vector<8x256xf32>
    %200 = arith.mulf %195, %199 : vector<8x256xf32>
    %c5_65 = arith.constant 5 : index
    %c0_66 = arith.constant 0 : index
    %c0_67 = arith.constant 0 : index
    %201 = vector.load %arg5[%c5_65, %c0_66, %c0_67] : memref<8x8x256xf32, #tpu.memory_space<vmem>>, vector<1x8x256xf32>
    %202 = vector.shape_cast %201 : vector<1x8x256xf32> to vector<8x256xf32>
    %203 = vector.shape_cast %200 : vector<8x256xf32> to vector<1x8x256xf32>
    tpu.vector_store %arg5[%c5_65, %c0_66, %c0_67], %203 {strides = array<i32>} : memref<8x8x256xf32, #tpu.memory_space<vmem>>, vector<1x8x256xf32>,
    %c6 = arith.constant 6 : index
    %c0_68 = arith.constant 0 : index
    %c0_69 = arith.constant 0 : index
    %204 = vector.load %arg8[%c6, %c0_68, %c0_69] : memref<8x8x1024xf32, #tpu.memory_space<vmem>>, vector<1x8x1024xf32>
    %205 = vector.shape_cast %204 : vector<1x8x1024xf32> to vector<8x1024xf32>
    %206 = arith.truncf %200 : vector<8x256xf32> to vector<8x256xbf16>
    %cst_70 = arith.constant dense<0.000000e+00> : vector<8x1024xf32>
    %207 = tpu.matmul %206, %6, %cst_70 {dimension_numbers = #tpu.dot_dimension_numbers<[1], [0], [0], [1], [0, 0, 1, 1], [], []>} : vector<8x256xbf16>, vector<256x1024xbf16>, vector<8x1024xf32> -> vector<8x1024xf32>
    %208 = arith.addf %205, %207 : vector<8x1024xf32>
    %209 = vector.extract_strided_slice %208 {offsets = [0, 0], sizes = [8, 256], strides = [1, 1]} : vector<8x1024xf32> to vector<8x256xf32>
    %210 = arith.negf %209 : vector<8x256xf32>
    %211 = math.exp %210 : vector<8x256xf32>
    %cst_71 = arith.constant 1.000000e+00 : f32
    %212 = vector.broadcast %cst_71 : f32 to vector<8x256xf32>
    %213 = arith.addf %212, %211 : vector<8x256xf32>
    %214 = arith.divf %212, %213 : vector<8x256xf32>
    %215 = vector.extract_strided_slice %208 {offsets = [0, 256], sizes = [8, 256], strides = [1, 1]} : vector<8x1024xf32> to vector<8x256xf32>
    %216 = arith.negf %215 : vector<8x256xf32>
    %217 = math.exp %216 : vector<8x256xf32>
    %cst_72 = arith.constant 1.000000e+00 : f32
    %218 = vector.broadcast %cst_72 : f32 to vector<8x256xf32>
    %219 = arith.addf %218, %217 : vector<8x256xf32>
    %220 = arith.divf %218, %219 : vector<8x256xf32>
    %221 = vector.extract_strided_slice %208 {offsets = [0, 512], sizes = [8, 256], strides = [1, 1]} : vector<8x1024xf32> to vector<8x256xf32>
    %222 = math.tanh %221 : vector<8x256xf32>
    %223 = vector.extract_strided_slice %208 {offsets = [0, 768], sizes = [8, 256], strides = [1, 1]} : vector<8x1024xf32> to vector<8x256xf32>
    %224 = arith.negf %223 : vector<8x256xf32>
    %225 = math.exp %224 : vector<8x256xf32>
    %cst_73 = arith.constant 1.000000e+00 : f32
    %226 = vector.broadcast %cst_73 : f32 to vector<8x256xf32>
    %227 = arith.addf %226, %225 : vector<8x256xf32>
    %228 = arith.divf %226, %227 : vector<8x256xf32>
    %229 = arith.mulf %220, %198 : vector<8x256xf32>
    %230 = arith.mulf %214, %222 : vector<8x256xf32>
    %231 = arith.addf %229, %230 : vector<8x256xf32>
    %232 = math.tanh %231 : vector<8x256xf32>
    %233 = arith.mulf %228, %232 : vector<8x256xf32>
    %c6_74 = arith.constant 6 : index
    %c0_75 = arith.constant 0 : index
    %c0_76 = arith.constant 0 : index
    %234 = vector.load %arg5[%c6_74, %c0_75, %c0_76] : memref<8x8x256xf32, #tpu.memory_space<vmem>>, vector<1x8x256xf32>
    %235 = vector.shape_cast %234 : vector<1x8x256xf32> to vector<8x256xf32>
    %236 = vector.shape_cast %233 : vector<8x256xf32> to vector<1x8x256xf32>
    tpu.vector_store %arg5[%c6_74, %c0_75, %c0_76], %236 {strides = array<i32>} : memref<8x8x256xf32, #tpu.memory_space<vmem>>, vector<1x8x256xf32>,
    %c7 = arith.constant 7 : index
    %c0_77 = arith.constant 0 : index
    %c0_78 = arith.constant 0 : index
    %237 = vector.load %arg8[%c7, %c0_77, %c0_78] : memref<8x8x1024xf32, #tpu.memory_space<vmem>>, vector<1x8x1024xf32>
    %238 = vector.shape_cast %237 : vector<1x8x1024xf32> to vector<8x1024xf32>
    %239 = arith.truncf %233 : vector<8x256xf32> to vector<8x256xbf16>
    %cst_79 = arith.constant dense<0.000000e+00> : vector<8x1024xf32>
    %240 = tpu.matmul %239, %6, %cst_79 {dimension_numbers = #tpu.dot_dimension_numbers<[1], [0], [0], [1], [0, 0, 1, 1], [], []>} : vector<8x256xbf16>, vector<256x1024xbf16>, vector<8x1024xf32> -> vector<8x1024xf32>
    %241 = arith.addf %238, %240 : vector<8x1024xf32>
    %242 = vector.extract_strided_slice %241 {offsets = [0, 0], sizes = [8, 256], strides = [1, 1]} : vector<8x1024xf32> to vector<8x256xf32>
    %243 = arith.negf %242 : vector<8x256xf32>
    %244 = math.exp %243 : vector<8x256xf32>
    %cst_80 = arith.constant 1.000000e+00 : f32
    %245 = vector.broadcast %cst_80 : f32 to vector<8x256xf32>
    %246 = arith.addf %245, %244 : vector<8x256xf32>
    %247 = arith.divf %245, %246 : vector<8x256xf32>
    %248 = vector.extract_strided_slice %241 {offsets = [0, 256], sizes = [8, 256], strides = [1, 1]} : vector<8x1024xf32> to vector<8x256xf32>
    %249 = arith.negf %248 : vector<8x256xf32>
    %250 = math.exp %249 : vector<8x256xf32>
    %cst_81 = arith.constant 1.000000e+00 : f32
    %251 = vector.broadcast %cst_81 : f32 to vector<8x256xf32>
    %252 = arith.addf %251, %250 : vector<8x256xf32>
    %253 = arith.divf %251, %252 : vector<8x256xf32>
    %254 = vector.extract_strided_slice %241 {offsets = [0, 512], sizes = [8, 256], strides = [1, 1]} : vector<8x1024xf32> to vector<8x256xf32>
    %255 = math.tanh %254 : vector<8x256xf32>
    %256 = vector.extract_strided_slice %241 {offsets = [0, 768], sizes = [8, 256], strides = [1, 1]} : vector<8x1024xf32> to vector<8x256xf32>
    %257 = arith.negf %256 : vector<8x256xf32>
    %258 = math.exp %257 : vector<8x256xf32>
    %cst_82 = arith.constant 1.000000e+00 : f32
    %259 = vector.broadcast %cst_82 : f32 to vector<8x256xf32>
    %260 = arith.addf %259, %258 : vector<8x256xf32>
    %261 = arith.divf %259, %260 : vector<8x256xf32>
    %262 = arith.mulf %253, %231 : vector<8x256xf32>
    %263 = arith.mulf %247, %255 : vector<8x256xf32>
    %264 = arith.addf %262, %263 : vector<8x256xf32>
    %265 = math.tanh %264 : vector<8x256xf32>
    %266 = arith.mulf %261, %265 : vector<8x256xf32>
    %c7_83 = arith.constant 7 : index
    %c0_84 = arith.constant 0 : index
    %c0_85 = arith.constant 0 : index
    %267 = vector.load %arg5[%c7_83, %c0_84, %c0_85] : memref<8x8x256xf32, #tpu.memory_space<vmem>>, vector<1x8x256xf32>
    %268 = vector.shape_cast %267 : vector<1x8x256xf32> to vector<8x256xf32>
    %269 = vector.shape_cast %266 : vector<8x256xf32> to vector<1x8x256xf32>
    tpu.vector_store %arg5[%c7_83, %c0_84, %c0_85], %269 {strides = array<i32>} : memref<8x8x256xf32, #tpu.memory_space<vmem>>, vector<1x8x256xf32>,
    %c0_86 = arith.constant 0 : index
    %c0_87 = arith.constant 0 : index
    %c0_88 = arith.constant 0 : index
    %270 = vector.load %arg6[%c0_86, %c0_87, %c0_88] : memref<1x8x256xf32, #tpu.memory_space<vmem>>, vector<1x8x256xf32>
    %271 = vector.shape_cast %270 : vector<1x8x256xf32> to vector<8x256xf32>
    %272 = vector.shape_cast %266 : vector<8x256xf32> to vector<1x8x256xf32>
    tpu.vector_store %arg6[%c0_86, %c0_87, %c0_88], %272 {strides = array<i32>} : memref<1x8x256xf32, #tpu.memory_space<vmem>>, vector<1x8x256xf32>,
    %c0_89 = arith.constant 0 : index
    %c0_90 = arith.constant 0 : index
    %c0_91 = arith.constant 0 : index
    %273 = vector.load %arg7[%c0_89, %c0_90, %c0_91] : memref<1x8x256xf32, #tpu.memory_space<vmem>>, vector<1x8x256xf32>
    %274 = vector.shape_cast %273 : vector<1x8x256xf32> to vector<8x256xf32>
    %275 = vector.shape_cast %264 : vector<8x256xf32> to vector<1x8x256xf32>
    tpu.vector_store %arg7[%c0_89, %c0_90, %c0_91], %275 {strides = array<i32>} : memref<1x8x256xf32, #tpu.memory_space<vmem>>, vector<1x8x256xf32>,
    return
  }
  func.func @transform_0(%arg0: i32) -> (i32, i32, i32) {
    %c0_i32 = arith.constant 0 : i32
    %c0_i32_0 = arith.constant 0 : i32
    %c0_i32_1 = arith.constant 0 : i32
    %c0_i32_2 = arith.constant 0 : i32
    return %c0_i32, %c0_i32_0, %c0_i32_1 : i32, i32, i32
  }
  func.func @transform_1(%arg0: i32) -> (i32, i32, i32) {
    %c0_i32 = arith.constant 0 : i32
    %c0_i32_0 = arith.constant 0 : i32
    %c0_i32_1 = arith.constant 0 : i32
    return %arg0, %c0_i32, %c0_i32_0 : i32, i32, i32
  }
  func.func @transform_2(%arg0: i32) -> (i32, i32, i32) {
    %c0_i32 = arith.constant 0 : i32
    %c0_i32_0 = arith.constant 0 : i32
    %c0_i32_1 = arith.constant 0 : i32
    return %arg0, %c0_i32, %c0_i32_0 : i32, i32, i32
  }
  func.func @transform_3(%arg0: i32) -> (i32, i32, i32) {
    %c0_i32 = arith.constant 0 : i32
    %c0_i32_0 = arith.constant 0 : i32
    %c0_i32_1 = arith.constant 0 : i32
    return %arg0, %c0_i32, %c0_i32_0 : i32, i32, i32
  }
  func.func @transform_4(%arg0: i32) -> (i32, i32, i32) {
    %c0_i32 = arith.constant 0 : i32
    %c0_i32_0 = arith.constant 0 : i32
    %c0_i32_1 = arith.constant 0 : i32
    %c0_i32_2 = arith.constant 0 : i32
    return %c0_i32, %c0_i32_0, %c0_i32_1 : i32, i32, i32
  }
  func.func @transform_5(%arg0: i32) -> (i32, i32, i32) {
    %c0_i32 = arith.constant 0 : i32
    %c0_i32_0 = arith.constant 0 : i32
    %c0_i32_1 = arith.constant 0 : i32
    return %arg0, %c0_i32, %c0_i32_0 : i32, i32, i32
  }
  func.func @transform_6(%arg0: i32) -> (i32, i32, i32) {
    %c0_i32 = arith.constant 0 : i32
    %c0_i32_0 = arith.constant 0 : i32
    %c0_i32_1 = arith.constant 0 : i32
    return %arg0, %c0_i32, %c0_i32_0 : i32, i32, i32
  }
}

</mosaic_0001>

<llo_original>
// kernel: encoder_forward.1
$region0: #{encoder_forward.1}
  #allocation0 [shape = 'u32[]', space=smem, size = 0x4, offset = 0x4, fixed_abs, tag = 'smem constant byte address 0x4 - core index']
  #allocation1 [shape = 'u32[144,128]{1,0:T(1,128)}', space=vmem, size = 0x12000, scoped, tag = 'internal scratch']
  #allocation2 [shape = 'f32[8,8,1024]{2,1,0:T(8,128)}', space=vmem, size = 0x40000, scoped, tag = 'scratch operand']
  %s0 = inlined_call_operand.vmem [shape: f32[8,8,256], index: 0, kind: input, shape index: {}]
  %s1 = inlined_call_operand.hbm [shape: bf16[3,256,1024], index: 1, kind: input, shape index: {}]
  %s2 = inlined_call_operand.hbm [shape: bf16[3,256,1024], index: 2, kind: input, shape index: {}]
  %s3 = inlined_call_operand.hbm [shape: f32[3,1,1024], index: 3, kind: input, shape index: {}]
  %s4 = inlined_call_operand.vmem [shape: f32[8,8,256], index: 4, kind: output, shape index: {0}]
  %s5 = inlined_call_operand.vmem [shape: f32[3,8,256], index: 5, kind: output, shape index: {1}]
  %s6 = inlined_call_operand.vmem [shape: f32[3,8,256], index: 6, kind: output, shape index: {2}]
  %7 = xla_tuple %s4, %s5, %s6
  %s8 = sld [smem:[#allocation0]]
  $region81: #{encoder_forward.1} parent=0
    _
  %s10 = ssub.s32 1, %s8
  %s11 = scalar_select 0, %s10, %s8
  $region1: #{encoder_forward.1} parent=0
    #allocation3 [shape = 'u8[1048576]{0}', space=vmem, size = 0x100000, scoped, tag = 'input window, operand 1']
    #allocation4 [shape = 's32[2]{0}', space=sflag, size = 0x8, scoped, tag = 'scoped memory for encoder_forward.1']
    #allocation5 [shape = 'u8[1048576]{0}', space=vmem, size = 0x100000, scoped, tag = 'input window, operand 2']
    #allocation6 [shape = 's32[2]{0}', space=sflag, size = 0x8, scoped, tag = 'scoped memory for encoder_forward.1']
    #allocation7 [shape = 'u8[8192]{0}', space=vmem, size = 0x2000, scoped, tag = 'input window, operand 3']
    %12 = vsyncpa [#allocation4], 0
    %s13 = scalar_lea.sflag [#allocation4], 1
    %14 = vsyncpa %s13, 0
    %15 = vsyncpa [#allocation6], 0
    %s16 = scalar_lea.sflag [#allocation6], 1
    %17 = vsyncpa %s16, 0
    loop: start=0, step=1, limit=5
    $region2: #{encoder_forward.1} parent=1 // loop_pre_header
      _
    $region3: #{encoder_forward.1} parent=1 // loop_header
      %s19 = sphi 0, %s23
      %p20 = scmp.ge.s32.totalorder %s19, 5
      %s27 = sphi 0, %s27
      %s29 = sphi 0, %s27
      %s30 = sphi 0, %s29
      %s44 = sphi 0, %s30
      %s50 = sphi 0, %s52
      %s53 = sphi 0, %s50
      %s54 = sphi 0, %s53
      %s70 = sphi 0, %s54
      %s76 = sphi 0, %s78
      %s79 = sphi 0, %s76
      %s80 = sphi 0, %s79
      %s96 = sphi 0, %s80
      %s102 = sphi 0, %s104
      %s105 = sphi 0, %s102
      %s106 = sphi 0, %s105
      %s122 = sphi 0, %s106
      %s126 = sphi 0, %s126
      %s128 = sphi 0, %s126
      %s129 = sphi 0, %s128
      %s143 = sphi 0, %s129
      %s149 = sphi 0, %s151
      %s152 = sphi 0, %s149
      %s153 = sphi 0, %s152
      %s169 = sphi 0, %s153
      %s175 = sphi 0, %s177
      %s178 = sphi 0, %s175
      %s179 = sphi 0, %s178
      %s195 = sphi 0, %s179
    $region4: #{encoder_forward.1} parent=1 // loop_header_branch
      %22 = sbr.rel (%p20) target = $region8
    $region5: #{encoder_forward.1} parent=1 // loop_body
      %s24 = ssub.s32 %s19, 1
      %s25 = ssub.s32 %s19, 2
      %s26 = sadd.s32 %s19, 1
      %s28 = sadd.s32 %s27, 1
      %p31 = scmp.eq.s32.totalorder %s19, 2
      %p32 = scmp.ne.s32.totalorder %s27, %s29
      %p33 = scmp.eq.s32.totalorder %s19, 0
      %p34 = por %p32, %p33
      %p35 = scmp.ne.s32.totalorder %s27, %s29
      %p36 = scmp.eq.s32.totalorder %s24, 2
      %p37 = por %p35, %p36
      %p38 = scmp.ne.s32.totalorder %s29, %s30
      %p39 = scmp.eq.s32.totalorder %s24, 0
      %p40 = por %p38, %p39
      %p41 = scmp.ne.s32.totalorder %s29, %s30
      %p42 = scmp.eq.s32.totalorder %s25, 2
      %p43 = por %p41, %p42
      %p45 = scmp.ne.s32.totalorder %s30, %s44
      %p46 = scmp.eq.s32.totalorder %s25, 0
      %p47 = por %p45, %p46
      %s48 = ssub.s32 %s19, %s26
      %p49 = scmp.eq.s32.totalorder %s48, 0
      %s51 = sadd.s32 %s50, 1
      %s52 = scalar_select %p49, %s50, %s51
      %p55 = pneg %p49
      %p56 = scmp.eq.s32.totalorder %s19, 2
      %p57 = por %p55, %p56
      %p58 = scmp.ne.s32.totalorder %s50, %s53
      %p59 = scmp.eq.s32.totalorder %s19, 0
      %p60 = por %p58, %p59
      %p61 = scmp.ne.s32.totalorder %s50, %s53
      %p62 = scmp.eq.s32.totalorder %s24, 2
      %p63 = por %p61, %p62
      %p64 = scmp.ne.s32.totalorder %s53, %s54
      %p65 = scmp.eq.s32.totalorder %s24, 0
      %p66 = por %p64, %p65
      %p67 = scmp.ne.s32.totalorder %s53, %s54
      %p68 = scmp.eq.s32.totalorder %s25, 2
      %p69 = por %p67, %p68
      %p71 = scmp.ne.s32.totalorder %s54, %s70
      %p72 = scmp.eq.s32.totalorder %s25, 0
      %p73 = por %p71, %p72
      %s74 = ssub.s32 %s19, %s26
      %p75 = scmp.eq.s32.totalorder %s74, 0
      %s77 = sadd.s32 %s76, 1
      %s78 = scalar_select %p75, %s76, %s77
      %p81 = pneg %p75
      %p82 = scmp.eq.s32.totalorder %s19, 2
      %p83 = por %p81, %p82
      %p84 = scmp.ne.s32.totalorder %s76, %s79
      %p85 = scmp.eq.s32.totalorder %s19, 0
      %p86 = por %p84, %p85
      %p87 = scmp.ne.s32.totalorder %s76, %s79
      %p88 = scmp.eq.s32.totalorder %s24, 2
      %p89 = por %p87, %p88
      %p90 = scmp.ne.s32.totalorder %s79, %s80
      %p91 = scmp.eq.s32.totalorder %s24, 0
      %p92 = por %p90, %p91
      %p93 = scmp.ne.s32.totalorder %s79, %s80
      %p94 = scmp.eq.s32.totalorder %s25, 2
      %p95 = por %p93, %p94
      %p97 = scmp.ne.s32.totalorder %s80, %s96
      %p98 = scmp.eq.s32.totalorder %s25, 0
      %p99 = por %p97, %p98
      %s100 = ssub.s32 %s19, %s26
      %p101 = scmp.eq.s32.totalorder %s100, 0
      %s103 = sadd.s32 %s102, 1
      %s104 = scalar_select %p101, %s102, %s103
      %p107 = pneg %p101
      %p108 = scmp.eq.s32.totalorder %s19, 2
      %p109 = por %p107, %p108
      %p110 = scmp.ne.s32.totalorder %s102, %s105
      %p111 = scmp.eq.s32.totalorder %s19, 0
      %p112 = por %p110, %p111
      %p113 = scmp.ne.s32.totalorder %s102, %s105
      %p114 = scmp.eq.s32.totalorder %s24, 2
      %p115 = por %p113, %p114
      %p116 = scmp.ne.s32.totalorder %s105, %s106
      %p117 = scmp.eq.s32.totalorder %s24, 0
      %p118 = por %p116, %p117
      %p119 = scmp.ne.s32.totalorder %s105, %s106
      %p120 = scmp.eq.s32.totalorder %s25, 2
      %p121 = por %p119, %p120
      %p123 = scmp.ne.s32.totalorder %s106, %s122
      %p124 = scmp.eq.s32.totalorder %s25, 0
      %p125 = por %p123, %p124
      %s127 = sadd.s32 %s126, 1
      %p130 = scmp.eq.s32.totalorder %s19, 2
      %p131 = scmp.ne.s32.totalorder %s126, %s128
      %p132 = scmp.eq.s32.totalorder %s19, 0
      %p133 = por %p131, %p132
      %p134 = scmp.ne.s32.totalorder %s126, %s128
      %p135 = scmp.eq.s32.totalorder %s24, 2
      %p136 = por %p134, %p135
      %p137 = scmp.ne.s32.totalorder %s128, %s129
      %p138 = scmp.eq.s32.totalorder %s24, 0
      %p139 = por %p137, %p138
      %p140 = scmp.ne.s32.totalorder %s128, %s129
      %p141 = scmp.eq.s32.totalorder %s25, 2
      %p142 = por %p140, %p141
      %p144 = scmp.ne.s32.totalorder %s129, %s143
      %p145 = scmp.eq.s32.totalorder %s25, 0
      %p146 = por %p144, %p145
      %s147 = ssub.s32 %s19, %s26
      %p148 = scmp.eq.s32.totalorder %s147, 0
      %s150 = sadd.s32 %s149, 1
      %s151 = scalar_select %p148, %s149, %s150
      %p154 = pneg %p148
      %p155 = scmp.eq.s32.totalorder %s19, 2
      %p156 = por %p154, %p155
      %p157 = scmp.ne.s32.totalorder %s149, %s152
      %p158 = scmp.eq.s32.totalorder %s19, 0
      %p159 = por %p157, %p158
      %p160 = scmp.ne.s32.totalorder %s149, %s152
      %p161 = scmp.eq.s32.totalorder %s24, 2
      %p162 = por %p160, %p161
      %p163 = scmp.ne.s32.totalorder %s152, %s153
      %p164 = scmp.eq.s32.totalorder %s24, 0
      %p165 = por %p163, %p164
      %p166 = scmp.ne.s32.totalorder %s152, %s153
      %p167 = scmp.eq.s32.totalorder %s25, 2
      %p168 = por %p166, %p167
      %p170 = scmp.ne.s32.totalorder %s153, %s169
      %p171 = scmp.eq.s32.totalorder %s25, 0
      %p172 = por %p170, %p171
      %s173 = ssub.s32 %s19, %s26
      %p174 = scmp.eq.s32.totalorder %s173, 0
      %s176 = sadd.s32 %s175, 1
      %s177 = scalar_select %p174, %s175, %s176
      %p180 = pneg %p174
      %p181 = scmp.eq.s32.totalorder %s19, 2
      %p182 = por %p180, %p181
      %p183 = scmp.ne.s32.totalorder %s175, %s178
      %p184 = scmp.eq.s32.totalorder %s19, 0
      %p185 = por %p183, %p184
      %p186 = scmp.ne.s32.totalorder %s175, %s178
      %p187 = scmp.eq.s32.totalorder %s24, 2
      %p188 = por %p186, %p187
      %p189 = scmp.ne.s32.totalorder %s178, %s179
      %p190 = scmp.eq.s32.totalorder %s24, 0
      %p191 = por %p189, %p190
      %p192 = scmp.ne.s32.totalorder %s178, %s179
      %p193 = scmp.eq.s32.totalorder %s25, 2
      %p194 = por %p192, %p193
      %p196 = scmp.ne.s32.totalorder %s179, %s195
      %p197 = scmp.eq.s32.totalorder %s25, 0
      %p198 = por %p196, %p197
      %p199 = scmp.le.s32.totalorder 1, %s19
      %p200 = scmp.lt.s32.totalorder %s19, 4
      %p201 = pnand %p199, %p200
      %p202 = pneg %p201
      // Predicated region
      $region9: #{encoder_forward.1} parent=5 // pred_check
        _
      $region10: #{encoder_forward.1} parent=5 // pred_check_branch
        %204 = sbr.rel (%p201) target = $region12
      $region11: #{encoder_forward.1} parent=5 // pred_region
        %s205 = ssub.s32 %s19, 1
        // Predicated region
        $region13: #{encoder_forward.1} parent=11 // pred_check
          %p206 = pneg %p40
        $region14: #{encoder_forward.1} parent=11 // pred_check_branch
          %208 = sbr.rel (%p206) target = $region16
        $region15: #{encoder_forward.1} parent=11 // pred_region
          _
        $region16: #{encoder_forward.1} parent=11 // pred_fallthru
          _
      $region12: #{encoder_forward.1} parent=5 // pred_fallthru
        _
      %p209 = scmp.lt.s32.totalorder %s19, 3
      // Predicated region
      $region17: #{encoder_forward.1} parent=5 // pred_check
        %p210 = pneg %p209
      $region18: #{encoder_forward.1} parent=5 // pred_check_branch
        %212 = sbr.rel (%p210) target = $region20
      $region19: #{encoder_forward.1} parent=5 // pred_region
        // Predicated region
        $region21: #{encoder_forward.1} parent=19 // pred_check
          %p213 = pneg %p60
        $region22: #{encoder_forward.1} parent=19 // pred_check_branch
          %215 = sbr.rel (%p213) target = $region24
        $region23: #{encoder_forward.1} parent=19 // pred_region
          %s216 = sand.u32 %s50, 1
          %s217 = scalar_lea.sflag [#allocation4], %s216
          %s218 = sand.u32 %s50, 1
          %s219 = smul.addr %s218, 1024
          %s220 = scalar_lea.vmem [#allocation3], %s219
          %s222 = ssub.s32 16384, 16384
          %223 = vsyncadd %s217, %s222
          %s224 = smul.addr %s19, 256
          %s225 = smul.addr %s224, 64
          %s226 = scalar_lea.hbm %s1, %s225
          %s227 = sshll.u32 %s220, 4
          %s228 = int_to_ptr.vmem [resolvable:$true] %s227
          %233 = dma.hbm_to_vmem [thread:$0]  %s226, 16384, %s228, %s217, 512, 512, 32
        $region24: #{encoder_forward.1} parent=19 // pred_fallthru
          _
        // Predicated region
        $region25: #{encoder_forward.1} parent=19 // pred_check
          %p234 = pneg %p86
        $region26: #{encoder_forward.1} parent=19 // pred_check_branch
          %236 = sbr.rel (%p234) target = $region28
        $region27: #{encoder_forward.1} parent=19 // pred_region
          %s237 = sand.u32 %s19, 1
          %s238 = scalar_lea.sflag [#allocation6], %s237
          %s239 = sand.u32 %s76, 1
          %s240 = smul.addr %s239, 1024
          %s241 = scalar_lea.vmem [#allocation5], %s240
          %s243 = ssub.s32 16384, 16384
          %244 = vsyncadd %s238, %s243
          %s245 = smul.addr %s19, 256
          %s246 = smul.addr %s245, 64
          %s247 = scalar_lea.hbm %s2, %s246
          %s248 = sshll.u32 %s241, 4
          %s249 = int_to_ptr.vmem [resolvable:$true] %s248
          %254 = dma.hbm_to_vmem [thread:$0]  %s247, 16384, %s249, %s238, 512, 512, 32
        $region28: #{encoder_forward.1} parent=19 // pred_fallthru
          _
        // Predicated region
        $region29: #{encoder_forward.1} parent=19 // pred_check
          %p255 = pneg %p112
        $region30: #{encoder_forward.1} parent=19 // pred_check_branch
          %257 = sbr.rel (%p255) target = $region32
        $region31: #{encoder_forward.1} parent=19 // pred_region
          %s258 = sand.u32 %s19, 1
          %s259 = scalar_lea.sflag [#allocation6], %s258
          %s260 = sand.u32 %s102, 1
          %s261 = smul.addr %s260, 8
          %s262 = scalar_lea.vmem [#allocation7], %s261
          %s264 = ssub.s32 128, 128
          %265 = vsyncadd %s259, %s264
          %s266 = smul.addr %s19, 8
          %s267 = smul.addr %s266, 16
          %s268 = scalar_lea.hbm %s3, %s267
          %s270 = sshll.u32 %s262, 4
          %s271 = int_to_ptr.vmem [resolvable:$true] %s270
          %273 = dma.hbm_to_vmem [thread:$0]  %s268, 128, %s271, %s259
        $region32: #{encoder_forward.1} parent=19 // pred_fallthru
          _
      $region20: #{encoder_forward.1} parent=5 // pred_fallthru
        _
      %p274 = scmp.le.s32.totalorder 1, %s19
      %p275 = scmp.lt.s32.totalorder %s19, 4
      %p276 = pnand %p274, %p275
      %p277 = pneg %p276
      // Predicated region
      $region33: #{encoder_forward.1} parent=5 // pred_check
        _
      $region34: #{encoder_forward.1} parent=5 // pred_check_branch
        %279 = sbr.rel (%p276) target = $region36
      $region35: #{encoder_forward.1} parent=5 // pred_region
        %s280 = ssub.s32 %s19, 1
        %s281 = sand.u32 %s53, 1
        %s282 = scalar_lea.sflag [#allocation4], %s281
        %s283 = sand.u32 %s53, 1
        %s284 = smul.addr %s283, 1024
        %s285 = scalar_lea.vmem [#allocation3], %s284
        // Predicated region
        $region37: #{encoder_forward.1} parent=35 // pred_check
          %p286 = pneg %p66
        $region38: #{encoder_forward.1} parent=35 // pred_check_branch
          %288 = sbr.rel (%p286) target = $region40
        $region39: #{encoder_forward.1} parent=35 // pred_region
          %289 = dma.done %s282, 16384
        $region40: #{encoder_forward.1} parent=35 // pred_fallthru
          _
        %s290 = sand.u32 %s24, 1
        %s291 = scalar_lea.sflag [#allocation6], %s290
        %s292 = sand.u32 %s79, 1
        %s293 = smul.addr %s292, 1024
        %s294 = scalar_lea.vmem [#allocation5], %s293
        // Predicated region
        $region41: #{encoder_forward.1} parent=35 // pred_check
          %p295 = pneg %p92
        $region42: #{encoder_forward.1} parent=35 // pred_check_branch
          %297 = sbr.rel (%p295) target = $region44
        $region43: #{encoder_forward.1} parent=35 // pred_region
          %298 = dma.done %s291, 16384
        $region44: #{encoder_forward.1} parent=35 // pred_fallthru
          _
        %s299 = sand.u32 %s24, 1
        %s300 = scalar_lea.sflag [#allocation6], %s299
        %s301 = sand.u32 %s105, 1
        %s302 = smul.addr %s301, 8
        %s303 = scalar_lea.vmem [#allocation7], %s302
        // Predicated region
        $region45: #{encoder_forward.1} parent=35 // pred_check
          %p304 = pneg %p118
        $region46: #{encoder_forward.1} parent=35 // pred_check_branch
          %306 = sbr.rel (%p304) target = $region48
        $region47: #{encoder_forward.1} parent=35 // pred_region
          %307 = dma.done %s300, 128
        $region48: #{encoder_forward.1} parent=35 // pred_fallthru
          _
        %p308 = pneg %p40
        %p309 = pneg %p37
        %s310 = sand.u32 %s53, 1
        %s311 = scalar_lea.sflag [#allocation4], %s310
        %s312 = sand.u32 %s53, 1
        %s313 = smul.addr %s312, 1024
        %s314 = scalar_lea.vmem [#allocation3], %s313
        %p315 = pneg %p66
        %p316 = pneg %p63
        %s317 = sand.u32 %s24, 1
        %s318 = scalar_lea.sflag [#allocation6], %s317
        %s319 = sand.u32 %s79, 1
        %s320 = smul.addr %s319, 1024
        %s321 = scalar_lea.vmem [#allocation5], %s320
        %p322 = pneg %p92
        %p323 = pneg %p89
        %s324 = sand.u32 %s24, 1
        %s325 = scalar_lea.sflag [#allocation6], %s324
        %s326 = sand.u32 %s105, 1
        %s327 = smul.addr %s326, 8
        %s328 = scalar_lea.vmem [#allocation7], %s327
        %p329 = pneg %p118
        %p330 = pneg %p115
        %p331 = pneg %p139
        %p332 = pneg %p136
        %p333 = pneg %p165
        %p334 = pneg %p162
        %p335 = scmp.lt.s32.totalorder %s24, 2
        %s336 = scalar_select %p335, %s24, 2
        %s337 = smul.addr %s336, 2
        %s338 = smul.addr %s337, 8
        %s339 = scalar_lea.vmem %s5, %s338
        %p340 = pneg %p191
        %p341 = pneg %p188
        %p342 = scmp.lt.s32.totalorder %s24, 2
        %s343 = scalar_select %p342, %s24, 2
        %s344 = smul.addr %s343, 2
        %s345 = smul.addr %s344, 8
        %s346 = scalar_lea.vmem %s6, %s345
        %p347 = scmp.lt.s32.totalorder %s24, 2
        %s348 = scalar_select %p347, %s24, 2
        %s349 = smul.addr %s348, 2
        %s350 = smul.addr %s349, 8
        %s351 = scalar_lea.vmem %s5, %s350
        %p352 = scmp.lt.s32.totalorder %s24, 2
        %s353 = scalar_select %p352, %s24, 2
        %s354 = smul.addr %s353, 2
        %s355 = smul.addr %s354, 8
        %s356 = scalar_lea.vmem %s6, %s355
        %p357 = scmp.eq.s32.totalorder %s24, 0
        // Predicated region
        $region49: #{encoder_forward.1} parent=35 // pred_check
          %p358 = pneg %p357
        $region50: #{encoder_forward.1} parent=35 // pred_check_branch
          %360 = sbr.rel (%p358) target = $region52
        $region51: #{encoder_forward.1} parent=35 // pred_region
          %v361 = vld [vmem:[%s0] sm:$0xff]
          %v362 = vld [vmem:[%s0 + $0x8] sm:$0xff]
          %v363 = vld [vmem:[%s0 + $0x10] sm:$0xff]
          %v364 = vld [vmem:[%s0 + $0x18] sm:$0xff]
          %v365 = vld [vmem:[%s0 + $0x20] sm:$0xff]
          %v366 = vld [vmem:[%s0 + $0x28] sm:$0xff]
          %v367 = vld [vmem:[%s0 + $0x30] sm:$0xff]
          %v368 = vld [vmem:[%s0 + $0x38] sm:$0xff]
          %v369 = vld [vmem:[%s0 + $0x40] sm:$0xff]
          %v370 = vld [vmem:[%s0 + $0x48] sm:$0xff]
          %v371 = vld [vmem:[%s0 + $0x50] sm:$0xff]
          %v372 = vld [vmem:[%s0 + $0x58] sm:$0xff]
          %v373 = vld [vmem:[%s0 + $0x60] sm:$0xff]
          %v374 = vld [vmem:[%s0 + $0x68] sm:$0xff]
          %v375 = vld [vmem:[%s0 + $0x70] sm:$0xff]
          %v376 = vld [vmem:[%s0 + $0x78] sm:$0xff]
          %377 = vst [vmem:[%s4] sm:$0xff] %v361
          %378 = vst [vmem:[%s4 + $0x8] sm:$0xff] %v362
          %379 = vst [vmem:[%s4 + $0x10] sm:$0xff] %v363
          %380 = vst [vmem:[%s4 + $0x18] sm:$0xff] %v364
          %381 = vst [vmem:[%s4 + $0x20] sm:$0xff] %v365
          %382 = vst [vmem:[%s4 + $0x28] sm:$0xff] %v366
          %383 = vst [vmem:[%s4 + $0x30] sm:$0xff] %v367
          %384 = vst [vmem:[%s4 + $0x38] sm:$0xff] %v368
          %385 = vst [vmem:[%s4 + $0x40] sm:$0xff] %v369
          %386 = vst [vmem:[%s4 + $0x48] sm:$0xff] %v370
          %387 = vst [vmem:[%s4 + $0x50] sm:$0xff] %v371
          %388 = vst [vmem:[%s4 + $0x58] sm:$0xff] %v372
          %389 = vst [vmem:[%s4 + $0x60] sm:$0xff] %v373
          %390 = vst [vmem:[%s4 + $0x68] sm:$0xff] %v374
          %391 = vst [vmem:[%s4 + $0x70] sm:$0xff] %v375
          %392 = vst [vmem:[%s4 + $0x78] sm:$0xff] %v376
        $region52: #{encoder_forward.1} parent=35 // pred_fallthru
          _
        %v393 = vld [vmem:[%s285] sm:$0xff]
        %v394 = vld [vmem:[%s285 + $0x8] sm:$0xff]
        %v395 = vld [vmem:[%s285 + $0x10] sm:$0xff]
        %v396 = vld [vmem:[%s285 + $0x18] sm:$0xff]
        %v397 = vld [vmem:[%s285 + $0x20] sm:$0xff]
        %v398 = vld [vmem:[%s285 + $0x28] sm:$0xff]
        %v399 = vld [vmem:[%s285 + $0x30] sm:$0xff]
        %v400 = vld [vmem:[%s285 + $0x38] sm:$0xff]
        %v401 = vld [vmem:[%s285 + $0x40] sm:$0xff]
        %v402 = vld [vmem:[%s285 + $0x48] sm:$0xff]
        %v403 = vld [vmem:[%s285 + $0x50] sm:$0xff]
        %v404 = vld [vmem:[%s285 + $0x58] sm:$0xff]
        %v405 = vld [vmem:[%s285 + $0x60] sm:$0xff]
        %v406 = vld [vmem:[%s285 + $0x68] sm:$0xff]
        %v407 = vld [vmem:[%s285 + $0x70] sm:$0xff]
        %v408 = vld [vmem:[%s285 + $0x78] sm:$0xff]
        %v409 = vld [vmem:[%s285 + $0x80] sm:$0xff]
        %v410 = vld [vmem:[%s285 + $0x88] sm:$0xff]
        %v411 = vld [vmem:[%s285 + $0x90] sm:$0xff]
        %v412 = vld [vmem:[%s285 + $0x98] sm:$0xff]
        %v413 = vld [vmem:[%s285 + $0xa0] sm:$0xff]
        %v414 = vld [vmem:[%s285 + $0xa8] sm:$0xff]
        %v415 = vld [vmem:[%s285 + $0xb0] sm:$0xff]
        %v416 = vld [vmem:[%s285 + $0xb8] sm:$0xff]
        %v417 = vld [vmem:[%s285 + $0xc0] sm:$0xff]
        %v418 = vld [vmem:[%s285 + $0xc8] sm:$0xff]
        %v419 = vld [vmem:[%s285 + $0xd0] sm:$0xff]
        %v420 = vld [vmem:[%s285 + $0xd8] sm:$0xff]
        %v421 = vld [vmem:[%s285 + $0xe0] sm:$0xff]
        %v422 = vld [vmem:[%s285 + $0xe8] sm:$0xff]
        %v423 = vld [vmem:[%s285 + $0xf0] sm:$0xff]
        %v424 = vld [vmem:[%s285 + $0xf8] sm:$0xff]
        %v425 = vld [vmem:[%s285 + $0x100] sm:$0xff]
        %v426 = vld [vmem:[%s285 + $0x108] sm:$0xff]
        %v427 = vld [vmem:[%s285 + $0x110] sm:$0xff]
        %v428 = vld [vmem:[%s285 + $0x118] sm:$0xff]
        %v429 = vld [vmem:[%s285 + $0x120] sm:$0xff]
        %v430 = vld [vmem:[%s285 + $0x128] sm:$0xff]
        %v431 = vld [vmem:[%s285 + $0x130] sm:$0xff]
        %v432 = vld [vmem:[%s285 + $0x138] sm:$0xff]
        %v433 = vld [vmem:[%s285 + $0x140] sm:$0xff]
        %v434 = vld [vmem:[%s285 + $0x148] sm:$0xff]
        %v435 = vld [vmem:[%s285 + $0x150] sm:$0xff]
        %v436 = vld [vmem:[%s285 + $0x158] sm:$0xff]
        %v437 = vld [vmem:[%s285 + $0x160] sm:$0xff]
        %v438 = vld [vmem:[%s285 + $0x168] sm:$0xff]
        %v439 = vld [vmem:[%s285 + $0x170] sm:$0xff]
        %v440 = vld [vmem:[%s285 + $0x178] sm:$0xff]
        %v441 = vld [vmem:[%s285 + $0x180] sm:$0xff]
        %v442 = vld [vmem:[%s285 + $0x188] sm:$0xff]
        %v443 = vld [vmem:[%s285 + $0x190] sm:$0xff]
        %v444 = vld [vmem:[%s285 + $0x198] sm:$0xff]
        %v445 = vld [vmem:[%s285 + $0x1a0] sm:$0xff]
        %v446 = vld [vmem:[%s285 + $0x1a8] sm:$0xff]
        %v447 = vld [vmem:[%s285 + $0x1b0] sm:$0xff]
        %v448 = vld [vmem:[%s285 + $0x1b8] sm:$0xff]
        %v449 = vld [vmem:[%s285 + $0x1c0] sm:$0xff]
        %v450 = vld [vmem:[%s285 + $0x1c8] sm:$0xff]
        %v451 = vld [vmem:[%s285 + $0x1d0] sm:$0xff]
        %v452 = vld [vmem:[%s285 + $0x1d8] sm:$0xff]
        %v453 = vld [vmem:[%s285 + $0x1e0] sm:$0xff]
        %v454 = vld [vmem:[%s285 + $0x1e8] sm:$0xff]
        %v455 = vld [vmem:[%s285 + $0x1f0] sm:$0xff]
        %v456 = vld [vmem:[%s285 + $0x1f8] sm:$0xff]
        %v457 = vld [vmem:[%s285 + $0x200] sm:$0xff]
        %v458 = vld [vmem:[%s285 + $0x208] sm:$0xff]
        %v459 = vld [vmem:[%s285 + $0x210] sm:$0xff]
        %v460 = vld [vmem:[%s285 + $0x218] sm:$0xff]
        %v461 = vld [vmem:[%s285 + $0x220] sm:$0xff]
        %v462 = vld [vmem:[%s285 + $0x228] sm:$0xff]
        %v463 = vld [vmem:[%s285 + $0x230] sm:$0xff]
        %v464 = vld [vmem:[%s285 + $0x238] sm:$0xff]
        %v465 = vld [vmem:[%s285 + $0x240] sm:$0xff]
        %v466 = vld [vmem:[%s285 + $0x248] sm:$0xff]
        %v467 = vld [vmem:[%s285 + $0x250] sm:$0xff]
        %v468 = vld [vmem:[%s285 + $0x258] sm:$0xff]
        %v469 = vld [vmem:[%s285 + $0x260] sm:$0xff]
        %v470 = vld [vmem:[%s285 + $0x268] sm:$0xff]
        %v471 = vld [vmem:[%s285 + $0x270] sm:$0xff]
        %v472 = vld [vmem:[%s285 + $0x278] sm:$0xff]
        %v473 = vld [vmem:[%s285 + $0x280] sm:$0xff]
        %v474 = vld [vmem:[%s285 + $0x288] sm:$0xff]
        %v475 = vld [vmem:[%s285 + $0x290] sm:$0xff]
        %v476 = vld [vmem:[%s285 + $0x298] sm:$0xff]
        %v477 = vld [vmem:[%s285 + $0x2a0] sm:$0xff]
        %v478 = vld [vmem:[%s285 + $0x2a8] sm:$0xff]
        %v479 = vld [vmem:[%s285 + $0x2b0] sm:$0xff]
        %v480 = vld [vmem:[%s285 + $0x2b8] sm:$0xff]
        %v481 = vld [vmem:[%s285 + $0x2c0] sm:$0xff]
        %v482 = vld [vmem:[%s285 + $0x2c8] sm:$0xff]
        %v483 = vld [vmem:[%s285 + $0x2d0] sm:$0xff]
        %v484 = vld [vmem:[%s285 + $0x2d8] sm:$0xff]
        %v485 = vld [vmem:[%s285 + $0x2e0] sm:$0xff]
        %v486 = vld [vmem:[%s285 + $0x2e8] sm:$0xff]
        %v487 = vld [vmem:[%s285 + $0x2f0] sm:$0xff]
        %v488 = vld [vmem:[%s285 + $0x2f8] sm:$0xff]
        %v489 = vld [vmem:[%s285 + $0x300] sm:$0xff]
        %v490 = vld [vmem:[%s285 + $0x308] sm:$0xff]
        %v491 = vld [vmem:[%s285 + $0x310] sm:$0xff]
        %v492 = vld [vmem:[%s285 + $0x318] sm:$0xff]
        %v493 = vld [vmem:[%s285 + $0x320] sm:$0xff]
        %v494 = vld [vmem:[%s285 + $0x328] sm:$0xff]
        %v495 = vld [vmem:[%s285 + $0x330] sm:$0xff]
        %v496 = vld [vmem:[%s285 + $0x338] sm:$0xff]
        %v497 = vld [vmem:[%s285 + $0x340] sm:$0xff]
        %v498 = vld [vmem:[%s285 + $0x348] sm:$0xff]
        %v499 = vld [vmem:[%s285 + $0x350] sm:$0xff]
        %v500 = vld [vmem:[%s285 + $0x358] sm:$0xff]
        %v501 = vld [vmem:[%s285 + $0x360] sm:$0xff]
        %v502 = vld [vmem:[%s285 + $0x368] sm:$0xff]
        %v503 = vld [vmem:[%s285 + $0x370] sm:$0xff]
        %v504 = vld [vmem:[%s285 + $0x378] sm:$0xff]
        %v505 = vld [vmem:[%s285 + $0x380] sm:$0xff]
        %v506 = vld [vmem:[%s285 + $0x388] sm:$0xff]
        %v507 = vld [vmem:[%s285 + $0x390] sm:$0xff]
        %v508 = vld [vmem:[%s285 + $0x398] sm:$0xff]
        %v509 = vld [vmem:[%s285 + $0x3a0] sm:$0xff]
        %v510 = vld [vmem:[%s285 + $0x3a8] sm:$0xff]
        %v511 = vld [vmem:[%s285 + $0x3b0] sm:$0xff]
        %v512 = vld [vmem:[%s285 + $0x3b8] sm:$0xff]
        %v513 = vld [vmem:[%s285 + $0x3c0] sm:$0xff]
        %v514 = vld [vmem:[%s285 + $0x3c8] sm:$0xff]
        %v515 = vld [vmem:[%s285 + $0x3d0] sm:$0xff]
        %v516 = vld [vmem:[%s285 + $0x3d8] sm:$0xff]
        %v517 = vld [vmem:[%s285 + $0x3e0] sm:$0xff]
        %v518 = vld [vmem:[%s285 + $0x3e8] sm:$0xff]
        %v519 = vld [vmem:[%s285 + $0x3f0] sm:$0xff]
        %v520 = vld [vmem:[%s285 + $0x3f8] sm:$0xff]
        %v521 = vld [vmem:[%s294] sm:$0xff]
        %v522 = vld [vmem:[%s294 + $0x8] sm:$0xff]
        %v523 = vld [vmem:[%s294 + $0x10] sm:$0xff]
        %v524 = vld [vmem:[%s294 + $0x18] sm:$0xff]
        %v525 = vld [vmem:[%s294 + $0x20] sm:$0xff]
        %v526 = vld [vmem:[%s294 + $0x28] sm:$0xff]
        %v527 = vld [vmem:[%s294 + $0x30] sm:$0xff]
        %v528 = vld [vmem:[%s294 + $0x38] sm:$0xff]
        %v529 = vld [vmem:[%s294 + $0x40] sm:$0xff]
        %v530 = vld [vmem:[%s294 + $0x48] sm:$0xff]
        %v531 = vld [vmem:[%s294 + $0x50] sm:$0xff]
        %v532 = vld [vmem:[%s294 + $0x58] sm:$0xff]
        %v533 = vld [vmem:[%s294 + $0x60] sm:$0xff]
        %v534 = vld [vmem:[%s294 + $0x68] sm:$0xff]
        %v535 = vld [vmem:[%s294 + $0x70] sm:$0xff]
        %v536 = vld [vmem:[%s294 + $0x78] sm:$0xff]
        %v537 = vld [vmem:[%s294 + $0x80] sm:$0xff]
        %v538 = vld [vmem:[%s294 + $0x88] sm:$0xff]
        %v539 = vld [vmem:[%s294 + $0x90] sm:$0xff]
        %v540 = vld [vmem:[%s294 + $0x98] sm:$0xff]
        %v541 = vld [vmem:[%s294 + $0xa0] sm:$0xff]
        %v542 = vld [vmem:[%s294 + $0xa8] sm:$0xff]
        %v543 = vld [vmem:[%s294 + $0xb0] sm:$0xff]
        %v544 = vld [vmem:[%s294 + $0xb8] sm:$0xff]
        %v545 = vld [vmem:[%s294 + $0xc0] sm:$0xff]
        %v546 = vld [vmem:[%s294 + $0xc8] sm:$0xff]
        %v547 = vld [vmem:[%s294 + $0xd0] sm:$0xff]
        %v548 = vld [vmem:[%s294 + $0xd8] sm:$0xff]
        %v549 = vld [vmem:[%s294 + $0xe0] sm:$0xff]
        %v550 = vld [vmem:[%s294 + $0xe8] sm:$0xff]
        %v551 = vld [vmem:[%s294 + $0xf0] sm:$0xff]
        %v552 = vld [vmem:[%s294 + $0xf8] sm:$0xff]
        %v553 = vld [vmem:[%s294 + $0x100] sm:$0xff]
        %v554 = vld [vmem:[%s294 + $0x108] sm:$0xff]
        %v555 = vld [vmem:[%s294 + $0x110] sm:$0xff]
        %v556 = vld [vmem:[%s294 + $0x118] sm:$0xff]
        %v557 = vld [vmem:[%s294 + $0x120] sm:$0xff]
        %v558 = vld [vmem:[%s294 + $0x128] sm:$0xff]
        %v559 = vld [vmem:[%s294 + $0x130] sm:$0xff]
        %v560 = vld [vmem:[%s294 + $0x138] sm:$0xff]
        %v561 = vld [vmem:[%s294 + $0x140] sm:$0xff]
        %v562 = vld [vmem:[%s294 + $0x148] sm:$0xff]
        %v563 = vld [vmem:[%s294 + $0x150] sm:$0xff]
        %v564 = vld [vmem:[%s294 + $0x158] sm:$0xff]
        %v565 = vld [vmem:[%s294 + $0x160] sm:$0xff]
        %v566 = vld [vmem:[%s294 + $0x168] sm:$0xff]
        %v567 = vld [vmem:[%s294 + $0x170] sm:$0xff]
        %v568 = vld [vmem:[%s294 + $0x178] sm:$0xff]
        %v569 = vld [vmem:[%s294 + $0x180] sm:$0xff]
        %v570 = vld [vmem:[%s294 + $0x188] sm:$0xff]
        %v571 = vld [vmem:[%s294 + $0x190] sm:$0xff]
        %v572 = vld [vmem:[%s294 + $0x198] sm:$0xff]
        %v573 = vld [vmem:[%s294 + $0x1a0] sm:$0xff]
        %v574 = vld [vmem:[%s294 + $0x1a8] sm:$0xff]
        %v575 = vld [vmem:[%s294 + $0x1b0] sm:$0xff]
        %v576 = vld [vmem:[%s294 + $0x1b8] sm:$0xff]
        %v577 = vld [vmem:[%s294 + $0x1c0] sm:$0xff]
        %v578 = vld [vmem:[%s294 + $0x1c8] sm:$0xff]
        %v579 = vld [vmem:[%s294 + $0x1d0] sm:$0xff]
        %v580 = vld [vmem:[%s294 + $0x1d8] sm:$0xff]
        %v581 = vld [vmem:[%s294 + $0x1e0] sm:$0xff]
        %v582 = vld [vmem:[%s294 + $0x1e8] sm:$0xff]
        %v583 = vld [vmem:[%s294 + $0x1f0] sm:$0xff]
        %v584 = vld [vmem:[%s294 + $0x1f8] sm:$0xff]
        %v585 = vld [vmem:[%s294 + $0x200] sm:$0xff]
        %v586 = vld [vmem:[%s294 + $0x208] sm:$0xff]
        %v587 = vld [vmem:[%s294 + $0x210] sm:$0xff]
        %v588 = vld [vmem:[%s294 + $0x218] sm:$0xff]
        %v589 = vld [vmem:[%s294 + $0x220] sm:$0xff]
        %v590 = vld [vmem:[%s294 + $0x228] sm:$0xff]
        %v591 = vld [vmem:[%s294 + $0x230] sm:$0xff]
        %v592 = vld [vmem:[%s294 + $0x238] sm:$0xff]
        %v593 = vld [vmem:[%s294 + $0x240] sm:$0xff]
        %v594 = vld [vmem:[%s294 + $0x248] sm:$0xff]
        %v595 = vld [vmem:[%s294 + $0x250] sm:$0xff]
        %v596 = vld [vmem:[%s294 + $0x258] sm:$0xff]
        %v597 = vld [vmem:[%s294 + $0x260] sm:$0xff]
        %v598 = vld [vmem:[%s294 + $0x268] sm:$0xff]
        %v599 = vld [vmem:[%s294 + $0x270] sm:$0xff]
        %v600 = vld [vmem:[%s294 + $0x278] sm:$0xff]
        %v601 = vld [vmem:[%s294 + $0x280] sm:$0xff]
        %v602 = vld [vmem:[%s294 + $0x288] sm:$0xff]
        %v603 = vld [vmem:[%s294 + $0x290] sm:$0xff]
        %v604 = vld [vmem:[%s294 + $0x298] sm:$0xff]
        %v605 = vld [vmem:[%s294 + $0x2a0] sm:$0xff]
        %v606 = vld [vmem:[%s294 + $0x2a8] sm:$0xff]
        %v607 = vld [vmem:[%s294 + $0x2b0] sm:$0xff]
        %v608 = vld [vmem:[%s294 + $0x2b8] sm:$0xff]
        %v609 = vld [vmem:[%s294 + $0x2c0] sm:$0xff]
        %v610 = vld [vmem:[%s294 + $0x2c8] sm:$0xff]
        %v611 = vld [vmem:[%s294 + $0x2d0] sm:$0xff]
        %v612 = vld [vmem:[%s294 + $0x2d8] sm:$0xff]
        %v613 = vld [vmem:[%s294 + $0x2e0] sm:$0xff]
        %v614 = vld [vmem:[%s294 + $0x2e8] sm:$0xff]
        %v615 = vld [vmem:[%s294 + $0x2f0] sm:$0xff]
        %v616 = vld [vmem:[%s294 + $0x2f8] sm:$0xff]
        %v617 = vld [vmem:[%s294 + $0x300] sm:$0xff]
        %v618 = vld [vmem:[%s294 + $0x308] sm:$0xff]
        %v619 = vld [vmem:[%s294 + $0x310] sm:$0xff]
        %v620 = vld [vmem:[%s294 + $0x318] sm:$0xff]
        %v621 = vld [vmem:[%s294 + $0x320] sm:$0xff]
        %v622 = vld [vmem:[%s294 + $0x328] sm:$0xff]
        %v623 = vld [vmem:[%s294 + $0x330] sm:$0xff]
        %v624 = vld [vmem:[%s294 + $0x338] sm:$0xff]
        %v625 = vld [vmem:[%s294 + $0x340] sm:$0xff]
        %v626 = vld [vmem:[%s294 + $0x348] sm:$0xff]
        %v627 = vld [vmem:[%s294 + $0x350] sm:$0xff]
        %v628 = vld [vmem:[%s294 + $0x358] sm:$0xff]
        %v629 = vld [vmem:[%s294 + $0x360] sm:$0xff]
        %v630 = vld [vmem:[%s294 + $0x368] sm:$0xff]
        %v631 = vld [vmem:[%s294 + $0x370] sm:$0xff]
        %v632 = vld [vmem:[%s294 + $0x378] sm:$0xff]
        %v633 = vld [vmem:[%s294 + $0x380] sm:$0xff]
        %v634 = vld [vmem:[%s294 + $0x388] sm:$0xff]
        %v635 = vld [vmem:[%s294 + $0x390] sm:$0xff]
        %v636 = vld [vmem:[%s294 + $0x398] sm:$0xff]
        %v637 = vld [vmem:[%s294 + $0x3a0] sm:$0xff]
        %v638 = vld [vmem:[%s294 + $0x3a8] sm:$0xff]
        %v639 = vld [vmem:[%s294 + $0x3b0] sm:$0xff]
        %v640 = vld [vmem:[%s294 + $0x3b8] sm:$0xff]
        %v641 = vld [vmem:[%s294 + $0x3c0] sm:$0xff]
        %v642 = vld [vmem:[%s294 + $0x3c8] sm:$0xff]
        %v643 = vld [vmem:[%s294 + $0x3d0] sm:$0xff]
        %v644 = vld [vmem:[%s294 + $0x3d8] sm:$0xff]
        %v645 = vld [vmem:[%s294 + $0x3e0] sm:$0xff]
        %v646 = vld [vmem:[%s294 + $0x3e8] sm:$0xff]
        %v647 = vld [vmem:[%s294 + $0x3f0] sm:$0xff]
        %v648 = vld [vmem:[%s294 + $0x3f8] sm:$0xff]
        %v649 = vld [vmem:[%s303] sm:$0xff]
        %v650 = vld [vmem:[%s4] sm:$0xff]
        %v651 = vld [vmem:[%s4 + $0x8] sm:$0xff]
        %v652 = vld [vmem:[%s4 + $0x10] sm:$0xff]
        %v653 = vld [vmem:[%s4 + $0x18] sm:$0xff]
        %v654 = vld [vmem:[%s4 + $0x20] sm:$0xff]
        %v655 = vld [vmem:[%s4 + $0x28] sm:$0xff]
        %v656 = vld [vmem:[%s4 + $0x30] sm:$0xff]
        %v657 = vld [vmem:[%s4 + $0x38] sm:$0xff]
        %v658 = vld [vmem:[%s4 + $0x40] sm:$0xff]
        %v659 = vld [vmem:[%s4 + $0x48] sm:$0xff]
        %v660 = vld [vmem:[%s4 + $0x50] sm:$0xff]
        %v661 = vld [vmem:[%s4 + $0x58] sm:$0xff]
        %v662 = vld [vmem:[%s4 + $0x60] sm:$0xff]
        %v663 = vld [vmem:[%s4 + $0x68] sm:$0xff]
        %v664 = vld [vmem:[%s4 + $0x70] sm:$0xff]
        %v665 = vld [vmem:[%s4 + $0x78] sm:$0xff]
        %v666 = vpack.c.bf16 %v652, %v650
        %v667 = vpack.c.bf16 %v653, %v651
        %v668 = vpack.c.bf16 %v656, %v654
        %v669 = vpack.c.bf16 %v657, %v655
        %v670 = vpack.c.bf16 %v660, %v658
        %v671 = vpack.c.bf16 %v661, %v659
        %v672 = vpack.c.bf16 %v664, %v662
        %v673 = vpack.c.bf16 %v665, %v663
        %v675 = vlaneseq
        %v676 = vshrl.u32 %v675, 7
        %v677 = vsub.s32 0, %v676
        %v678 = vrot.slane %v649, %v677
        %v679 = vlaneseq
        %v680 = vshrl.u32 %v679, 7
        %v681 = vsub.s32 1, %v680
        %v682 = vrot.slane %v649, %v681
        %v683 = vlaneseq
        %v684 = vshrl.u32 %v683, 7
        %v685 = vsub.s32 2, %v684
        %v686 = vrot.slane %v649, %v685
        %v687 = vlaneseq
        %v688 = vshrl.u32 %v687, 7
        %v689 = vsub.s32 3, %v688
        %v690 = vrot.slane %v649, %v689
        %v691 = vlaneseq
        %v692 = vshrl.u32 %v691, 7
        %v693 = vsub.s32 4, %v692
        %v694 = vrot.slane %v649, %v693
        %v695 = vlaneseq
        %v696 = vshrl.u32 %v695, 7
        %v697 = vsub.s32 5, %v696
        %v698 = vrot.slane %v649, %v697
        %v699 = vlaneseq
        %v700 = vshrl.u32 %v699, 7
        %v701 = vsub.s32 6, %v700
        %v702 = vrot.slane %v649, %v701
        %v703 = vlaneseq
        %v704 = vshrl.u32 %v703, 7
        %v705 = vsub.s32 7, %v704
        %v706 = vrot.slane %v649, %v705
        %v843 = vunpack.c.l.b16 %v393
        %v844 = vunpack.c.h.b16 %v393
        %v845 = vunpack.c.l.b16 %v394
        %v846 = vunpack.c.h.b16 %v394
        %v847 = vunpack.c.l.b16 %v395
        %v848 = vunpack.c.h.b16 %v395
        %v849 = vunpack.c.l.b16 %v396
        %v850 = vunpack.c.h.b16 %v396
        %v851 = vunpack.c.l.b16 %v397
        %v852 = vunpack.c.h.b16 %v397
        %v853 = vunpack.c.l.b16 %v398
        %v854 = vunpack.c.h.b16 %v398
        %v855 = vunpack.c.l.b16 %v399
        %v856 = vunpack.c.h.b16 %v399
        %v857 = vunpack.c.l.b16 %v400
        %v858 = vunpack.c.h.b16 %v400
        %v859 = vunpack.c.l.b16 %v401
        %v860 = vunpack.c.h.b16 %v401
        %v861 = vunpack.c.l.b16 %v402
        %v862 = vunpack.c.h.b16 %v402
        %v863 = vunpack.c.l.b16 %v403
        %v864 = vunpack.c.h.b16 %v403
        %v865 = vunpack.c.l.b16 %v404
        %v866 = vunpack.c.h.b16 %v404
        %v867 = vunpack.c.l.b16 %v405
        %v868 = vunpack.c.h.b16 %v405
        %v869 = vunpack.c.l.b16 %v406
        %v870 = vunpack.c.h.b16 %v406
        %v871 = vunpack.c.l.b16 %v407
        %v872 = vunpack.c.h.b16 %v407
        %v873 = vunpack.c.l.b16 %v408
        %v874 = vunpack.c.h.b16 %v408
        %v875 = vunpack.c.l.b16 %v409
        %v876 = vunpack.c.h.b16 %v409
        %v877 = vunpack.c.l.b16 %v410
        %v878 = vunpack.c.h.b16 %v410
        %v879 = vunpack.c.l.b16 %v411
        %v880 = vunpack.c.h.b16 %v411
        %v881 = vunpack.c.l.b16 %v412
        %v882 = vunpack.c.h.b16 %v412
        %v883 = vunpack.c.l.b16 %v413
        %v884 = vunpack.c.h.b16 %v413
        %v885 = vunpack.c.l.b16 %v414
        %v886 = vunpack.c.h.b16 %v414
        %v887 = vunpack.c.l.b16 %v415
        %v888 = vunpack.c.h.b16 %v415
        %v889 = vunpack.c.l.b16 %v416
        %v890 = vunpack.c.h.b16 %v416
        %v891 = vunpack.c.l.b16 %v417
        %v892 = vunpack.c.h.b16 %v417
        %v893 = vunpack.c.l.b16 %v418
        %v894 = vunpack.c.h.b16 %v418
        %v895 = vunpack.c.l.b16 %v419
        %v896 = vunpack.c.h.b16 %v419
        %v897 = vunpack.c.l.b16 %v420
        %v898 = vunpack.c.h.b16 %v420
        %v899 = vunpack.c.l.b16 %v421
        %v900 = vunpack.c.h.b16 %v421
        %v901 = vunpack.c.l.b16 %v422
        %v902 = vunpack.c.h.b16 %v422
        %v903 = vunpack.c.l.b16 %v423
        %v904 = vunpack.c.h.b16 %v423
        %v905 = vunpack.c.l.b16 %v424
        %v906 = vunpack.c.h.b16 %v424
        %v907 = vunpack.c.l.b16 %v425
        %v908 = vunpack.c.h.b16 %v425
        %v909 = vunpack.c.l.b16 %v426
        %v910 = vunpack.c.h.b16 %v426
        %v911 = vunpack.c.l.b16 %v427
        %v912 = vunpack.c.h.b16 %v427
        %v913 = vunpack.c.l.b16 %v428
        %v914 = vunpack.c.h.b16 %v428
        %v915 = vunpack.c.l.b16 %v429
        %v916 = vunpack.c.h.b16 %v429
        %v917 = vunpack.c.l.b16 %v430
        %v918 = vunpack.c.h.b16 %v430
        %v919 = vunpack.c.l.b16 %v431
        %v920 = vunpack.c.h.b16 %v431
        %v921 = vunpack.c.l.b16 %v432
        %v922 = vunpack.c.h.b16 %v432
        %v923 = vunpack.c.l.b16 %v433
        %v924 = vunpack.c.h.b16 %v433
        %v925 = vunpack.c.l.b16 %v434
        %v926 = vunpack.c.h.b16 %v434
        %v927 = vunpack.c.l.b16 %v435
        %v928 = vunpack.c.h.b16 %v435
        %v929 = vunpack.c.l.b16 %v436
        %v930 = vunpack.c.h.b16 %v436
        %v931 = vunpack.c.l.b16 %v437
        %v932 = vunpack.c.h.b16 %v437
        %v933 = vunpack.c.l.b16 %v438
        %v934 = vunpack.c.h.b16 %v438
        %v935 = vunpack.c.l.b16 %v439
        %v936 = vunpack.c.h.b16 %v439
        %v937 = vunpack.c.l.b16 %v440
        %v938 = vunpack.c.h.b16 %v440
        %v939 = vunpack.c.l.b16 %v441
        %v940 = vunpack.c.h.b16 %v441
        %v941 = vunpack.c.l.b16 %v442
        %v942 = vunpack.c.h.b16 %v442
        %v943 = vunpack.c.l.b16 %v443
        %v944 = vunpack.c.h.b16 %v443
        %v945 = vunpack.c.l.b16 %v444
        %v946 = vunpack.c.h.b16 %v444
        %v947 = vunpack.c.l.b16 %v445
        %v948 = vunpack.c.h.b16 %v445
        %v949 = vunpack.c.l.b16 %v446
        %v950 = vunpack.c.h.b16 %v446
        %v951 = vunpack.c.l.b16 %v447
        %v952 = vunpack.c.h.b16 %v447
        %v953 = vunpack.c.l.b16 %v448
        %v954 = vunpack.c.h.b16 %v448
        %v955 = vunpack.c.l.b16 %v449
        %v956 = vunpack.c.h.b16 %v449
        %v957 = vunpack.c.l.b16 %v450
        %v958 = vunpack.c.h.b16 %v450
        %v959 = vunpack.c.l.b16 %v451
        %v960 = vunpack.c.h.b16 %v451
        %v961 = vunpack.c.l.b16 %v452
        %v962 = vunpack.c.h.b16 %v452
        %v963 = vunpack.c.l.b16 %v453
        %v964 = vunpack.c.h.b16 %v453
        %v965 = vunpack.c.l.b16 %v454
        %v966 = vunpack.c.h.b16 %v454
        %v967 = vunpack.c.l.b16 %v455
        %v968 = vunpack.c.h.b16 %v455
        %v969 = vunpack.c.l.b16 %v456
        %v970 = vunpack.c.h.b16 %v456
        %v971 = vunpack.c.l.b16 %v457
        %v972 = vunpack.c.h.b16 %v457
        %v973 = vunpack.c.l.b16 %v458
        %v974 = vunpack.c.h.b16 %v458
        %v975 = vunpack.c.l.b16 %v459
        %v976 = vunpack.c.h.b16 %v459
        %v977 = vunpack.c.l.b16 %v460
        %v978 = vunpack.c.h.b16 %v460
        %v979 = vunpack.c.l.b16 %v461
        %v980 = vunpack.c.h.b16 %v461
        %v981 = vunpack.c.l.b16 %v462
        %v982 = vunpack.c.h.b16 %v462
        %v983 = vunpack.c.l.b16 %v463
        %v984 = vunpack.c.h.b16 %v463
        %v985 = vunpack.c.l.b16 %v464
        %v986 = vunpack.c.h.b16 %v464
        %v987 = vunpack.c.l.b16 %v465
        %v988 = vunpack.c.h.b16 %v465
        %v989 = vunpack.c.l.b16 %v466
        %v990 = vunpack.c.h.b16 %v466
        %v991 = vunpack.c.l.b16 %v467
        %v992 = vunpack.c.h.b16 %v467
        %v993 = vunpack.c.l.b16 %v468
        %v994 = vunpack.c.h.b16 %v468
        %v995 = vunpack.c.l.b16 %v469
        %v996 = vunpack.c.h.b16 %v469
        %v997 = vunpack.c.l.b16 %v470
        %v998 = vunpack.c.h.b16 %v470
        %v999 = vunpack.c.l.b16 %v471
        %v1000 = vunpack.c.h.b16 %v471
        %v1001 = vunpack.c.l.b16 %v472
        %v1002 = vunpack.c.h.b16 %v472
        %v1003 = vunpack.c.l.b16 %v473
        %v1004 = vunpack.c.h.b16 %v473
        %v1005 = vunpack.c.l.b16 %v474
        %v1006 = vunpack.c.h.b16 %v474
        %v1007 = vunpack.c.l.b16 %v475
        %v1008 = vunpack.c.h.b16 %v475
        %v1009 = vunpack.c.l.b16 %v476
        %v1010 = vunpack.c.h.b16 %v476
        %v1011 = vunpack.c.l.b16 %v477
        %v1012 = vunpack.c.h.b16 %v477
        %v1013 = vunpack.c.l.b16 %v478
        %v1014 = vunpack.c.h.b16 %v478
        %v1015 = vunpack.c.l.b16 %v479
        %v1016 = vunpack.c.h.b16 %v479
        %v1017 = vunpack.c.l.b16 %v480
        %v1018 = vunpack.c.h.b16 %v480
        %v1019 = vunpack.c.l.b16 %v481
        %v1020 = vunpack.c.h.b16 %v481
        %v1021 = vunpack.c.l.b16 %v482
        %v1022 = vunpack.c.h.b16 %v482
        %v1023 = vunpack.c.l.b16 %v483
        %v1024 = vunpack.c.h.b16 %v483
        %v1025 = vunpack.c.l.b16 %v484
        %v1026 = vunpack.c.h.b16 %v484
        %v1027 = vunpack.c.l.b16 %v485
        %v1028 = vunpack.c.h.b16 %v485
        %v1029 = vunpack.c.l.b16 %v486
        %v1030 = vunpack.c.h.b16 %v486
        %v1031 = vunpack.c.l.b16 %v487
        %v1032 = vunpack.c.h.b16 %v487
        %v1033 = vunpack.c.l.b16 %v488
        %v1034 = vunpack.c.h.b16 %v488
        %v1035 = vunpack.c.l.b16 %v489
        %v1036 = vunpack.c.h.b16 %v489
        %v1037 = vunpack.c.l.b16 %v490
        %v1038 = vunpack.c.h.b16 %v490
        %v1039 = vunpack.c.l.b16 %v491
        %v1040 = vunpack.c.h.b16 %v491
        %v1041 = vunpack.c.l.b16 %v492
        %v1042 = vunpack.c.h.b16 %v492
        %v1043 = vunpack.c.l.b16 %v493
        %v1044 = vunpack.c.h.b16 %v493
        %v1045 = vunpack.c.l.b16 %v494
        %v1046 = vunpack.c.h.b16 %v494
        %v1047 = vunpack.c.l.b16 %v495
        %v1048 = vunpack.c.h.b16 %v495
        %v1049 = vunpack.c.l.b16 %v496
        %v1050 = vunpack.c.h.b16 %v496
        %v1051 = vunpack.c.l.b16 %v497
        %v1052 = vunpack.c.h.b16 %v497
        %v1053 = vunpack.c.l.b16 %v498
        %v1054 = vunpack.c.h.b16 %v498
        %v1055 = vunpack.c.l.b16 %v499
        %v1056 = vunpack.c.h.b16 %v499
        %v1057 = vunpack.c.l.b16 %v500
        %v1058 = vunpack.c.h.b16 %v500
        %v1059 = vunpack.c.l.b16 %v501
        %v1060 = vunpack.c.h.b16 %v501
        %v1061 = vunpack.c.l.b16 %v502
        %v1062 = vunpack.c.h.b16 %v502
        %v1063 = vunpack.c.l.b16 %v503
        %v1064 = vunpack.c.h.b16 %v503
        %v1065 = vunpack.c.l.b16 %v504
        %v1066 = vunpack.c.h.b16 %v504
        %v1067 = vunpack.c.l.b16 %v505
        %v1068 = vunpack.c.h.b16 %v505
        %v1069 = vunpack.c.l.b16 %v506
        %v1070 = vunpack.c.h.b16 %v506
        %v1071 = vunpack.c.l.b16 %v507
        %v1072 = vunpack.c.h.b16 %v507
        %v1073 = vunpack.c.l.b16 %v508
        %v1074 = vunpack.c.h.b16 %v508
        %v1075 = vunpack.c.l.b16 %v509
        %v1076 = vunpack.c.h.b16 %v509
        %v1077 = vunpack.c.l.b16 %v510
        %v1078 = vunpack.c.h.b16 %v510
        %v1079 = vunpack.c.l.b16 %v511
        %v1080 = vunpack.c.h.b16 %v511
        %v1081 = vunpack.c.l.b16 %v512
        %v1082 = vunpack.c.h.b16 %v512
        %v1083 = vunpack.c.l.b16 %v513
        %v1084 = vunpack.c.h.b16 %v513
        %v1085 = vunpack.c.l.b16 %v514
        %v1086 = vunpack.c.h.b16 %v514
        %v1087 = vunpack.c.l.b16 %v515
        %v1088 = vunpack.c.h.b16 %v515
        %v1089 = vunpack.c.l.b16 %v516
        %v1090 = vunpack.c.h.b16 %v516
        %v1091 = vunpack.c.l.b16 %v517
        %v1092 = vunpack.c.h.b16 %v517
        %v1093 = vunpack.c.l.b16 %v518
        %v1094 = vunpack.c.h.b16 %v518
        %v1095 = vunpack.c.l.b16 %v519
        %v1096 = vunpack.c.h.b16 %v519
        %v1097 = vunpack.c.l.b16 %v520
        %v1098 = vunpack.c.h.b16 %v520
        %v1099 = vpack.c.b16 %v851, %v843
        %v1100 = vpack.c.b16 %v852, %v844
        %v1101 = vpack.c.b16 %v853, %v845
        %v1102 = vpack.c.b16 %v854, %v846
        %v1103 = vpack.c.b16 %v855, %v847
        %v1104 = vpack.c.b16 %v856, %v848
        %v1105 = vpack.c.b16 %v857, %v849
        %v1106 = vpack.c.b16 %v858, %v850
        %v1107 = vpack.c.b16 %v867, %v859
        %v1108 = vpack.c.b16 %v868, %v860
        %v1109 = vpack.c.b16 %v869, %v861
        %v1110 = vpack.c.b16 %v870, %v862
        %v1111 = vpack.c.b16 %v871, %v863
        %v1112 = vpack.c.b16 %v872, %v864
        %v1113 = vpack.c.b16 %v873, %v865
        %v1114 = vpack.c.b16 %v874, %v866
        %v1115 = vpack.c.b16 %v883, %v875
        %v1116 = vpack.c.b16 %v884, %v876
        %v1117 = vpack.c.b16 %v885, %v877
        %v1118 = vpack.c.b16 %v886, %v878
        %v1119 = vpack.c.b16 %v887, %v879
        %v1120 = vpack.c.b16 %v888, %v880
        %v1121 = vpack.c.b16 %v889, %v881
        %v1122 = vpack.c.b16 %v890, %v882
        %v1123 = vpack.c.b16 %v899, %v891
        %v1124 = vpack.c.b16 %v900, %v892
        %v1125 = vpack.c.b16 %v901, %v893
        %v1126 = vpack.c.b16 %v902, %v894
        %v1127 = vpack.c.b16 %v903, %v895
        %v1128 = vpack.c.b16 %v904, %v896
        %v1129 = vpack.c.b16 %v905, %v897
        %v1130 = vpack.c.b16 %v906, %v898
        %v1131 = vpack.c.b16 %v915, %v907
        %v1132 = vpack.c.b16 %v916, %v908
        %v1133 = vpack.c.b16 %v917, %v909
        %v1134 = vpack.c.b16 %v918, %v910
        %v1135 = vpack.c.b16 %v919, %v911
        %v1136 = vpack.c.b16 %v920, %v912
        %v1137 = vpack.c.b16 %v921, %v913
        %v1138 = vpack.c.b16 %v922, %v914
        %v1139 = vpack.c.b16 %v931, %v923
        %v1140 = vpack.c.b16 %v932, %v924
        %v1141 = vpack.c.b16 %v933, %v925
        %v1142 = vpack.c.b16 %v934, %v926
        %v1143 = vpack.c.b16 %v935, %v927
        %v1144 = vpack.c.b16 %v936, %v928
        %v1145 = vpack.c.b16 %v937, %v929
        %v1146 = vpack.c.b16 %v938, %v930
        %v1147 = vpack.c.b16 %v947, %v939
        %v1148 = vpack.c.b16 %v948, %v940
        %v1149 = vpack.c.b16 %v949, %v941
        %v1150 = vpack.c.b16 %v950, %v942
        %v1151 = vpack.c.b16 %v951, %v943
        %v1152 = vpack.c.b16 %v952, %v944
        %v1153 = vpack.c.b16 %v953, %v945
        %v1154 = vpack.c.b16 %v954, %v946
        %v1155 = vpack.c.b16 %v963, %v955
        %v1156 = vpack.c.b16 %v964, %v956
        %v1157 = vpack.c.b16 %v965, %v957
        %v1158 = vpack.c.b16 %v966, %v958
        %v1159 = vpack.c.b16 %v967, %v959
        %v1160 = vpack.c.b16 %v968, %v960
        %v1161 = vpack.c.b16 %v969, %v961
        %v1162 = vpack.c.b16 %v970, %v962
        %v1163 = vpack.c.b16 %v979, %v971
        %v1164 = vpack.c.b16 %v980, %v972
        %v1165 = vpack.c.b16 %v981, %v973
        %v1166 = vpack.c.b16 %v982, %v974
        %v1167 = vpack.c.b16 %v983, %v975
        %v1168 = vpack.c.b16 %v984, %v976
        %v1169 = vpack.c.b16 %v985, %v977
        %v1170 = vpack.c.b16 %v986, %v978
        %v1171 = vpack.c.b16 %v995, %v987
        %v1172 = vpack.c.b16 %v996, %v988
        %v1173 = vpack.c.b16 %v997, %v989
        %v1174 = vpack.c.b16 %v998, %v990
        %v1175 = vpack.c.b16 %v999, %v991
        %v1176 = vpack.c.b16 %v1000, %v992
        %v1177 = vpack.c.b16 %v1001, %v993
        %v1178 = vpack.c.b16 %v1002, %v994
        %v1179 = vpack.c.b16 %v1011, %v1003
        %v1180 = vpack.c.b16 %v1012, %v1004
        %v1181 = vpack.c.b16 %v1013, %v1005
        %v1182 = vpack.c.b16 %v1014, %v1006
        %v1183 = vpack.c.b16 %v1015, %v1007
        %v1184 = vpack.c.b16 %v1016, %v1008
        %v1185 = vpack.c.b16 %v1017, %v1009
        %v1186 = vpack.c.b16 %v1018, %v1010
        %v1187 = vpack.c.b16 %v1027, %v1019
        %v1188 = vpack.c.b16 %v1028, %v1020
        %v1189 = vpack.c.b16 %v1029, %v1021
        %v1190 = vpack.c.b16 %v1030, %v1022
        %v1191 = vpack.c.b16 %v1031, %v1023
        %v1192 = vpack.c.b16 %v1032, %v1024
        %v1193 = vpack.c.b16 %v1033, %v1025
        %v1194 = vpack.c.b16 %v1034, %v1026
        %v1195 = vpack.c.b16 %v1043, %v1035
        %v1196 = vpack.c.b16 %v1044, %v1036
        %v1197 = vpack.c.b16 %v1045, %v1037
        %v1198 = vpack.c.b16 %v1046, %v1038
        %v1199 = vpack.c.b16 %v1047, %v1039
        %v1200 = vpack.c.b16 %v1048, %v1040
        %v1201 = vpack.c.b16 %v1049, %v1041
        %v1202 = vpack.c.b16 %v1050, %v1042
        %v1203 = vpack.c.b16 %v1059, %v1051
        %v1204 = vpack.c.b16 %v1060, %v1052
        %v1205 = vpack.c.b16 %v1061, %v1053
        %v1206 = vpack.c.b16 %v1062, %v1054
        %v1207 = vpack.c.b16 %v1063, %v1055
        %v1208 = vpack.c.b16 %v1064, %v1056
        %v1209 = vpack.c.b16 %v1065, %v1057
        %v1210 = vpack.c.b16 %v1066, %v1058
        %v1211 = vpack.c.b16 %v1075, %v1067
        %v1212 = vpack.c.b16 %v1076, %v1068
        %v1213 = vpack.c.b16 %v1077, %v1069
        %v1214 = vpack.c.b16 %v1078, %v1070
        %v1215 = vpack.c.b16 %v1079, %v1071
        %v1216 = vpack.c.b16 %v1080, %v1072
        %v1217 = vpack.c.b16 %v1081, %v1073
        %v1218 = vpack.c.b16 %v1082, %v1074
        %v1219 = vpack.c.b16 %v1091, %v1083
        %v1220 = vpack.c.b16 %v1092, %v1084
        %v1221 = vpack.c.b16 %v1093, %v1085
        %v1222 = vpack.c.b16 %v1094, %v1086
        %v1223 = vpack.c.b16 %v1095, %v1087
        %v1224 = vpack.c.b16 %v1096, %v1088
        %v1225 = vpack.c.b16 %v1097, %v1089
        %v1226 = vpack.c.b16 %v1098, %v1090
        %1355 = vmatprep.subr.bf16.mxu0 %v1156
        %1356 = vmatpush1.bf16.msra.mxu0 %v1155
        %1357 = vmatprep.subr.bf16.mxu0 %v1148
        %1358 = vmatpush1.bf16.msra.mxu0 %v1147
        %1359 = vmatprep.subr.bf16.mxu0 %v1140
        %1360 = vmatpush1.bf16.msra.mxu0 %v1139
        %1361 = vmatprep.subr.bf16.mxu0 %v1132
        %1362 = vmatpush1.bf16.msra.mxu0 %v1131
        %1363 = vmatprep.subr.bf16.mxu0 %v1124
        %1364 = vmatpush1.bf16.msra.mxu0 %v1123
        %1365 = vmatprep.subr.bf16.mxu0 %v1116
        %1366 = vmatpush1.bf16.msra.mxu0 %v1115
        %1367 = vmatprep.subr.bf16.mxu0 %v1108
        %1368 = vmatpush1.bf16.msra.mxu0 %v1107
        %1369 = vmatprep.subr.bf16.mxu0 %v1100
        %1370 = vmatpush1.bf16.msra.mxu0 %v1099
        %1371 = vmatprep.subr.bf16.mxu0 %v1220
        %1372 = vmatpush2.bf16.msra.mxu0 %v1219
        %1373 = vmatprep.subr.bf16.mxu0 %v1212
        %1374 = vmatpush2.bf16.msra.mxu0 %v1211
        %1375 = vmatprep.subr.bf16.mxu0 %v1204
        %1376 = vmatpush2.bf16.msra.mxu0 %v1203
        %1377 = vmatprep.subr.bf16.mxu0 %v1196
        %1378 = vmatpush2.bf16.msra.mxu0 %v1195
        %1379 = vmatprep.subr.bf16.mxu0 %v1188
        %1380 = vmatpush2.bf16.msra.mxu0 %v1187
        %1381 = vmatprep.subr.bf16.mxu0 %v1180
        %1382 = vmatpush2.bf16.msra.mxu0 %v1179
        %1383 = vmatprep.subr.bf16.mxu0 %v1172
        %1384 = vmatpush2.bf16.msra.mxu0 %v1171
        %1385 = vmatprep.subr.bf16.mxu0 %v1164
        %1386 = vmatpush2.bf16.msra.mxu0 %v1163
        %1387 = vmatprep.mubr.bf16.mxu0 %v667
        %1388 = vmatmul.mubr.bf16.gmra.mxu0 %v666
        %v1389 = vpop.f32.mrf.mxu0
        %v1390 = vadd.f32 %v678, %v1389
        %v1391 = vpop.f32.mrf.mxu0
        %v1392 = vadd.f32 %v682, %v1391
        %v1393 = vpop.f32.mrf.mxu0
        %v1394 = vadd.f32 %v678, %v1393
        %v1395 = vpop.f32.mrf.mxu0
        %v1396 = vadd.f32 %v682, %v1395
        %1397 = vmatprep.mubr.bf16.mxu0 %v669
        %1398 = vmatmul.mubr.bf16.gmra.mxu0 %v668
        %v1399 = vpop.f32.mrf.mxu0
        %v1400 = vadd.f32 %v678, %v1399
        %v1401 = vpop.f32.mrf.mxu0
        %v1402 = vadd.f32 %v682, %v1401
        %v1403 = vpop.f32.mrf.mxu0
        %v1404 = vadd.f32 %v678, %v1403
        %v1405 = vpop.f32.mrf.mxu0
        %v1406 = vadd.f32 %v682, %v1405
        %1407 = vmatprep.mubr.bf16.mxu0 %v671
        %1408 = vmatmul.mubr.bf16.gmra.mxu0 %v670
        %v1409 = vpop.f32.mrf.mxu0
        %v1410 = vadd.f32 %v678, %v1409
        %v1411 = vpop.f32.mrf.mxu0
        %v1412 = vadd.f32 %v682, %v1411
        %v1413 = vpop.f32.mrf.mxu0
        %v1414 = vadd.f32 %v678, %v1413
        %v1415 = vpop.f32.mrf.mxu0
        %v1416 = vadd.f32 %v682, %v1415
        %1417 = vmatprep.mubr.bf16.mxu0 %v673
        %1418 = vmatmul.mubr.bf16.gmra.mxu0 %v672
        %v1419 = vpop.f32.mrf.mxu0
        %v1420 = vadd.f32 %v678, %v1419
        %v1421 = vpop.f32.mrf.mxu0
        %v1422 = vadd.f32 %v682, %v1421
        %v1423 = vpop.f32.mrf.mxu0
        %v1424 = vadd.f32 %v678, %v1423
        %v1425 = vpop.f32.mrf.mxu0
        %v1426 = vadd.f32 %v682, %v1425
        %1427 = vdwg.mxu0
        %1428 = vmatprep.subr.bf16.mxu0 %v1158
        %1429 = vmatpush1.bf16.msra.mxu0 %v1157
        %1430 = vmatprep.subr.bf16.mxu0 %v1150
        %1431 = vmatpush1.bf16.msra.mxu0 %v1149
        %1432 = vmatprep.subr.bf16.mxu0 %v1142
        %1433 = vmatpush1.bf16.msra.mxu0 %v1141
        %1434 = vmatprep.subr.bf16.mxu0 %v1134
        %1435 = vmatpush1.bf16.msra.mxu0 %v1133
        %1436 = vmatprep.subr.bf16.mxu0 %v1126
        %1437 = vmatpush1.bf16.msra.mxu0 %v1125
        %1438 = vmatprep.subr.bf16.mxu0 %v1118
        %1439 = vmatpush1.bf16.msra.mxu0 %v1117
        %1440 = vmatprep.subr.bf16.mxu0 %v1110
        %1441 = vmatpush1.bf16.msra.mxu0 %v1109
        %1442 = vmatprep.subr.bf16.mxu0 %v1102
        %1443 = vmatpush1.bf16.msra.mxu0 %v1101
        %1444 = vmatprep.subr.bf16.mxu0 %v1222
        %1445 = vmatpush2.bf16.msra.mxu0 %v1221
        %1446 = vmatprep.subr.bf16.mxu0 %v1214
        %1447 = vmatpush2.bf16.msra.mxu0 %v1213
        %1448 = vmatprep.subr.bf16.mxu0 %v1206
        %1449 = vmatpush2.bf16.msra.mxu0 %v1205
        %1450 = vmatprep.subr.bf16.mxu0 %v1198
        %1451 = vmatpush2.bf16.msra.mxu0 %v1197
        %1452 = vmatprep.subr.bf16.mxu0 %v1190
        %1453 = vmatpush2.bf16.msra.mxu0 %v1189
        %1454 = vmatprep.subr.bf16.mxu0 %v1182
        %1455 = vmatpush2.bf16.msra.mxu0 %v1181
        %1456 = vmatprep.subr.bf16.mxu0 %v1174
        %1457 = vmatpush2.bf16.msra.mxu0 %v1173
        %1458 = vmatprep.subr.bf16.mxu0 %v1166
        %1459 = vmatpush2.bf16.msra.mxu0 %v1165
        %1460 = vmatprep.mubr.bf16.mxu0 %v667
        %1461 = vmatmul.mubr.bf16.gmra.mxu0 %v666
        %v1462 = vpop.f32.mrf.mxu0
        %v1463 = vadd.f32 %v686, %v1462
        %v1464 = vpop.f32.mrf.mxu0
        %v1465 = vadd.f32 %v690, %v1464
        %v1466 = vpop.f32.mrf.mxu0
        %v1467 = vadd.f32 %v686, %v1466
        %v1468 = vpop.f32.mrf.mxu0
        %v1469 = vadd.f32 %v690, %v1468
        %1470 = vmatprep.mubr.bf16.mxu0 %v669
        %1471 = vmatmul.mubr.bf16.gmra.mxu0 %v668
        %v1472 = vpop.f32.mrf.mxu0
        %v1473 = vadd.f32 %v686, %v1472
        %v1474 = vpop.f32.mrf.mxu0
        %v1475 = vadd.f32 %v690, %v1474
        %v1476 = vpop.f32.mrf.mxu0
        %v1477 = vadd.f32 %v686, %v1476
        %v1478 = vpop.f32.mrf.mxu0
        %v1479 = vadd.f32 %v690, %v1478
        %1480 = vmatprep.mubr.bf16.mxu0 %v671
        %1481 = vmatmul.mubr.bf16.gmra.mxu0 %v670
        %v1482 = vpop.f32.mrf.mxu0
        %v1483 = vadd.f32 %v686, %v1482
        %v1484 = vpop.f32.mrf.mxu0
        %v1485 = vadd.f32 %v690, %v1484
        %v1486 = vpop.f32.mrf.mxu0
        %v1487 = vadd.f32 %v686, %v1486
        %v1488 = vpop.f32.mrf.mxu0
        %v1489 = vadd.f32 %v690, %v1488
        %1490 = vmatprep.mubr.bf16.mxu0 %v673
        %1491 = vmatmul.mubr.bf16.gmra.mxu0 %v672
        %v1492 = vpop.f32.mrf.mxu0
        %v1493 = vadd.f32 %v686, %v1492
        %v1494 = vpop.f32.mrf.mxu0
        %v1495 = vadd.f32 %v690, %v1494
        %v1496 = vpop.f32.mrf.mxu0
        %v1497 = vadd.f32 %v686, %v1496
        %v1498 = vpop.f32.mrf.mxu0
        %v1499 = vadd.f32 %v690, %v1498
        %1500 = vdwg.mxu0
        %1501 = vmatprep.subr.bf16.mxu0 %v1160
        %1502 = vmatpush1.bf16.msra.mxu0 %v1159
        %1503 = vmatprep.subr.bf16.mxu0 %v1152
        %1504 = vmatpush1.bf16.msra.mxu0 %v1151
        %1505 = vmatprep.subr.bf16.mxu0 %v1144
        %1506 = vmatpush1.bf16.msra.mxu0 %v1143
        %1507 = vmatprep.subr.bf16.mxu0 %v1136
        %1508 = vmatpush1.bf16.msra.mxu0 %v1135
        %1509 = vmatprep.subr.bf16.mxu0 %v1128
        %1510 = vmatpush1.bf16.msra.mxu0 %v1127
        %1511 = vmatprep.subr.bf16.mxu0 %v1120
        %1512 = vmatpush1.bf16.msra.mxu0 %v1119
        %1513 = vmatprep.subr.bf16.mxu0 %v1112
        %1514 = vmatpush1.bf16.msra.mxu0 %v1111
        %1515 = vmatprep.subr.bf16.mxu0 %v1104
        %1516 = vmatpush1.bf16.msra.mxu0 %v1103
        %1517 = vmatprep.subr.bf16.mxu0 %v1224
        %1518 = vmatpush2.bf16.msra.mxu0 %v1223
        %1519 = vmatprep.subr.bf16.mxu0 %v1216
        %1520 = vmatpush2.bf16.msra.mxu0 %v1215
        %1521 = vmatprep.subr.bf16.mxu0 %v1208
        %1522 = vmatpush2.bf16.msra.mxu0 %v1207
        %1523 = vmatprep.subr.bf16.mxu0 %v1200
        %1524 = vmatpush2.bf16.msra.mxu0 %v1199
        %1525 = vmatprep.subr.bf16.mxu0 %v1192
        %1526 = vmatpush2.bf16.msra.mxu0 %v1191
        %1527 = vmatprep.subr.bf16.mxu0 %v1184
        %1528 = vmatpush2.bf16.msra.mxu0 %v1183
        %1529 = vmatprep.subr.bf16.mxu0 %v1176
        %1530 = vmatpush2.bf16.msra.mxu0 %v1175
        %1531 = vmatprep.subr.bf16.mxu0 %v1168
        %1532 = vmatpush2.bf16.msra.mxu0 %v1167
        %1533 = vmatprep.mubr.bf16.mxu0 %v667
        %1534 = vmatmul.mubr.bf16.gmra.mxu0 %v666
        %v1535 = vpop.f32.mrf.mxu0
        %v1536 = vadd.f32 %v694, %v1535
        %v1537 = vpop.f32.mrf.mxu0
        %v1538 = vadd.f32 %v698, %v1537
        %v1539 = vpop.f32.mrf.mxu0
        %v1540 = vadd.f32 %v694, %v1539
        %v1541 = vpop.f32.mrf.mxu0
        %v1542 = vadd.f32 %v698, %v1541
        %1543 = vmatprep.mubr.bf16.mxu0 %v669
        %1544 = vmatmul.mubr.bf16.gmra.mxu0 %v668
        %v1545 = vpop.f32.mrf.mxu0
        %v1546 = vadd.f32 %v694, %v1545
        %v1547 = vpop.f32.mrf.mxu0
        %v1548 = vadd.f32 %v698, %v1547
        %v1549 = vpop.f32.mrf.mxu0
        %v1550 = vadd.f32 %v694, %v1549
        %v1551 = vpop.f32.mrf.mxu0
        %v1552 = vadd.f32 %v698, %v1551
        %1553 = vmatprep.mubr.bf16.mxu0 %v671
        %1554 = vmatmul.mubr.bf16.gmra.mxu0 %v670
        %v1555 = vpop.f32.mrf.mxu0
        %v1556 = vadd.f32 %v694, %v1555
        %v1557 = vpop.f32.mrf.mxu0
        %v1558 = vadd.f32 %v698, %v1557
        %v1559 = vpop.f32.mrf.mxu0
        %v1560 = vadd.f32 %v694, %v1559
        %v1561 = vpop.f32.mrf.mxu0
        %v1562 = vadd.f32 %v698, %v1561
        %1563 = vmatprep.mubr.bf16.mxu0 %v673
        %1564 = vmatmul.mubr.bf16.gmra.mxu0 %v672
        %v1565 = vpop.f32.mrf.mxu0
        %v1566 = vadd.f32 %v694, %v1565
        %v1567 = vpop.f32.mrf.mxu0
        %v1568 = vadd.f32 %v698, %v1567
        %v1569 = vpop.f32.mrf.mxu0
        %v1570 = vadd.f32 %v694, %v1569
        %v1571 = vpop.f32.mrf.mxu0
        %v1572 = vadd.f32 %v698, %v1571
        %1573 = vdwg.mxu0
        %1574 = vmatprep.subr.bf16.mxu0 %v1162
        %1575 = vmatpush1.bf16.msra.mxu0 %v1161
        %1576 = vmatprep.subr.bf16.mxu0 %v1154
        %1577 = vmatpush1.bf16.msra.mxu0 %v1153
        %1578 = vmatprep.subr.bf16.mxu0 %v1146
        %1579 = vmatpush1.bf16.msra.mxu0 %v1145
        %1580 = vmatprep.subr.bf16.mxu0 %v1138
        %1581 = vmatpush1.bf16.msra.mxu0 %v1137
        %1582 = vmatprep.subr.bf16.mxu0 %v1130
        %1583 = vmatpush1.bf16.msra.mxu0 %v1129
        %1584 = vmatprep.subr.bf16.mxu0 %v1122
        %1585 = vmatpush1.bf16.msra.mxu0 %v1121
        %1586 = vmatprep.subr.bf16.mxu0 %v1114
        %1587 = vmatpush1.bf16.msra.mxu0 %v1113
        %1588 = vmatprep.subr.bf16.mxu0 %v1106
        %1589 = vmatpush1.bf16.msra.mxu0 %v1105
        %1590 = vmatprep.subr.bf16.mxu0 %v1226
        %1591 = vmatpush2.bf16.msra.mxu0 %v1225
        %1592 = vmatprep.subr.bf16.mxu0 %v1218
        %1593 = vmatpush2.bf16.msra.mxu0 %v1217
        %1594 = vmatprep.subr.bf16.mxu0 %v1210
        %1595 = vmatpush2.bf16.msra.mxu0 %v1209
        %1596 = vmatprep.subr.bf16.mxu0 %v1202
        %1597 = vmatpush2.bf16.msra.mxu0 %v1201
        %1598 = vmatprep.subr.bf16.mxu0 %v1194
        %1599 = vmatpush2.bf16.msra.mxu0 %v1193
        %1600 = vmatprep.subr.bf16.mxu0 %v1186
        %1601 = vmatpush2.bf16.msra.mxu0 %v1185
        %1602 = vmatprep.subr.bf16.mxu0 %v1178
        %1603 = vmatpush2.bf16.msra.mxu0 %v1177
        %1604 = vmatprep.subr.bf16.mxu0 %v1170
        %1605 = vmatpush2.bf16.msra.mxu0 %v1169
        %1606 = vmatprep.mubr.bf16.mxu0 %v667
        %1607 = vmatmul.mubr.bf16.gmra.mxu0 %v666
        %v1608 = vpop.f32.mrf.mxu0
        %v1609 = vadd.f32 %v702, %v1608
        %v1610 = vpop.f32.mrf.mxu0
        %v1611 = vadd.f32 %v706, %v1610
        %v1612 = vpop.f32.mrf.mxu0
        %v1613 = vadd.f32 %v702, %v1612
        %v1614 = vpop.f32.mrf.mxu0
        %v1615 = vadd.f32 %v706, %v1614
        %1616 = vmatprep.mubr.bf16.mxu0 %v669
        %1617 = vmatmul.mubr.bf16.gmra.mxu0 %v668
        %v1618 = vpop.f32.mrf.mxu0
        %v1619 = vadd.f32 %v702, %v1618
        %v1620 = vpop.f32.mrf.mxu0
        %v1621 = vadd.f32 %v706, %v1620
        %v1622 = vpop.f32.mrf.mxu0
        %v1623 = vadd.f32 %v702, %v1622
        %v1624 = vpop.f32.mrf.mxu0
        %v1625 = vadd.f32 %v706, %v1624
        %1626 = vmatprep.mubr.bf16.mxu0 %v671
        %1627 = vmatmul.mubr.bf16.gmra.mxu0 %v670
        %v1628 = vpop.f32.mrf.mxu0
        %v1629 = vadd.f32 %v702, %v1628
        %v1630 = vpop.f32.mrf.mxu0
        %v1631 = vadd.f32 %v706, %v1630
        %v1632 = vpop.f32.mrf.mxu0
        %v1633 = vadd.f32 %v702, %v1632
        %v1634 = vpop.f32.mrf.mxu0
        %v1635 = vadd.f32 %v706, %v1634
        %1636 = vmatprep.mubr.bf16.mxu0 %v673
        %1637 = vmatmul.mubr.bf16.gmra.mxu0 %v672
        %v1638 = vpop.f32.mrf.mxu0
        %v1639 = vadd.f32 %v702, %v1638
        %v1640 = vpop.f32.mrf.mxu0
        %v1641 = vadd.f32 %v706, %v1640
        %v1642 = vpop.f32.mrf.mxu0
        %v1643 = vadd.f32 %v702, %v1642
        %v1644 = vpop.f32.mrf.mxu0
        %v1645 = vadd.f32 %v706, %v1644
        %1646 = vdwg.mxu0
        %1647 = vst [vmem:[#allocation2] sm:$0xff] %v1390
        %1648 = vst [vmem:[#allocation2 + $0x8] sm:$0xff] %v1392
        %1649 = vst [vmem:[#allocation2 + $0x10] sm:$0xff] %v1463
        %1650 = vst [vmem:[#allocation2 + $0x18] sm:$0xff] %v1465
        %1651 = vst [vmem:[#allocation2 + $0x20] sm:$0xff] %v1536
        %1652 = vst [vmem:[#allocation2 + $0x28] sm:$0xff] %v1538
        %1653 = vst [vmem:[#allocation2 + $0x30] sm:$0xff] %v1609
        %1654 = vst [vmem:[#allocation2 + $0x38] sm:$0xff] %v1611
        %1655 = vst [vmem:[#allocation2 + $0x40] sm:$0xff] %v1394
        %1656 = vst [vmem:[#allocation2 + $0x48] sm:$0xff] %v1396
        %1657 = vst [vmem:[#allocation2 + $0x50] sm:$0xff] %v1467
        %1658 = vst [vmem:[#allocation2 + $0x58] sm:$0xff] %v1469
        %1659 = vst [vmem:[#allocation2 + $0x60] sm:$0xff] %v1540
        %1660 = vst [vmem:[#allocation2 + $0x68] sm:$0xff] %v1542
        %1661 = vst [vmem:[#allocation2 + $0x70] sm:$0xff] %v1613
        %1662 = vst [vmem:[#allocation2 + $0x78] sm:$0xff] %v1615
        %1663 = vst [vmem:[#allocation2 + $0x80] sm:$0xff] %v1400
        %1664 = vst [vmem:[#allocation2 + $0x88] sm:$0xff] %v1402
        %1665 = vst [vmem:[#allocation2 + $0x90] sm:$0xff] %v1473
        %1666 = vst [vmem:[#allocation2 + $0x98] sm:$0xff] %v1475
        %1667 = vst [vmem:[#allocation2 + $0xa0] sm:$0xff] %v1546
        %1668 = vst [vmem:[#allocation2 + $0xa8] sm:$0xff] %v1548
        %1669 = vst [vmem:[#allocation2 + $0xb0] sm:$0xff] %v1619
        %1670 = vst [vmem:[#allocation2 + $0xb8] sm:$0xff] %v1621
        %1671 = vst [vmem:[#allocation2 + $0xc0] sm:$0xff] %v1404
        %1672 = vst [vmem:[#allocation2 + $0xc8] sm:$0xff] %v1406
        %1673 = vst [vmem:[#allocation2 + $0xd0] sm:$0xff] %v1477
        %1674 = vst [vmem:[#allocation2 + $0xd8] sm:$0xff] %v1479
        %1675 = vst [vmem:[#allocation2 + $0xe0] sm:$0xff] %v1550
        %1676 = vst [vmem:[#allocation2 + $0xe8] sm:$0xff] %v1552
        %1677 = vst [vmem:[#allocation2 + $0xf0] sm:$0xff] %v1623
        %1678 = vst [vmem:[#allocation2 + $0xf8] sm:$0xff] %v1625
        %1679 = vst [vmem:[#allocation2 + $0x100] sm:$0xff] %v1410
        %1680 = vst [vmem:[#allocation2 + $0x108] sm:$0xff] %v1412
        %1681 = vst [vmem:[#allocation2 + $0x110] sm:$0xff] %v1483
        %1682 = vst [vmem:[#allocation2 + $0x118] sm:$0xff] %v1485
        %1683 = vst [vmem:[#allocation2 + $0x120] sm:$0xff] %v1556
        %1684 = vst [vmem:[#allocation2 + $0x128] sm:$0xff] %v1558
        %1685 = vst [vmem:[#allocation2 + $0x130] sm:$0xff] %v1629
        %1686 = vst [vmem:[#allocation2 + $0x138] sm:$0xff] %v1631
        %1687 = vst [vmem:[#allocation2 + $0x140] sm:$0xff] %v1414
        %1688 = vst [vmem:[#allocation2 + $0x148] sm:$0xff] %v1416
        %1689 = vst [vmem:[#allocation2 + $0x150] sm:$0xff] %v1487
        %1690 = vst [vmem:[#allocation2 + $0x158] sm:$0xff] %v1489
        %1691 = vst [vmem:[#allocation2 + $0x160] sm:$0xff] %v1560
        %1692 = vst [vmem:[#allocation2 + $0x168] sm:$0xff] %v1562
        %1693 = vst [vmem:[#allocation2 + $0x170] sm:$0xff] %v1633
        %1694 = vst [vmem:[#allocation2 + $0x178] sm:$0xff] %v1635
        %1695 = vst [vmem:[#allocation2 + $0x180] sm:$0xff] %v1420
        %1696 = vst [vmem:[#allocation2 + $0x188] sm:$0xff] %v1422
        %1697 = vst [vmem:[#allocation2 + $0x190] sm:$0xff] %v1493
        %1698 = vst [vmem:[#allocation2 + $0x198] sm:$0xff] %v1495
        %1699 = vst [vmem:[#allocation2 + $0x1a0] sm:$0xff] %v1566
        %1700 = vst [vmem:[#allocation2 + $0x1a8] sm:$0xff] %v1568
        %1701 = vst [vmem:[#allocation2 + $0x1b0] sm:$0xff] %v1639
        %1702 = vst [vmem:[#allocation2 + $0x1b8] sm:$0xff] %v1641
        %1703 = vst [vmem:[#allocation2 + $0x1c0] sm:$0xff] %v1424
        %1704 = vst [vmem:[#allocation2 + $0x1c8] sm:$0xff] %v1426
        %1705 = vst [vmem:[#allocation2 + $0x1d0] sm:$0xff] %v1497
        %1706 = vst [vmem:[#allocation2 + $0x1d8] sm:$0xff] %v1499
        %1707 = vst [vmem:[#allocation2 + $0x1e0] sm:$0xff] %v1570
        %1708 = vst [vmem:[#allocation2 + $0x1e8] sm:$0xff] %v1572
        %1709 = vst [vmem:[#allocation2 + $0x1f0] sm:$0xff] %v1643
        %1710 = vst [vmem:[#allocation2 + $0x1f8] sm:$0xff] %v1645
        %v1711 = vld [vmem:[#allocation2] sm:$0xff]
        %v1712 = vld [vmem:[#allocation2 + $0x8] sm:$0xff]
        %v1713 = vld [vmem:[#allocation2 + $0x20] sm:$0xff]
        %v1714 = vld [vmem:[#allocation2 + $0x28] sm:$0xff]
        %v1715 = vld [vmem:[#allocation2 + $0x30] sm:$0xff]
        %v1716 = vld [vmem:[#allocation2 + $0x38] sm:$0xff]
        %v1717 = vxor.u32 %v1711, 2147483648
        %v1718 = vxor.u32 %v1712, 2147483648
        %v1719 = vmul.f32 %v1717, 1.442695
        %v1720 = vpow.pop %v1719
        %v1721 = vmul.f32 %v1718, 1.442695
        %v1722 = vpow.pop %v1721
        %v1723 = vadd.f32 %v1720, 1.0
        %v1724 = vadd.f32 %v1722, 1.0
        %v1725 = vrcp.pop %v1723
        %v1726 = vmul.f32 1.0, %v1725
        %v1727 = vrcp.pop %v1724
        %v1728 = vmul.f32 1.0, %v1727
        %v1729 = vtanh.pop %v1713
        %v1730 = vtanh.pop %v1714
        %v1731 = vxor.u32 %v1715, 2147483648
        %v1732 = vxor.u32 %v1716, 2147483648
        %v1733 = vmul.f32 %v1731, 1.442695
        %v1734 = vpow.pop %v1733
        %v1735 = vmul.f32 %v1732, 1.442695
        %v1736 = vpow.pop %v1735
        %v1737 = vadd.f32 %v1734, 1.0
        %v1738 = vadd.f32 %v1736, 1.0
        %v1739 = vrcp.pop %v1737
        %v1740 = vmul.f32 1.0, %v1739
        %v1741 = vrcp.pop %v1738
        %v1742 = vmul.f32 1.0, %v1741
        %v1743 = vmul.f32 %v1726, %v1729
        %v1744 = vmul.f32 %v1728, %v1730
        %v1745 = vtanh.pop %v1743
        %v1746 = vtanh.pop %v1744
        %v1747 = vmul.f32 %v1740, %v1745
        %v1748 = vmul.f32 %v1742, %v1746
        %1749 = vst [vmem:[%s4] sm:$0xff] %v1747
        %1750 = vst [vmem:[%s4 + $0x8] sm:$0xff] %v1748
        %s1751 = scalar_lea.vmem [#allocation2], 64
        %v1752 = vld [vmem:[%s1751] sm:$0xff]
        %v1753 = vld [vmem:[%s1751 + $0x8] sm:$0xff]
        %v1754 = vld [vmem:[%s1751 + $0x10] sm:$0xff]
        %v1755 = vld [vmem:[%s1751 + $0x18] sm:$0xff]
        %v1756 = vld [vmem:[%s1751 + $0x20] sm:$0xff]
        %v1757 = vld [vmem:[%s1751 + $0x28] sm:$0xff]
        %v1758 = vld [vmem:[%s1751 + $0x30] sm:$0xff]
        %v1759 = vld [vmem:[%s1751 + $0x38] sm:$0xff]
        %v1760 = vpack.c.bf16 %v1747, %v1747
        %v1761 = vpack.c.bf16 %v1748, %v1748
        %v1890 = vunpack.c.l.b16 %v521
        %v1891 = vunpack.c.h.b16 %v521
        %v1892 = vunpack.c.l.b16 %v522
        %v1893 = vunpack.c.h.b16 %v522
        %v1894 = vunpack.c.l.b16 %v523
        %v1895 = vunpack.c.h.b16 %v523
        %v1896 = vunpack.c.l.b16 %v524
        %v1897 = vunpack.c.h.b16 %v524
        %v1898 = vunpack.c.l.b16 %v525
        %v1899 = vunpack.c.h.b16 %v525
        %v1900 = vunpack.c.l.b16 %v526
        %v1901 = vunpack.c.h.b16 %v526
        %v1902 = vunpack.c.l.b16 %v527
        %v1903 = vunpack.c.h.b16 %v527
        %v1904 = vunpack.c.l.b16 %v528
        %v1905 = vunpack.c.h.b16 %v528
        %v1906 = vunpack.c.l.b16 %v529
        %v1907 = vunpack.c.h.b16 %v529
        %v1908 = vunpack.c.l.b16 %v530
        %v1909 = vunpack.c.h.b16 %v530
        %v1910 = vunpack.c.l.b16 %v531
        %v1911 = vunpack.c.h.b16 %v531
        %v1912 = vunpack.c.l.b16 %v532
        %v1913 = vunpack.c.h.b16 %v532
        %v1914 = vunpack.c.l.b16 %v533
        %v1915 = vunpack.c.h.b16 %v533
        %v1916 = vunpack.c.l.b16 %v534
        %v1917 = vunpack.c.h.b16 %v534
        %v1918 = vunpack.c.l.b16 %v535
        %v1919 = vunpack.c.h.b16 %v535
        %v1920 = vunpack.c.l.b16 %v536
        %v1921 = vunpack.c.h.b16 %v536
        %v1922 = vunpack.c.l.b16 %v537
        %v1923 = vunpack.c.h.b16 %v537
        %v1924 = vunpack.c.l.b16 %v538
        %v1925 = vunpack.c.h.b16 %v538
        %v1926 = vunpack.c.l.b16 %v539
        %v1927 = vunpack.c.h.b16 %v539
        %v1928 = vunpack.c.l.b16 %v540
        %v1929 = vunpack.c.h.b16 %v540
        %v1930 = vunpack.c.l.b16 %v541
        %v1931 = vunpack.c.h.b16 %v541
        %v1932 = vunpack.c.l.b16 %v542
        %v1933 = vunpack.c.h.b16 %v542
        %v1934 = vunpack.c.l.b16 %v543
        %v1935 = vunpack.c.h.b16 %v543
        %v1936 = vunpack.c.l.b16 %v544
        %v1937 = vunpack.c.h.b16 %v544
        %v1938 = vunpack.c.l.b16 %v545
        %v1939 = vunpack.c.h.b16 %v545
        %v1940 = vunpack.c.l.b16 %v546
        %v1941 = vunpack.c.h.b16 %v546
        %v1942 = vunpack.c.l.b16 %v547
        %v1943 = vunpack.c.h.b16 %v547
        %v1944 = vunpack.c.l.b16 %v548
        %v1945 = vunpack.c.h.b16 %v548
        %v1946 = vunpack.c.l.b16 %v549
        %v1947 = vunpack.c.h.b16 %v549
        %v1948 = vunpack.c.l.b16 %v550
        %v1949 = vunpack.c.h.b16 %v550
        %v1950 = vunpack.c.l.b16 %v551
        %v1951 = vunpack.c.h.b16 %v551
        %v1952 = vunpack.c.l.b16 %v552
        %v1953 = vunpack.c.h.b16 %v552
        %v1954 = vunpack.c.l.b16 %v553
        %v1955 = vunpack.c.h.b16 %v553
        %v1956 = vunpack.c.l.b16 %v554
        %v1957 = vunpack.c.h.b16 %v554
        %v1958 = vunpack.c.l.b16 %v555
        %v1959 = vunpack.c.h.b16 %v555
        %v1960 = vunpack.c.l.b16 %v556
        %v1961 = vunpack.c.h.b16 %v556
        %v1962 = vunpack.c.l.b16 %v557
        %v1963 = vunpack.c.h.b16 %v557
        %v1964 = vunpack.c.l.b16 %v558
        %v1965 = vunpack.c.h.b16 %v558
        %v1966 = vunpack.c.l.b16 %v559
        %v1967 = vunpack.c.h.b16 %v559
        %v1968 = vunpack.c.l.b16 %v560
        %v1969 = vunpack.c.h.b16 %v560
        %v1970 = vunpack.c.l.b16 %v561
        %v1971 = vunpack.c.h.b16 %v561
        %v1972 = vunpack.c.l.b16 %v562
        %v1973 = vunpack.c.h.b16 %v562
        %v1974 = vunpack.c.l.b16 %v563
        %v1975 = vunpack.c.h.b16 %v563
        %v1976 = vunpack.c.l.b16 %v564
        %v1977 = vunpack.c.h.b16 %v564
        %v1978 = vunpack.c.l.b16 %v565
        %v1979 = vunpack.c.h.b16 %v565
        %v1980 = vunpack.c.l.b16 %v566
        %v1981 = vunpack.c.h.b16 %v566
        %v1982 = vunpack.c.l.b16 %v567
        %v1983 = vunpack.c.h.b16 %v567
        %v1984 = vunpack.c.l.b16 %v568
        %v1985 = vunpack.c.h.b16 %v568
        %v1986 = vunpack.c.l.b16 %v569
        %v1987 = vunpack.c.h.b16 %v569
        %v1988 = vunpack.c.l.b16 %v570
        %v1989 = vunpack.c.h.b16 %v570
        %v1990 = vunpack.c.l.b16 %v571
        %v1991 = vunpack.c.h.b16 %v571
        %v1992 = vunpack.c.l.b16 %v572
        %v1993 = vunpack.c.h.b16 %v572
        %v1994 = vunpack.c.l.b16 %v573
        %v1995 = vunpack.c.h.b16 %v573
        %v1996 = vunpack.c.l.b16 %v574
        %v1997 = vunpack.c.h.b16 %v574
        %v1998 = vunpack.c.l.b16 %v575
        %v1999 = vunpack.c.h.b16 %v575
        %v2000 = vunpack.c.l.b16 %v576
        %v2001 = vunpack.c.h.b16 %v576
        %v2002 = vunpack.c.l.b16 %v577
        %v2003 = vunpack.c.h.b16 %v577
        %v2004 = vunpack.c.l.b16 %v578
        %v2005 = vunpack.c.h.b16 %v578
        %v2006 = vunpack.c.l.b16 %v579
        %v2007 = vunpack.c.h.b16 %v579
        %v2008 = vunpack.c.l.b16 %v580
        %v2009 = vunpack.c.h.b16 %v580
        %v2010 = vunpack.c.l.b16 %v581
        %v2011 = vunpack.c.h.b16 %v581
        %v2012 = vunpack.c.l.b16 %v582
        %v2013 = vunpack.c.h.b16 %v582
        %v2014 = vunpack.c.l.b16 %v583
        %v2015 = vunpack.c.h.b16 %v583
        %v2016 = vunpack.c.l.b16 %v584
        %v2017 = vunpack.c.h.b16 %v584
        %v2018 = vunpack.c.l.b16 %v585
        %v2019 = vunpack.c.h.b16 %v585
        %v2020 = vunpack.c.l.b16 %v586
        %v2021 = vunpack.c.h.b16 %v586
        %v2022 = vunpack.c.l.b16 %v587
        %v2023 = vunpack.c.h.b16 %v587
        %v2024 = vunpack.c.l.b16 %v588
        %v2025 = vunpack.c.h.b16 %v588
        %v2026 = vunpack.c.l.b16 %v589
        %v2027 = vunpack.c.h.b16 %v589
        %v2028 = vunpack.c.l.b16 %v590
        %v2029 = vunpack.c.h.b16 %v590
        %v2030 = vunpack.c.l.b16 %v591
        %v2031 = vunpack.c.h.b16 %v591
        %v2032 = vunpack.c.l.b16 %v592
        %v2033 = vunpack.c.h.b16 %v592
        %v2034 = vunpack.c.l.b16 %v593
        %v2035 = vunpack.c.h.b16 %v593
        %v2036 = vunpack.c.l.b16 %v594
        %v2037 = vunpack.c.h.b16 %v594
        %v2038 = vunpack.c.l.b16 %v595
        %v2039 = vunpack.c.h.b16 %v595
        %v2040 = vunpack.c.l.b16 %v596
        %v2041 = vunpack.c.h.b16 %v596
        %v2042 = vunpack.c.l.b16 %v597
        %v2043 = vunpack.c.h.b16 %v597
        %v2044 = vunpack.c.l.b16 %v598
        %v2045 = vunpack.c.h.b16 %v598
        %v2046 = vunpack.c.l.b16 %v599
        %v2047 = vunpack.c.h.b16 %v599
        %v2048 = vunpack.c.l.b16 %v600
        %v2049 = vunpack.c.h.b16 %v600
        %v2050 = vunpack.c.l.b16 %v601
        %v2051 = vunpack.c.h.b16 %v601
        %v2052 = vunpack.c.l.b16 %v602
        %v2053 = vunpack.c.h.b16 %v602
        %v2054 = vunpack.c.l.b16 %v603
        %v2055 = vunpack.c.h.b16 %v603
        %v2056 = vunpack.c.l.b16 %v604
        %v2057 = vunpack.c.h.b16 %v604
        %v2058 = vunpack.c.l.b16 %v605
        %v2059 = vunpack.c.h.b16 %v605
        %v2060 = vunpack.c.l.b16 %v606
        %v2061 = vunpack.c.h.b16 %v606
        %v2062 = vunpack.c.l.b16 %v607
        %v2063 = vunpack.c.h.b16 %v607
        %v2064 = vunpack.c.l.b16 %v608
        %v2065 = vunpack.c.h.b16 %v608
        %v2066 = vunpack.c.l.b16 %v609
        %v2067 = vunpack.c.h.b16 %v609
        %v2068 = vunpack.c.l.b16 %v610
        %v2069 = vunpack.c.h.b16 %v610
        %v2070 = vunpack.c.l.b16 %v611
        %v2071 = vunpack.c.h.b16 %v611
        %v2072 = vunpack.c.l.b16 %v612
        %v2073 = vunpack.c.h.b16 %v612
        %v2074 = vunpack.c.l.b16 %v613
        %v2075 = vunpack.c.h.b16 %v613
        %v2076 = vunpack.c.l.b16 %v614
        %v2077 = vunpack.c.h.b16 %v614
        %v2078 = vunpack.c.l.b16 %v615
        %v2079 = vunpack.c.h.b16 %v615
        %v2080 = vunpack.c.l.b16 %v616
        %v2081 = vunpack.c.h.b16 %v616
        %v2082 = vunpack.c.l.b16 %v617
        %v2083 = vunpack.c.h.b16 %v617
        %v2084 = vunpack.c.l.b16 %v618
        %v2085 = vunpack.c.h.b16 %v618
        %v2086 = vunpack.c.l.b16 %v619
        %v2087 = vunpack.c.h.b16 %v619
        %v2088 = vunpack.c.l.b16 %v620
        %v2089 = vunpack.c.h.b16 %v620
        %v2090 = vunpack.c.l.b16 %v621
        %v2091 = vunpack.c.h.b16 %v621
        %v2092 = vunpack.c.l.b16 %v622
        %v2093 = vunpack.c.h.b16 %v622
        %v2094 = vunpack.c.l.b16 %v623
        %v2095 = vunpack.c.h.b16 %v623
        %v2096 = vunpack.c.l.b16 %v624
        %v2097 = vunpack.c.h.b16 %v624
        %v2098 = vunpack.c.l.b16 %v625
        %v2099 = vunpack.c.h.b16 %v625
        %v2100 = vunpack.c.l.b16 %v626
        %v2101 = vunpack.c.h.b16 %v626
        %v2102 = vunpack.c.l.b16 %v627
        %v2103 = vunpack.c.h.b16 %v627
        %v2104 = vunpack.c.l.b16 %v628
        %v2105 = vunpack.c.h.b16 %v628
        %v2106 = vunpack.c.l.b16 %v629
        %v2107 = vunpack.c.h.b16 %v629
        %v2108 = vunpack.c.l.b16 %v630
        %v2109 = vunpack.c.h.b16 %v630
        %v2110 = vunpack.c.l.b16 %v631
        %v2111 = vunpack.c.h.b16 %v631
        %v2112 = vunpack.c.l.b16 %v632
        %v2113 = vunpack.c.h.b16 %v632
        %v2114 = vunpack.c.l.b16 %v633
        %v2115 = vunpack.c.h.b16 %v633
        %v2116 = vunpack.c.l.b16 %v634
        %v2117 = vunpack.c.h.b16 %v634
        %v2118 = vunpack.c.l.b16 %v635
        %v2119 = vunpack.c.h.b16 %v635
        %v2120 = vunpack.c.l.b16 %v636
        %v2121 = vunpack.c.h.b16 %v636
        %v2122 = vunpack.c.l.b16 %v637
        %v2123 = vunpack.c.h.b16 %v637
        %v2124 = vunpack.c.l.b16 %v638
        %v2125 = vunpack.c.h.b16 %v638
        %v2126 = vunpack.c.l.b16 %v639
        %v2127 = vunpack.c.h.b16 %v639
        %v2128 = vunpack.c.l.b16 %v640
        %v2129 = vunpack.c.h.b16 %v640
        %v2130 = vunpack.c.l.b16 %v641
        %v2131 = vunpack.c.h.b16 %v641
        %v2132 = vunpack.c.l.b16 %v642
        %v2133 = vunpack.c.h.b16 %v642
        %v2134 = vunpack.c.l.b16 %v643
        %v2135 = vunpack.c.h.b16 %v643
        %v2136 = vunpack.c.l.b16 %v644
        %v2137 = vunpack.c.h.b16 %v644
        %v2138 = vunpack.c.l.b16 %v645
        %v2139 = vunpack.c.h.b16 %v645
        %v2140 = vunpack.c.l.b16 %v646
        %v2141 = vunpack.c.h.b16 %v646
        %v2142 = vunpack.c.l.b16 %v647
        %v2143 = vunpack.c.h.b16 %v647
        %v2144 = vunpack.c.l.b16 %v648
        %v2145 = vunpack.c.h.b16 %v648
        %v2146 = vpack.c.b16 %v1898, %v1890
        %v2147 = vpack.c.b16 %v1899, %v1891
        %v2148 = vpack.c.b16 %v1900, %v1892
        %v2149 = vpack.c.b16 %v1901, %v1893
        %v2150 = vpack.c.b16 %v1902, %v1894
        %v2151 = vpack.c.b16 %v1903, %v1895
        %v2152 = vpack.c.b16 %v1904, %v1896
        %v2153 = vpack.c.b16 %v1905, %v1897
        %v2154 = vpack.c.b16 %v1914, %v1906
        %v2155 = vpack.c.b16 %v1915, %v1907
        %v2156 = vpack.c.b16 %v1916, %v1908
        %v2157 = vpack.c.b16 %v1917, %v1909
        %v2158 = vpack.c.b16 %v1918, %v1910
        %v2159 = vpack.c.b16 %v1919, %v1911
        %v2160 = vpack.c.b16 %v1920, %v1912
        %v2161 = vpack.c.b16 %v1921, %v1913
        %v2162 = vpack.c.b16 %v1930, %v1922
        %v2163 = vpack.c.b16 %v1931, %v1923
        %v2164 = vpack.c.b16 %v1932, %v1924
        %v2165 = vpack.c.b16 %v1933, %v1925
        %v2166 = vpack.c.b16 %v1934, %v1926
        %v2167 = vpack.c.b16 %v1935, %v1927
        %v2168 = vpack.c.b16 %v1936, %v1928
        %v2169 = vpack.c.b16 %v1937, %v1929
        %v2170 = vpack.c.b16 %v1946, %v1938
        %v2171 = vpack.c.b16 %v1947, %v1939
        %v2172 = vpack.c.b16 %v1948, %v1940
        %v2173 = vpack.c.b16 %v1949, %v1941
        %v2174 = vpack.c.b16 %v1950, %v1942
        %v2175 = vpack.c.b16 %v1951, %v1943
        %v2176 = vpack.c.b16 %v1952, %v1944
        %v2177 = vpack.c.b16 %v1953, %v1945
        %v2178 = vpack.c.b16 %v1962, %v1954
        %v2179 = vpack.c.b16 %v1963, %v1955
        %v2180 = vpack.c.b16 %v1964, %v1956
        %v2181 = vpack.c.b16 %v1965, %v1957
        %v2182 = vpack.c.b16 %v1966, %v1958
        %v2183 = vpack.c.b16 %v1967, %v1959
        %v2184 = vpack.c.b16 %v1968, %v1960
        %v2185 = vpack.c.b16 %v1969, %v1961
        %v2186 = vpack.c.b16 %v1978, %v1970
        %v2187 = vpack.c.b16 %v1979, %v1971
        %v2188 = vpack.c.b16 %v1980, %v1972
        %v2189 = vpack.c.b16 %v1981, %v1973
        %v2190 = vpack.c.b16 %v1982, %v1974
        %v2191 = vpack.c.b16 %v1983, %v1975
        %v2192 = vpack.c.b16 %v1984, %v1976
        %v2193 = vpack.c.b16 %v1985, %v1977
        %v2194 = vpack.c.b16 %v1994, %v1986
        %v2195 = vpack.c.b16 %v1995, %v1987
        %v2196 = vpack.c.b16 %v1996, %v1988
        %v2197 = vpack.c.b16 %v1997, %v1989
        %v2198 = vpack.c.b16 %v1998, %v1990
        %v2199 = vpack.c.b16 %v1999, %v1991
        %v2200 = vpack.c.b16 %v2000, %v1992
        %v2201 = vpack.c.b16 %v2001, %v1993
        %v2202 = vpack.c.b16 %v2010, %v2002
        %v2203 = vpack.c.b16 %v2011, %v2003
        %v2204 = vpack.c.b16 %v2012, %v2004
        %v2205 = vpack.c.b16 %v2013, %v2005
        %v2206 = vpack.c.b16 %v2014, %v2006
        %v2207 = vpack.c.b16 %v2015, %v2007
        %v2208 = vpack.c.b16 %v2016, %v2008
        %v2209 = vpack.c.b16 %v2017, %v2009
        %v2210 = vpack.c.b16 %v2026, %v2018
        %v2211 = vpack.c.b16 %v2027, %v2019
        %v2212 = vpack.c.b16 %v2028, %v2020
        %v2213 = vpack.c.b16 %v2029, %v2021
        %v2214 = vpack.c.b16 %v2030, %v2022
        %v2215 = vpack.c.b16 %v2031, %v2023
        %v2216 = vpack.c.b16 %v2032, %v2024
        %v2217 = vpack.c.b16 %v2033, %v2025
        %v2218 = vpack.c.b16 %v2042, %v2034
        %v2219 = vpack.c.b16 %v2043, %v2035
        %v2220 = vpack.c.b16 %v2044, %v2036
        %v2221 = vpack.c.b16 %v2045, %v2037
        %v2222 = vpack.c.b16 %v2046, %v2038
        %v2223 = vpack.c.b16 %v2047, %v2039
        %v2224 = vpack.c.b16 %v2048, %v2040
        %v2225 = vpack.c.b16 %v2049, %v2041
        %v2226 = vpack.c.b16 %v2058, %v2050
        %v2227 = vpack.c.b16 %v2059, %v2051
        %v2228 = vpack.c.b16 %v2060, %v2052
        %v2229 = vpack.c.b16 %v2061, %v2053
        %v2230 = vpack.c.b16 %v2062, %v2054
        %v2231 = vpack.c.b16 %v2063, %v2055
        %v2232 = vpack.c.b16 %v2064, %v2056
        %v2233 = vpack.c.b16 %v2065, %v2057
        %v2234 = vpack.c.b16 %v2074, %v2066
        %v2235 = vpack.c.b16 %v2075, %v2067
        %v2236 = vpack.c.b16 %v2076, %v2068
        %v2237 = vpack.c.b16 %v2077, %v2069
        %v2238 = vpack.c.b16 %v2078, %v2070
        %v2239 = vpack.c.b16 %v2079, %v2071
        %v2240 = vpack.c.b16 %v2080, %v2072
        %v2241 = vpack.c.b16 %v2081, %v2073
        %v2242 = vpack.c.b16 %v2090, %v2082
        %v2243 = vpack.c.b16 %v2091, %v2083
        %v2244 = vpack.c.b16 %v2092, %v2084
        %v2245 = vpack.c.b16 %v2093, %v2085
        %v2246 = vpack.c.b16 %v2094, %v2086
        %v2247 = vpack.c.b16 %v2095, %v2087
        %v2248 = vpack.c.b16 %v2096, %v2088
        %v2249 = vpack.c.b16 %v2097, %v2089
        %v2250 = vpack.c.b16 %v2106, %v2098
        %v2251 = vpack.c.b16 %v2107, %v2099
        %v2252 = vpack.c.b16 %v2108, %v2100
        %v2253 = vpack.c.b16 %v2109, %v2101
        %v2254 = vpack.c.b16 %v2110, %v2102
        %v2255 = vpack.c.b16 %v2111, %v2103
        %v2256 = vpack.c.b16 %v2112, %v2104
        %v2257 = vpack.c.b16 %v2113, %v2105
        %v2258 = vpack.c.b16 %v2122, %v2114
        %v2259 = vpack.c.b16 %v2123, %v2115
        %v2260 = vpack.c.b16 %v2124, %v2116
        %v2261 = vpack.c.b16 %v2125, %v2117
        %v2262 = vpack.c.b16 %v2126, %v2118
        %v2263 = vpack.c.b16 %v2127, %v2119
        %v2264 = vpack.c.b16 %v2128, %v2120
        %v2265 = vpack.c.b16 %v2129, %v2121
        %v2266 = vpack.c.b16 %v2138, %v2130
        %v2267 = vpack.c.b16 %v2139, %v2131
        %v2268 = vpack.c.b16 %v2140, %v2132
        %v2269 = vpack.c.b16 %v2141, %v2133
        %v2270 = vpack.c.b16 %v2142, %v2134
        %v2271 = vpack.c.b16 %v2143, %v2135
        %v2272 = vpack.c.b16 %v2144, %v2136
        %v2273 = vpack.c.b16 %v2145, %v2137
        %2402 = vmatprep.subr.bf16.mxu0 %v2203
        %2403 = vmatpush1.bf16.msra.mxu0 %v2202
        %2404 = vmatprep.subr.bf16.mxu0 %v2195
        %2405 = vmatpush1.bf16.msra.mxu0 %v2194
        %2406 = vmatprep.subr.bf16.mxu0 %v2187
        %2407 = vmatpush1.bf16.msra.mxu0 %v2186
        %2408 = vmatprep.subr.bf16.mxu0 %v2179
        %2409 = vmatpush1.bf16.msra.mxu0 %v2178
        %2410 = vmatprep.subr.bf16.mxu0 %v2171
        %2411 = vmatpush1.bf16.msra.mxu0 %v2170
        %2412 = vmatprep.subr.bf16.mxu0 %v2163
        %2413 = vmatpush1.bf16.msra.mxu0 %v2162
        %2414 = vmatprep.subr.bf16.mxu0 %v2155
        %2415 = vmatpush1.bf16.msra.mxu0 %v2154
        %2416 = vmatprep.subr.bf16.mxu0 %v2147
        %2417 = vmatpush1.bf16.msra.mxu0 %v2146
        %2418 = vmatprep.subr.bf16.mxu0 %v2267
        %2419 = vmatpush2.bf16.msra.mxu0 %v2266
        %2420 = vmatprep.subr.bf16.mxu0 %v2259
        %2421 = vmatpush2.bf16.msra.mxu0 %v2258
        %2422 = vmatprep.subr.bf16.mxu0 %v2251
        %2423 = vmatpush2.bf16.msra.mxu0 %v2250
        %2424 = vmatprep.subr.bf16.mxu0 %v2243
        %2425 = vmatpush2.bf16.msra.mxu0 %v2242
        %2426 = vmatprep.subr.bf16.mxu0 %v2235
        %2427 = vmatpush2.bf16.msra.mxu0 %v2234
        %2428 = vmatprep.subr.bf16.mxu0 %v2227
        %2429 = vmatpush2.bf16.msra.mxu0 %v2226
        %2430 = vmatprep.subr.bf16.mxu0 %v2219
        %2431 = vmatpush2.bf16.msra.mxu0 %v2218
        %2432 = vmatprep.subr.bf16.mxu0 %v2211
        %2433 = vmatpush2.bf16.msra.mxu0 %v2210
        %2434 = vmatprep.mubr.bf16.mxu0 %v1761
        %2435 = vmatmul.mubr.bf16.gmra.mxu0 %v1760
        %v2436 = vpop.f32.mrf.mxu0
        %v2437 = vadd.f32 0.0, %v2436
        %v2438 = vpop.f32.mrf.mxu0
        %v2439 = vadd.f32 0.0, %v2438
        %v2440 = vpop.f32.mrf.mxu0
        %v2441 = vpop.f32.mrf.mxu0
        %2442 = vdwg.mxu0
        %2443 = vmatprep.subr.bf16.mxu0 %v2205
        %2444 = vmatpush1.bf16.msra.mxu0 %v2204
        %2445 = vmatprep.subr.bf16.mxu0 %v2197
        %2446 = vmatpush1.bf16.msra.mxu0 %v2196
        %2447 = vmatprep.subr.bf16.mxu0 %v2189
        %2448 = vmatpush1.bf16.msra.mxu0 %v2188
        %2449 = vmatprep.subr.bf16.mxu0 %v2181
        %2450 = vmatpush1.bf16.msra.mxu0 %v2180
        %2451 = vmatprep.subr.bf16.mxu0 %v2173
        %2452 = vmatpush1.bf16.msra.mxu0 %v2172
        %2453 = vmatprep.subr.bf16.mxu0 %v2165
        %2454 = vmatpush1.bf16.msra.mxu0 %v2164
        %2455 = vmatprep.subr.bf16.mxu0 %v2157
        %2456 = vmatpush1.bf16.msra.mxu0 %v2156
        %2457 = vmatprep.subr.bf16.mxu0 %v2149
        %2458 = vmatpush1.bf16.msra.mxu0 %v2148
        %2459 = vmatprep.subr.bf16.mxu0 %v2269
        %2460 = vmatpush2.bf16.msra.mxu0 %v2268
        %2461 = vmatprep.subr.bf16.mxu0 %v2261
        %2462 = vmatpush2.bf16.msra.mxu0 %v2260
        %2463 = vmatprep.subr.bf16.mxu0 %v2253
        %2464 = vmatpush2.bf16.msra.mxu0 %v2252
        %2465 = vmatprep.subr.bf16.mxu0 %v2245
        %2466 = vmatpush2.bf16.msra.mxu0 %v2244
        %2467 = vmatprep.subr.bf16.mxu0 %v2237
        %2468 = vmatpush2.bf16.msra.mxu0 %v2236
        %2469 = vmatprep.subr.bf16.mxu0 %v2229
        %2470 = vmatpush2.bf16.msra.mxu0 %v2228
        %2471 = vmatprep.subr.bf16.mxu0 %v2221
        %2472 = vmatpush2.bf16.msra.mxu0 %v2220
        %2473 = vmatprep.subr.bf16.mxu0 %v2213
        %2474 = vmatpush2.bf16.msra.mxu0 %v2212
        %2475 = vmatprep.mubr.bf16.mxu0 %v1761
        %2476 = vmatmul.mubr.bf16.gmra.mxu0 %v1760
        %v2477 = vpop.f32.mrf.mxu0
        %v2478 = vadd.f32 0.0, %v2477
        %v2479 = vpop.f32.mrf.mxu0
        %v2480 = vadd.f32 0.0, %v2479
        %v2481 = vpop.f32.mrf.mxu0
        %v2482 = vpop.f32.mrf.mxu0
        %2483 = vdwg.mxu0
        %2484 = vmatprep.subr.bf16.mxu0 %v2207
        %2485 = vmatpush1.bf16.msra.mxu0 %v2206
        %2486 = vmatprep.subr.bf16.mxu0 %v2199
        %2487 = vmatpush1.bf16.msra.mxu0 %v2198
        %2488 = vmatprep.subr.bf16.mxu0 %v2191
        %2489 = vmatpush1.bf16.msra.mxu0 %v2190
        %2490 = vmatprep.subr.bf16.mxu0 %v2183
        %2491 = vmatpush1.bf16.msra.mxu0 %v2182
        %2492 = vmatprep.subr.bf16.mxu0 %v2175
        %2493 = vmatpush1.bf16.msra.mxu0 %v2174
        %2494 = vmatprep.subr.bf16.mxu0 %v2167
        %2495 = vmatpush1.bf16.msra.mxu0 %v2166
        %2496 = vmatprep.subr.bf16.mxu0 %v2159
        %2497 = vmatpush1.bf16.msra.mxu0 %v2158
        %2498 = vmatprep.subr.bf16.mxu0 %v2151
        %2499 = vmatpush1.bf16.msra.mxu0 %v2150
        %2500 = vmatprep.subr.bf16.mxu0 %v2271
        %2501 = vmatpush2.bf16.msra.mxu0 %v2270
        %2502 = vmatprep.subr.bf16.mxu0 %v2263
        %2503 = vmatpush2.bf16.msra.mxu0 %v2262
        %2504 = vmatprep.subr.bf16.mxu0 %v2255
        %2505 = vmatpush2.bf16.msra.mxu0 %v2254
        %2506 = vmatprep.subr.bf16.mxu0 %v2247
        %2507 = vmatpush2.bf16.msra.mxu0 %v2246
        %2508 = vmatprep.subr.bf16.mxu0 %v2239
        %2509 = vmatpush2.bf16.msra.mxu0 %v2238
        %2510 = vmatprep.subr.bf16.mxu0 %v2231
        %2511 = vmatpush2.bf16.msra.mxu0 %v2230
        %2512 = vmatprep.subr.bf16.mxu0 %v2223
        %2513 = vmatpush2.bf16.msra.mxu0 %v2222
        %2514 = vmatprep.subr.bf16.mxu0 %v2215
        %2515 = vmatpush2.bf16.msra.mxu0 %v2214
        %2516 = vmatprep.mubr.bf16.mxu0 %v1761
        %2517 = vmatmul.mubr.bf16.gmra.mxu0 %v1760
        %v2518 = vpop.f32.mrf.mxu0
        %v2519 = vadd.f32 0.0, %v2518
        %v2520 = vpop.f32.mrf.mxu0
        %v2521 = vadd.f32 0.0, %v2520
        %v2522 = vpop.f32.mrf.mxu0
        %v2523 = vpop.f32.mrf.mxu0
        %2524 = vdwg.mxu0
        %2525 = vmatprep.subr.bf16.mxu0 %v2209
        %2526 = vmatpush1.bf16.msra.mxu0 %v2208
        %2527 = vmatprep.subr.bf16.mxu0 %v2201
        %2528 = vmatpush1.bf16.msra.mxu0 %v2200
        %2529 = vmatprep.subr.bf16.mxu0 %v2193
        %2530 = vmatpush1.bf16.msra.mxu0 %v2192
        %2531 = vmatprep.subr.bf16.mxu0 %v2185
        %2532 = vmatpush1.bf16.msra.mxu0 %v2184
        %2533 = vmatprep.subr.bf16.mxu0 %v2177
        %2534 = vmatpush1.bf16.msra.mxu0 %v2176
        %2535 = vmatprep.subr.bf16.mxu0 %v2169
        %2536 = vmatpush1.bf16.msra.mxu0 %v2168
        %2537 = vmatprep.subr.bf16.mxu0 %v2161
        %2538 = vmatpush1.bf16.msra.mxu0 %v2160
        %2539 = vmatprep.subr.bf16.mxu0 %v2153
        %2540 = vmatpush1.bf16.msra.mxu0 %v2152
        %2541 = vmatprep.subr.bf16.mxu0 %v2273
        %2542 = vmatpush2.bf16.msra.mxu0 %v2272
        %2543 = vmatprep.subr.bf16.mxu0 %v2265
        %2544 = vmatpush2.bf16.msra.mxu0 %v2264
        %2545 = vmatprep.subr.bf16.mxu0 %v2257
        %2546 = vmatpush2.bf16.msra.mxu0 %v2256
        %2547 = vmatprep.subr.bf16.mxu0 %v2249
        %2548 = vmatpush2.bf16.msra.mxu0 %v2248
        %2549 = vmatprep.subr.bf16.mxu0 %v2241
        %2550 = vmatpush2.bf16.msra.mxu0 %v2240
        %2551 = vmatprep.subr.bf16.mxu0 %v2233
        %2552 = vmatpush2.bf16.msra.mxu0 %v2232
        %2553 = vmatprep.subr.bf16.mxu0 %v2225
        %2554 = vmatpush2.bf16.msra.mxu0 %v2224
        %2555 = vmatprep.subr.bf16.mxu0 %v2217
        %2556 = vmatpush2.bf16.msra.mxu0 %v2216
        %2557 = vmatprep.mubr.bf16.mxu0 %v1761
        %2558 = vmatmul.mubr.bf16.gmra.mxu0 %v1760
        %v2559 = vpop.f32.mrf.mxu0
        %v2560 = vadd.f32 0.0, %v2559
        %v2561 = vpop.f32.mrf.mxu0
        %v2562 = vadd.f32 0.0, %v2561
        %v2563 = vpop.f32.mrf.mxu0
        %v2564 = vpop.f32.mrf.mxu0
        %2565 = vdwg.mxu0
        %v2566 = vadd.f32 %v1752, %v2437
        %v2567 = vadd.f32 %v1753, %v2439
        %v2568 = vadd.f32 %v1754, %v2478
        %v2569 = vadd.f32 %v1755, %v2480
        %v2570 = vadd.f32 %v1756, %v2519
        %v2571 = vadd.f32 %v1757, %v2521
        %v2572 = vadd.f32 %v1758, %v2560
        %v2573 = vadd.f32 %v1759, %v2562
        %v2574 = vxor.u32 %v2566, 2147483648
        %v2575 = vxor.u32 %v2567, 2147483648
        %v2576 = vmul.f32 %v2574, 1.442695
        %v2577 = vpow.pop %v2576
        %v2578 = vmul.f32 %v2575, 1.442695
        %v2579 = vpow.pop %v2578
        %v2580 = vadd.f32 %v2577, 1.0
        %v2581 = vadd.f32 %v2579, 1.0
        %v2582 = vrcp.pop %v2580
        %v2583 = vmul.f32 1.0, %v2582
        %v2584 = vrcp.pop %v2581
        %v2585 = vmul.f32 1.0, %v2584
        %v2586 = vxor.u32 %v2568, 2147483648
        %v2587 = vxor.u32 %v2569, 2147483648
        %v2588 = vmul.f32 %v2586, 1.442695
        %v2589 = vpow.pop %v2588
        %v2590 = vmul.f32 %v2587, 1.442695
        %v2591 = vpow.pop %v2590
        %v2592 = vadd.f32 %v2589, 1.0
        %v2593 = vadd.f32 %v2591, 1.0
        %v2594 = vrcp.pop %v2592
        %v2595 = vmul.f32 1.0, %v2594
        %v2596 = vrcp.pop %v2593
        %v2597 = vmul.f32 1.0, %v2596
        %v2598 = vtanh.pop %v2570
        %v2599 = vtanh.pop %v2571
        %v2600 = vxor.u32 %v2572, 2147483648
        %v2601 = vxor.u32 %v2573, 2147483648
        %v2602 = vmul.f32 %v2600, 1.442695
        %v2603 = vpow.pop %v2602
        %v2604 = vmul.f32 %v2601, 1.442695
        %v2605 = vpow.pop %v2604
        %v2606 = vadd.f32 %v2603, 1.0
        %v2607 = vadd.f32 %v2605, 1.0
        %v2608 = vrcp.pop %v2606
        %v2609 = vmul.f32 1.0, %v2608
        %v2610 = vrcp.pop %v2607
        %v2611 = vmul.f32 1.0, %v2610
        %v2612 = vmul.f32 %v2595, %v1743
        %v2613 = vmul.f32 %v2597, %v1744
        %v2614 = vmul.f32 %v2583, %v2598
        %v2615 = vmul.f32 %v2585, %v2599
        %v2616 = vadd.f32 %v2612, %v2614
        %v2617 = vadd.f32 %v2613, %v2615
        %v2618 = vtanh.pop %v2616
        %v2619 = vtanh.pop %v2617
        %v2620 = vmul.f32 %v2609, %v2618
        %v2621 = vmul.f32 %v2611, %v2619
        %s2622 = scalar_lea.vmem %s4, 16
        %2623 = vst [vmem:[%s2622] sm:$0xff] %v2620
        %2624 = vst [vmem:[%s2622 + $0x8] sm:$0xff] %v2621
        %s2625 = scalar_lea.vmem [#allocation2], 128
        %v2626 = vld [vmem:[%s2625] sm:$0xff]
        %v2627 = vld [vmem:[%s2625 + $0x8] sm:$0xff]
        %v2628 = vld [vmem:[%s2625 + $0x10] sm:$0xff]
        %v2629 = vld [vmem:[%s2625 + $0x18] sm:$0xff]
        %v2630 = vld [vmem:[%s2625 + $0x20] sm:$0xff]
        %v2631 = vld [vmem:[%s2625 + $0x28] sm:$0xff]
        %v2632 = vld [vmem:[%s2625 + $0x30] sm:$0xff]
        %v2633 = vld [vmem:[%s2625 + $0x38] sm:$0xff]
        %v2634 = vpack.c.bf16 %v2620, %v2620
        %v2635 = vpack.c.bf16 %v2621, %v2621
        %2636 = vmatprep.subr.bf16.mxu0 %v2203
        %2637 = vmatpush1.bf16.msra.mxu0 %v2202
        %2638 = vmatprep.subr.bf16.mxu0 %v2195
        %2639 = vmatpush1.bf16.msra.mxu0 %v2194
        %2640 = vmatprep.subr.bf16.mxu0 %v2187
        %2641 = vmatpush1.bf16.msra.mxu0 %v2186
        %2642 = vmatprep.subr.bf16.mxu0 %v2179
        %2643 = vmatpush1.bf16.msra.mxu0 %v2178
        %2644 = vmatprep.subr.bf16.mxu0 %v2171
        %2645 = vmatpush1.bf16.msra.mxu0 %v2170
        %2646 = vmatprep.subr.bf16.mxu0 %v2163
        %2647 = vmatpush1.bf16.msra.mxu0 %v2162
        %2648 = vmatprep.subr.bf16.mxu0 %v2155
        %2649 = vmatpush1.bf16.msra.mxu0 %v2154
        %2650 = vmatprep.subr.bf16.mxu0 %v2147
        %2651 = vmatpush1.bf16.msra.mxu0 %v2146
        %2652 = vmatprep.subr.bf16.mxu0 %v2267
        %2653 = vmatpush2.bf16.msra.mxu0 %v2266
        %2654 = vmatprep.subr.bf16.mxu0 %v2259
        %2655 = vmatpush2.bf16.msra.mxu0 %v2258
        %2656 = vmatprep.subr.bf16.mxu0 %v2251
        %2657 = vmatpush2.bf16.msra.mxu0 %v2250
        %2658 = vmatprep.subr.bf16.mxu0 %v2243
        %2659 = vmatpush2.bf16.msra.mxu0 %v2242
        %2660 = vmatprep.subr.bf16.mxu0 %v2235
        %2661 = vmatpush2.bf16.msra.mxu0 %v2234
        %2662 = vmatprep.subr.bf16.mxu0 %v2227
        %2663 = vmatpush2.bf16.msra.mxu0 %v2226
        %2664 = vmatprep.subr.bf16.mxu0 %v2219
        %2665 = vmatpush2.bf16.msra.mxu0 %v2218
        %2666 = vmatprep.subr.bf16.mxu0 %v2211
        %2667 = vmatpush2.bf16.msra.mxu0 %v2210
        %2668 = vmatprep.mubr.bf16.mxu0 %v2635
        %2669 = vmatmul.mubr.bf16.gmra.mxu0 %v2634
        %v2670 = vpop.f32.mrf.mxu0
        %v2671 = vadd.f32 0.0, %v2670
        %v2672 = vpop.f32.mrf.mxu0
        %v2673 = vadd.f32 0.0, %v2672
        %v2674 = vpop.f32.mrf.mxu0
        %v2675 = vpop.f32.mrf.mxu0
        %2676 = vdwg.mxu0
        %2677 = vmatprep.subr.bf16.mxu0 %v2205
        %2678 = vmatpush1.bf16.msra.mxu0 %v2204
        %2679 = vmatprep.subr.bf16.mxu0 %v2197
        %2680 = vmatpush1.bf16.msra.mxu0 %v2196
        %2681 = vmatprep.subr.bf16.mxu0 %v2189
        %2682 = vmatpush1.bf16.msra.mxu0 %v2188
        %2683 = vmatprep.subr.bf16.mxu0 %v2181
        %2684 = vmatpush1.bf16.msra.mxu0 %v2180
        %2685 = vmatprep.subr.bf16.mxu0 %v2173
        %2686 = vmatpush1.bf16.msra.mxu0 %v2172
        %2687 = vmatprep.subr.bf16.mxu0 %v2165
        %2688 = vmatpush1.bf16.msra.mxu0 %v2164
        %2689 = vmatprep.subr.bf16.mxu0 %v2157
        %2690 = vmatpush1.bf16.msra.mxu0 %v2156
        %2691 = vmatprep.subr.bf16.mxu0 %v2149
        %2692 = vmatpush1.bf16.msra.mxu0 %v2148
        %2693 = vmatprep.subr.bf16.mxu0 %v2269
        %2694 = vmatpush2.bf16.msra.mxu0 %v2268
        %2695 = vmatprep.subr.bf16.mxu0 %v2261
        %2696 = vmatpush2.bf16.msra.mxu0 %v2260
        %2697 = vmatprep.subr.bf16.mxu0 %v2253
        %2698 = vmatpush2.bf16.msra.mxu0 %v2252
        %2699 = vmatprep.subr.bf16.mxu0 %v2245
        %2700 = vmatpush2.bf16.msra.mxu0 %v2244
        %2701 = vmatprep.subr.bf16.mxu0 %v2237
        %2702 = vmatpush2.bf16.msra.mxu0 %v2236
        %2703 = vmatprep.subr.bf16.mxu0 %v2229
        %2704 = vmatpush2.bf16.msra.mxu0 %v2228
        %2705 = vmatprep.subr.bf16.mxu0 %v2221
        %2706 = vmatpush2.bf16.msra.mxu0 %v2220
        %2707 = vmatprep.subr.bf16.mxu0 %v2213
        %2708 = vmatpush2.bf16.msra.mxu0 %v2212
        %2709 = vmatprep.mubr.bf16.mxu0 %v2635
        %2710 = vmatmul.mubr.bf16.gmra.mxu0 %v2634
        %v2711 = vpop.f32.mrf.mxu0
        %v2712 = vadd.f32 0.0, %v2711
        %v2713 = vpop.f32.mrf.mxu0
        %v2714 = vadd.f32 0.0, %v2713
        %v2715 = vpop.f32.mrf.mxu0
        %v2716 = vpop.f32.mrf.mxu0
        %2717 = vdwg.mxu0
        %2718 = vmatprep.subr.bf16.mxu0 %v2207
        %2719 = vmatpush1.bf16.msra.mxu0 %v2206
        %2720 = vmatprep.subr.bf16.mxu0 %v2199
        %2721 = vmatpush1.bf16.msra.mxu0 %v2198
        %2722 = vmatprep.subr.bf16.mxu0 %v2191
        %2723 = vmatpush1.bf16.msra.mxu0 %v2190
        %2724 = vmatprep.subr.bf16.mxu0 %v2183
        %2725 = vmatpush1.bf16.msra.mxu0 %v2182
        %2726 = vmatprep.subr.bf16.mxu0 %v2175
        %2727 = vmatpush1.bf16.msra.mxu0 %v2174
        %2728 = vmatprep.subr.bf16.mxu0 %v2167
        %2729 = vmatpush1.bf16.msra.mxu0 %v2166
        %2730 = vmatprep.subr.bf16.mxu0 %v2159
        %2731 = vmatpush1.bf16.msra.mxu0 %v2158
        %2732 = vmatprep.subr.bf16.mxu0 %v2151
        %2733 = vmatpush1.bf16.msra.mxu0 %v2150
        %2734 = vmatprep.subr.bf16.mxu0 %v2271
        %2735 = vmatpush2.bf16.msra.mxu0 %v2270
        %2736 = vmatprep.subr.bf16.mxu0 %v2263
        %2737 = vmatpush2.bf16.msra.mxu0 %v2262
        %2738 = vmatprep.subr.bf16.mxu0 %v2255
        %2739 = vmatpush2.bf16.msra.mxu0 %v2254
        %2740 = vmatprep.subr.bf16.mxu0 %v2247
        %2741 = vmatpush2.bf16.msra.mxu0 %v2246
        %2742 = vmatprep.subr.bf16.mxu0 %v2239
        %2743 = vmatpush2.bf16.msra.mxu0 %v2238
        %2744 = vmatprep.subr.bf16.mxu0 %v2231
        %2745 = vmatpush2.bf16.msra.mxu0 %v2230
        %2746 = vmatprep.subr.bf16.mxu0 %v2223
        %2747 = vmatpush2.bf16.msra.mxu0 %v2222
        %2748 = vmatprep.subr.bf16.mxu0 %v2215
        %2749 = vmatpush2.bf16.msra.mxu0 %v2214
        %2750 = vmatprep.mubr.bf16.mxu0 %v2635
        %2751 = vmatmul.mubr.bf16.gmra.mxu0 %v2634
        %v2752 = vpop.f32.mrf.mxu0
        %v2753 = vadd.f32 0.0, %v2752
        %v2754 = vpop.f32.mrf.mxu0
        %v2755 = vadd.f32 0.0, %v2754
        %v2756 = vpop.f32.mrf.mxu0
        %v2757 = vpop.f32.mrf.mxu0
        %2758 = vdwg.mxu0
        %2759 = vmatprep.subr.bf16.mxu0 %v2209
        %2760 = vmatpush1.bf16.msra.mxu0 %v2208
        %2761 = vmatprep.subr.bf16.mxu0 %v2201
        %2762 = vmatpush1.bf16.msra.mxu0 %v2200
        %2763 = vmatprep.subr.bf16.mxu0 %v2193
        %2764 = vmatpush1.bf16.msra.mxu0 %v2192
        %2765 = vmatprep.subr.bf16.mxu0 %v2185
        %2766 = vmatpush1.bf16.msra.mxu0 %v2184
        %2767 = vmatprep.subr.bf16.mxu0 %v2177
        %2768 = vmatpush1.bf16.msra.mxu0 %v2176
        %2769 = vmatprep.subr.bf16.mxu0 %v2169
        %2770 = vmatpush1.bf16.msra.mxu0 %v2168
        %2771 = vmatprep.subr.bf16.mxu0 %v2161
        %2772 = vmatpush1.bf16.msra.mxu0 %v2160
        %2773 = vmatprep.subr.bf16.mxu0 %v2153
        %2774 = vmatpush1.bf16.msra.mxu0 %v2152
        %2775 = vmatprep.subr.bf16.mxu0 %v2273
        %2776 = vmatpush2.bf16.msra.mxu0 %v2272
        %2777 = vmatprep.subr.bf16.mxu0 %v2265
        %2778 = vmatpush2.bf16.msra.mxu0 %v2264
        %2779 = vmatprep.subr.bf16.mxu0 %v2257
        %2780 = vmatpush2.bf16.msra.mxu0 %v2256
        %2781 = vmatprep.subr.bf16.mxu0 %v2249
        %2782 = vmatpush2.bf16.msra.mxu0 %v2248
        %2783 = vmatprep.subr.bf16.mxu0 %v2241
        %2784 = vmatpush2.bf16.msra.mxu0 %v2240
        %2785 = vmatprep.subr.bf16.mxu0 %v2233
        %2786 = vmatpush2.bf16.msra.mxu0 %v2232
        %2787 = vmatprep.subr.bf16.mxu0 %v2225
        %2788 = vmatpush2.bf16.msra.mxu0 %v2224
        %2789 = vmatprep.subr.bf16.mxu0 %v2217
        %2790 = vmatpush2.bf16.msra.mxu0 %v2216
        %2791 = vmatprep.mubr.bf16.mxu0 %v2635
        %2792 = vmatmul.mubr.bf16.gmra.mxu0 %v2634
        %v2793 = vpop.f32.mrf.mxu0
        %v2794 = vadd.f32 0.0, %v2793
        %v2795 = vpop.f32.mrf.mxu0
        %v2796 = vadd.f32 0.0, %v2795
        %v2797 = vpop.f32.mrf.mxu0
        %v2798 = vpop.f32.mrf.mxu0
        %2799 = vdwg.mxu0
        %v2800 = vadd.f32 %v2626, %v2671
        %v2801 = vadd.f32 %v2627, %v2673
        %v2802 = vadd.f32 %v2628, %v2712
        %v2803 = vadd.f32 %v2629, %v2714
        %v2804 = vadd.f32 %v2630, %v2753
        %v2805 = vadd.f32 %v2631, %v2755
        %v2806 = vadd.f32 %v2632, %v2794
        %v2807 = vadd.f32 %v2633, %v2796
        %v2808 = vxor.u32 %v2800, 2147483648
        %v2809 = vxor.u32 %v2801, 2147483648
        %v2810 = vmul.f32 %v2808, 1.442695
        %v2811 = vpow.pop %v2810
        %v2812 = vmul.f32 %v2809, 1.442695
        %v2813 = vpow.pop %v2812
        %v2814 = vadd.f32 %v2811, 1.0
        %v2815 = vadd.f32 %v2813, 1.0
        %v2816 = vrcp.pop %v2814
        %v2817 = vmul.f32 1.0, %v2816
        %v2818 = vrcp.pop %v2815
        %v2819 = vmul.f32 1.0, %v2818
        %v2820 = vxor.u32 %v2802, 2147483648
        %v2821 = vxor.u32 %v2803, 2147483648
        %v2822 = vmul.f32 %v2820, 1.442695
        %v2823 = vpow.pop %v2822
        %v2824 = vmul.f32 %v2821, 1.442695
        %v2825 = vpow.pop %v2824
        %v2826 = vadd.f32 %v2823, 1.0
        %v2827 = vadd.f32 %v2825, 1.0
        %v2828 = vrcp.pop %v2826
        %v2829 = vmul.f32 1.0, %v2828
        %v2830 = vrcp.pop %v2827
        %v2831 = vmul.f32 1.0, %v2830
        %v2832 = vtanh.pop %v2804
        %v2833 = vtanh.pop %v2805
        %v2834 = vxor.u32 %v2806, 2147483648
        %v2835 = vxor.u32 %v2807, 2147483648
        %v2836 = vmul.f32 %v2834, 1.442695
        %v2837 = vpow.pop %v2836
        %v2838 = vmul.f32 %v2835, 1.442695
        %v2839 = vpow.pop %v2838
        %v2840 = vadd.f32 %v2837, 1.0
        %v2841 = vadd.f32 %v2839, 1.0
        %v2842 = vrcp.pop %v2840
        %v2843 = vmul.f32 1.0, %v2842
        %v2844 = vrcp.pop %v2841
        %v2845 = vmul.f32 1.0, %v2844
        %v2846 = vmul.f32 %v2829, %v2616
        %v2847 = vmul.f32 %v2831, %v2617
        %v2848 = vmul.f32 %v2817, %v2832
        %v2849 = vmul.f32 %v2819, %v2833
        %v2850 = vadd.f32 %v2846, %v2848
        %v2851 = vadd.f32 %v2847, %v2849
        %v2852 = vtanh.pop %v2850
        %v2853 = vtanh.pop %v2851
        %v2854 = vmul.f32 %v2843, %v2852
        %v2855 = vmul.f32 %v2845, %v2853
        %s2856 = scalar_lea.vmem %s4, 32
        %2857 = vst [vmem:[%s2856] sm:$0xff] %v2854
        %2858 = vst [vmem:[%s2856 + $0x8] sm:$0xff] %v2855
        %s2859 = scalar_lea.vmem [#allocation2], 192
        %v2860 = vld [vmem:[%s2859] sm:$0xff]
        %v2861 = vld [vmem:[%s2859 + $0x8] sm:$0xff]
        %v2862 = vld [vmem:[%s2859 + $0x10] sm:$0xff]
        %v2863 = vld [vmem:[%s2859 + $0x18] sm:$0xff]
        %v2864 = vld [vmem:[%s2859 + $0x20] sm:$0xff]
        %v2865 = vld [vmem:[%s2859 + $0x28] sm:$0xff]
        %v2866 = vld [vmem:[%s2859 + $0x30] sm:$0xff]
        %v2867 = vld [vmem:[%s2859 + $0x38] sm:$0xff]
        %v2868 = vpack.c.bf16 %v2854, %v2854
        %v2869 = vpack.c.bf16 %v2855, %v2855
        %2870 = vmatprep.subr.bf16.mxu0 %v2203
        %2871 = vmatpush1.bf16.msra.mxu0 %v2202
        %2872 = vmatprep.subr.bf16.mxu0 %v2195
        %2873 = vmatpush1.bf16.msra.mxu0 %v2194
        %2874 = vmatprep.subr.bf16.mxu0 %v2187
        %2875 = vmatpush1.bf16.msra.mxu0 %v2186
        %2876 = vmatprep.subr.bf16.mxu0 %v2179
        %2877 = vmatpush1.bf16.msra.mxu0 %v2178
        %2878 = vmatprep.subr.bf16.mxu0 %v2171
        %2879 = vmatpush1.bf16.msra.mxu0 %v2170
        %2880 = vmatprep.subr.bf16.mxu0 %v2163
        %2881 = vmatpush1.bf16.msra.mxu0 %v2162
        %2882 = vmatprep.subr.bf16.mxu0 %v2155
        %2883 = vmatpush1.bf16.msra.mxu0 %v2154
        %2884 = vmatprep.subr.bf16.mxu0 %v2147
        %2885 = vmatpush1.bf16.msra.mxu0 %v2146
        %2886 = vmatprep.subr.bf16.mxu0 %v2267
        %2887 = vmatpush2.bf16.msra.mxu0 %v2266
        %2888 = vmatprep.subr.bf16.mxu0 %v2259
        %2889 = vmatpush2.bf16.msra.mxu0 %v2258
        %2890 = vmatprep.subr.bf16.mxu0 %v2251
        %2891 = vmatpush2.bf16.msra.mxu0 %v2250
        %2892 = vmatprep.subr.bf16.mxu0 %v2243
        %2893 = vmatpush2.bf16.msra.mxu0 %v2242
        %2894 = vmatprep.subr.bf16.mxu0 %v2235
        %2895 = vmatpush2.bf16.msra.mxu0 %v2234
        %2896 = vmatprep.subr.bf16.mxu0 %v2227
        %2897 = vmatpush2.bf16.msra.mxu0 %v2226
        %2898 = vmatprep.subr.bf16.mxu0 %v2219
        %2899 = vmatpush2.bf16.msra.mxu0 %v2218
        %2900 = vmatprep.subr.bf16.mxu0 %v2211
        %2901 = vmatpush2.bf16.msra.mxu0 %v2210
        %2902 = vmatprep.mubr.bf16.mxu0 %v2869
        %2903 = vmatmul.mubr.bf16.gmra.mxu0 %v2868
        %v2904 = vpop.f32.mrf.mxu0
        %v2905 = vadd.f32 0.0, %v2904
        %v2906 = vpop.f32.mrf.mxu0
        %v2907 = vadd.f32 0.0, %v2906
        %v2908 = vpop.f32.mrf.mxu0
        %v2909 = vpop.f32.mrf.mxu0
        %2910 = vdwg.mxu0
        %2911 = vmatprep.subr.bf16.mxu0 %v2205
        %2912 = vmatpush1.bf16.msra.mxu0 %v2204
        %2913 = vmatprep.subr.bf16.mxu0 %v2197
        %2914 = vmatpush1.bf16.msra.mxu0 %v2196
        %2915 = vmatprep.subr.bf16.mxu0 %v2189
        %2916 = vmatpush1.bf16.msra.mxu0 %v2188
        %2917 = vmatprep.subr.bf16.mxu0 %v2181
        %2918 = vmatpush1.bf16.msra.mxu0 %v2180
        %2919 = vmatprep.subr.bf16.mxu0 %v2173
        %2920 = vmatpush1.bf16.msra.mxu0 %v2172
        %2921 = vmatprep.subr.bf16.mxu0 %v2165
        %2922 = vmatpush1.bf16.msra.mxu0 %v2164
        %2923 = vmatprep.subr.bf16.mxu0 %v2157
        %2924 = vmatpush1.bf16.msra.mxu0 %v2156
        %2925 = vmatprep.subr.bf16.mxu0 %v2149
        %2926 = vmatpush1.bf16.msra.mxu0 %v2148
        %2927 = vmatprep.subr.bf16.mxu0 %v2269
        %2928 = vmatpush2.bf16.msra.mxu0 %v2268
        %2929 = vmatprep.subr.bf16.mxu0 %v2261
        %2930 = vmatpush2.bf16.msra.mxu0 %v2260
        %2931 = vmatprep.subr.bf16.mxu0 %v2253
        %2932 = vmatpush2.bf16.msra.mxu0 %v2252
        %2933 = vmatprep.subr.bf16.mxu0 %v2245
        %2934 = vmatpush2.bf16.msra.mxu0 %v2244
        %2935 = vmatprep.subr.bf16.mxu0 %v2237
        %2936 = vmatpush2.bf16.msra.mxu0 %v2236
        %2937 = vmatprep.subr.bf16.mxu0 %v2229
        %2938 = vmatpush2.bf16.msra.mxu0 %v2228
        %2939 = vmatprep.subr.bf16.mxu0 %v2221
        %2940 = vmatpush2.bf16.msra.mxu0 %v2220
        %2941 = vmatprep.subr.bf16.mxu0 %v2213
        %2942 = vmatpush2.bf16.msra.mxu0 %v2212
        %2943 = vmatprep.mubr.bf16.mxu0 %v2869
        %2944 = vmatmul.mubr.bf16.gmra.mxu0 %v2868
        %v2945 = vpop.f32.mrf.mxu0
        %v2946 = vadd.f32 0.0, %v2945
        %v2947 = vpop.f32.mrf.mxu0
        %v2948 = vadd.f32 0.0, %v2947
        %v2949 = vpop.f32.mrf.mxu0
        %v2950 = vpop.f32.mrf.mxu0
        %2951 = vdwg.mxu0
        %2952 = vmatprep.subr.bf16.mxu0 %v2207
        %2953 = vmatpush1.bf16.msra.mxu0 %v2206
        %2954 = vmatprep.subr.bf16.mxu0 %v2199
        %2955 = vmatpush1.bf16.msra.mxu0 %v2198
        %2956 = vmatprep.subr.bf16.mxu0 %v2191
        %2957 = vmatpush1.bf16.msra.mxu0 %v2190
        %2958 = vmatprep.subr.bf16.mxu0 %v2183
        %2959 = vmatpush1.bf16.msra.mxu0 %v2182
        %2960 = vmatprep.subr.bf16.mxu0 %v2175
        %2961 = vmatpush1.bf16.msra.mxu0 %v2174
        %2962 = vmatprep.subr.bf16.mxu0 %v2167
        %2963 = vmatpush1.bf16.msra.mxu0 %v2166
        %2964 = vmatprep.subr.bf16.mxu0 %v2159
        %2965 = vmatpush1.bf16.msra.mxu0 %v2158
        %2966 = vmatprep.subr.bf16.mxu0 %v2151
        %2967 = vmatpush1.bf16.msra.mxu0 %v2150
        %2968 = vmatprep.subr.bf16.mxu0 %v2271
        %2969 = vmatpush2.bf16.msra.mxu0 %v2270
        %2970 = vmatprep.subr.bf16.mxu0 %v2263
        %2971 = vmatpush2.bf16.msra.mxu0 %v2262
        %2972 = vmatprep.subr.bf16.mxu0 %v2255
        %2973 = vmatpush2.bf16.msra.mxu0 %v2254
        %2974 = vmatprep.subr.bf16.mxu0 %v2247
        %2975 = vmatpush2.bf16.msra.mxu0 %v2246
        %2976 = vmatprep.subr.bf16.mxu0 %v2239
        %2977 = vmatpush2.bf16.msra.mxu0 %v2238
        %2978 = vmatprep.subr.bf16.mxu0 %v2231
        %2979 = vmatpush2.bf16.msra.mxu0 %v2230
        %2980 = vmatprep.subr.bf16.mxu0 %v2223
        %2981 = vmatpush2.bf16.msra.mxu0 %v2222
        %2982 = vmatprep.subr.bf16.mxu0 %v2215
        %2983 = vmatpush2.bf16.msra.mxu0 %v2214
        %2984 = vmatprep.mubr.bf16.mxu0 %v2869
        %2985 = vmatmul.mubr.bf16.gmra.mxu0 %v2868
        %v2986 = vpop.f32.mrf.mxu0
        %v2987 = vadd.f32 0.0, %v2986
        %v2988 = vpop.f32.mrf.mxu0
        %v2989 = vadd.f32 0.0, %v2988
        %v2990 = vpop.f32.mrf.mxu0
        %v2991 = vpop.f32.mrf.mxu0
        %2992 = vdwg.mxu0
        %2993 = vmatprep.subr.bf16.mxu0 %v2209
        %2994 = vmatpush1.bf16.msra.mxu0 %v2208
        %2995 = vmatprep.subr.bf16.mxu0 %v2201
        %2996 = vmatpush1.bf16.msra.mxu0 %v2200
        %2997 = vmatprep.subr.bf16.mxu0 %v2193
        %2998 = vmatpush1.bf16.msra.mxu0 %v2192
        %2999 = vmatprep.subr.bf16.mxu0 %v2185
        %3000 = vmatpush1.bf16.msra.mxu0 %v2184
        %3001 = vmatprep.subr.bf16.mxu0 %v2177
        %3002 = vmatpush1.bf16.msra.mxu0 %v2176
        %3003 = vmatprep.subr.bf16.mxu0 %v2169
        %3004 = vmatpush1.bf16.msra.mxu0 %v2168
        %3005 = vmatprep.subr.bf16.mxu0 %v2161
        %3006 = vmatpush1.bf16.msra.mxu0 %v2160
        %3007 = vmatprep.subr.bf16.mxu0 %v2153
        %3008 = vmatpush1.bf16.msra.mxu0 %v2152
        %3009 = vmatprep.subr.bf16.mxu0 %v2273
        %3010 = vmatpush2.bf16.msra.mxu0 %v2272
        %3011 = vmatprep.subr.bf16.mxu0 %v2265
        %3012 = vmatpush2.bf16.msra.mxu0 %v2264
        %3013 = vmatprep.subr.bf16.mxu0 %v2257
        %3014 = vmatpush2.bf16.msra.mxu0 %v2256
        %3015 = vmatprep.subr.bf16.mxu0 %v2249
        %3016 = vmatpush2.bf16.msra.mxu0 %v2248
        %3017 = vmatprep.subr.bf16.mxu0 %v2241
        %3018 = vmatpush2.bf16.msra.mxu0 %v2240
        %3019 = vmatprep.subr.bf16.mxu0 %v2233
        %3020 = vmatpush2.bf16.msra.mxu0 %v2232
        %3021 = vmatprep.subr.bf16.mxu0 %v2225
        %3022 = vmatpush2.bf16.msra.mxu0 %v2224
        %3023 = vmatprep.subr.bf16.mxu0 %v2217
        %3024 = vmatpush2.bf16.msra.mxu0 %v2216
        %3025 = vmatprep.mubr.bf16.mxu0 %v2869
        %3026 = vmatmul.mubr.bf16.gmra.mxu0 %v2868
        %v3027 = vpop.f32.mrf.mxu0
        %v3028 = vadd.f32 0.0, %v3027
        %v3029 = vpop.f32.mrf.mxu0
        %v3030 = vadd.f32 0.0, %v3029
        %v3031 = vpop.f32.mrf.mxu0
        %v3032 = vpop.f32.mrf.mxu0
        %3033 = vdwg.mxu0
        %v3034 = vadd.f32 %v2860, %v2905
        %v3035 = vadd.f32 %v2861, %v2907
        %v3036 = vadd.f32 %v2862, %v2946
        %v3037 = vadd.f32 %v2863, %v2948
        %v3038 = vadd.f32 %v2864, %v2987
        %v3039 = vadd.f32 %v2865, %v2989
        %v3040 = vadd.f32 %v2866, %v3028
        %v3041 = vadd.f32 %v2867, %v3030
        %v3042 = vxor.u32 %v3034, 2147483648
        %v3043 = vxor.u32 %v3035, 2147483648
        %v3044 = vmul.f32 %v3042, 1.442695
        %v3045 = vpow.pop %v3044
        %v3046 = vmul.f32 %v3043, 1.442695
        %v3047 = vpow.pop %v3046
        %v3048 = vadd.f32 %v3045, 1.0
        %v3049 = vadd.f32 %v3047, 1.0
        %v3050 = vrcp.pop %v3048
        %v3051 = vmul.f32 1.0, %v3050
        %v3052 = vrcp.pop %v3049
        %v3053 = vmul.f32 1.0, %v3052
        %v3054 = vxor.u32 %v3036, 2147483648
        %v3055 = vxor.u32 %v3037, 2147483648
        %v3056 = vmul.f32 %v3054, 1.442695
        %v3057 = vpow.pop %v3056
        %v3058 = vmul.f32 %v3055, 1.442695
        %v3059 = vpow.pop %v3058
        %v3060 = vadd.f32 %v3057, 1.0
        %v3061 = vadd.f32 %v3059, 1.0
        %v3062 = vrcp.pop %v3060
        %v3063 = vmul.f32 1.0, %v3062
        %v3064 = vrcp.pop %v3061
        %v3065 = vmul.f32 1.0, %v3064
        %v3066 = vtanh.pop %v3038
        %v3067 = vtanh.pop %v3039
        %v3068 = vxor.u32 %v3040, 2147483648
        %v3069 = vxor.u32 %v3041, 2147483648
        %v3070 = vmul.f32 %v3068, 1.442695
        %v3071 = vpow.pop %v3070
        %v3072 = vmul.f32 %v3069, 1.442695
        %v3073 = vpow.pop %v3072
        %v3074 = vadd.f32 %v3071, 1.0
        %v3075 = vadd.f32 %v3073, 1.0
        %v3076 = vrcp.pop %v3074
        %v3077 = vmul.f32 1.0, %v3076
        %v3078 = vrcp.pop %v3075
        %v3079 = vmul.f32 1.0, %v3078
        %v3080 = vmul.f32 %v3063, %v2850
        %v3081 = vmul.f32 %v3065, %v2851
        %v3082 = vmul.f32 %v3051, %v3066
        %v3083 = vmul.f32 %v3053, %v3067
        %v3084 = vadd.f32 %v3080, %v3082
        %v3085 = vadd.f32 %v3081, %v3083
        %v3086 = vtanh.pop %v3084
        %v3087 = vtanh.pop %v3085
        %v3088 = vmul.f32 %v3077, %v3086
        %v3089 = vmul.f32 %v3079, %v3087
        %s3090 = scalar_lea.vmem %s4, 48
        %3091 = vst [vmem:[%s3090] sm:$0xff] %v3088
        %3092 = vst [vmem:[%s3090 + $0x8] sm:$0xff] %v3089
        %s3093 = scalar_lea.vmem [#allocation2], 256
        %v3094 = vld [vmem:[%s3093] sm:$0xff]
        %v3095 = vld [vmem:[%s3093 + $0x8] sm:$0xff]
        %v3096 = vld [vmem:[%s3093 + $0x10] sm:$0xff]
        %v3097 = vld [vmem:[%s3093 + $0x18] sm:$0xff]
        %v3098 = vld [vmem:[%s3093 + $0x20] sm:$0xff]
        %v3099 = vld [vmem:[%s3093 + $0x28] sm:$0xff]
        %v3100 = vld [vmem:[%s3093 + $0x30] sm:$0xff]
        %v3101 = vld [vmem:[%s3093 + $0x38] sm:$0xff]
        %v3102 = vpack.c.bf16 %v3088, %v3088
        %v3103 = vpack.c.bf16 %v3089, %v3089
        %3104 = vmatprep.subr.bf16.mxu0 %v2203
        %3105 = vmatpush1.bf16.msra.mxu0 %v2202
        %3106 = vmatprep.subr.bf16.mxu0 %v2195
        %3107 = vmatpush1.bf16.msra.mxu0 %v2194
        %3108 = vmatprep.subr.bf16.mxu0 %v2187
        %3109 = vmatpush1.bf16.msra.mxu0 %v2186
        %3110 = vmatprep.subr.bf16.mxu0 %v2179
        %3111 = vmatpush1.bf16.msra.mxu0 %v2178
        %3112 = vmatprep.subr.bf16.mxu0 %v2171
        %3113 = vmatpush1.bf16.msra.mxu0 %v2170
        %3114 = vmatprep.subr.bf16.mxu0 %v2163
        %3115 = vmatpush1.bf16.msra.mxu0 %v2162
        %3116 = vmatprep.subr.bf16.mxu0 %v2155
        %3117 = vmatpush1.bf16.msra.mxu0 %v2154
        %3118 = vmatprep.subr.bf16.mxu0 %v2147
        %3119 = vmatpush1.bf16.msra.mxu0 %v2146
        %3120 = vmatprep.subr.bf16.mxu0 %v2267
        %3121 = vmatpush2.bf16.msra.mxu0 %v2266
        %3122 = vmatprep.subr.bf16.mxu0 %v2259
        %3123 = vmatpush2.bf16.msra.mxu0 %v2258
        %3124 = vmatprep.subr.bf16.mxu0 %v2251
        %3125 = vmatpush2.bf16.msra.mxu0 %v2250
        %3126 = vmatprep.subr.bf16.mxu0 %v2243
        %3127 = vmatpush2.bf16.msra.mxu0 %v2242
        %3128 = vmatprep.subr.bf16.mxu0 %v2235
        %3129 = vmatpush2.bf16.msra.mxu0 %v2234
        %3130 = vmatprep.subr.bf16.mxu0 %v2227
        %3131 = vmatpush2.bf16.msra.mxu0 %v2226
        %3132 = vmatprep.subr.bf16.mxu0 %v2219
        %3133 = vmatpush2.bf16.msra.mxu0 %v2218
        %3134 = vmatprep.subr.bf16.mxu0 %v2211
        %3135 = vmatpush2.bf16.msra.mxu0 %v2210
        %3136 = vmatprep.mubr.bf16.mxu0 %v3103
        %3137 = vmatmul.mubr.bf16.gmra.mxu0 %v3102
        %v3138 = vpop.f32.mrf.mxu0
        %v3139 = vadd.f32 0.0, %v3138
        %v3140 = vpop.f32.mrf.mxu0
        %v3141 = vadd.f32 0.0, %v3140
        %v3142 = vpop.f32.mrf.mxu0
        %v3143 = vpop.f32.mrf.mxu0
        %3144 = vdwg.mxu0
        %3145 = vmatprep.subr.bf16.mxu0 %v2205
        %3146 = vmatpush1.bf16.msra.mxu0 %v2204
        %3147 = vmatprep.subr.bf16.mxu0 %v2197
        %3148 = vmatpush1.bf16.msra.mxu0 %v2196
        %3149 = vmatprep.subr.bf16.mxu0 %v2189
        %3150 = vmatpush1.bf16.msra.mxu0 %v2188
        %3151 = vmatprep.subr.bf16.mxu0 %v2181
        %3152 = vmatpush1.bf16.msra.mxu0 %v2180
        %3153 = vmatprep.subr.bf16.mxu0 %v2173
        %3154 = vmatpush1.bf16.msra.mxu0 %v2172
        %3155 = vmatprep.subr.bf16.mxu0 %v2165
        %3156 = vmatpush1.bf16.msra.mxu0 %v2164
        %3157 = vmatprep.subr.bf16.mxu0 %v2157
        %3158 = vmatpush1.bf16.msra.mxu0 %v2156
        %3159 = vmatprep.subr.bf16.mxu0 %v2149
        %3160 = vmatpush1.bf16.msra.mxu0 %v2148
        %3161 = vmatprep.subr.bf16.mxu0 %v2269
        %3162 = vmatpush2.bf16.msra.mxu0 %v2268
        %3163 = vmatprep.subr.bf16.mxu0 %v2261
        %3164 = vmatpush2.bf16.msra.mxu0 %v2260
        %3165 = vmatprep.subr.bf16.mxu0 %v2253
        %3166 = vmatpush2.bf16.msra.mxu0 %v2252
        %3167 = vmatprep.subr.bf16.mxu0 %v2245
        %3168 = vmatpush2.bf16.msra.mxu0 %v2244
        %3169 = vmatprep.subr.bf16.mxu0 %v2237
        %3170 = vmatpush2.bf16.msra.mxu0 %v2236
        %3171 = vmatprep.subr.bf16.mxu0 %v2229
        %3172 = vmatpush2.bf16.msra.mxu0 %v2228
        %3173 = vmatprep.subr.bf16.mxu0 %v2221
        %3174 = vmatpush2.bf16.msra.mxu0 %v2220
        %3175 = vmatprep.subr.bf16.mxu0 %v2213
        %3176 = vmatpush2.bf16.msra.mxu0 %v2212
        %3177 = vmatprep.mubr.bf16.mxu0 %v3103
        %3178 = vmatmul.mubr.bf16.gmra.mxu0 %v3102
        %v3179 = vpop.f32.mrf.mxu0
        %v3180 = vadd.f32 0.0, %v3179
        %v3181 = vpop.f32.mrf.mxu0
        %v3182 = vadd.f32 0.0, %v3181
        %v3183 = vpop.f32.mrf.mxu0
        %v3184 = vpop.f32.mrf.mxu0
        %3185 = vdwg.mxu0
        %3186 = vmatprep.subr.bf16.mxu0 %v2207
        %3187 = vmatpush1.bf16.msra.mxu0 %v2206
        %3188 = vmatprep.subr.bf16.mxu0 %v2199
        %3189 = vmatpush1.bf16.msra.mxu0 %v2198
        %3190 = vmatprep.subr.bf16.mxu0 %v2191
        %3191 = vmatpush1.bf16.msra.mxu0 %v2190
        %3192 = vmatprep.subr.bf16.mxu0 %v2183
        %3193 = vmatpush1.bf16.msra.mxu0 %v2182
        %3194 = vmatprep.subr.bf16.mxu0 %v2175
        %3195 = vmatpush1.bf16.msra.mxu0 %v2174
        %3196 = vmatprep.subr.bf16.mxu0 %v2167
        %3197 = vmatpush1.bf16.msra.mxu0 %v2166
        %3198 = vmatprep.subr.bf16.mxu0 %v2159
        %3199 = vmatpush1.bf16.msra.mxu0 %v2158
        %3200 = vmatprep.subr.bf16.mxu0 %v2151
        %3201 = vmatpush1.bf16.msra.mxu0 %v2150
        %3202 = vmatprep.subr.bf16.mxu0 %v2271
        %3203 = vmatpush2.bf16.msra.mxu0 %v2270
        %3204 = vmatprep.subr.bf16.mxu0 %v2263
        %3205 = vmatpush2.bf16.msra.mxu0 %v2262
        %3206 = vmatprep.subr.bf16.mxu0 %v2255
        %3207 = vmatpush2.bf16.msra.mxu0 %v2254
        %3208 = vmatprep.subr.bf16.mxu0 %v2247
        %3209 = vmatpush2.bf16.msra.mxu0 %v2246
        %3210 = vmatprep.subr.bf16.mxu0 %v2239
        %3211 = vmatpush2.bf16.msra.mxu0 %v2238
        %3212 = vmatprep.subr.bf16.mxu0 %v2231
        %3213 = vmatpush2.bf16.msra.mxu0 %v2230
        %3214 = vmatprep.subr.bf16.mxu0 %v2223
        %3215 = vmatpush2.bf16.msra.mxu0 %v2222
        %3216 = vmatprep.subr.bf16.mxu0 %v2215
        %3217 = vmatpush2.bf16.msra.mxu0 %v2214
        %3218 = vmatprep.mubr.bf16.mxu0 %v3103
        %3219 = vmatmul.mubr.bf16.gmra.mxu0 %v3102
        %v3220 = vpop.f32.mrf.mxu0
        %v3221 = vadd.f32 0.0, %v3220
        %v3222 = vpop.f32.mrf.mxu0
        %v3223 = vadd.f32 0.0, %v3222
        %v3224 = vpop.f32.mrf.mxu0
        %v3225 = vpop.f32.mrf.mxu0
        %3226 = vdwg.mxu0
        %3227 = vmatprep.subr.bf16.mxu0 %v2209
        %3228 = vmatpush1.bf16.msra.mxu0 %v2208
        %3229 = vmatprep.subr.bf16.mxu0 %v2201
        %3230 = vmatpush1.bf16.msra.mxu0 %v2200
        %3231 = vmatprep.subr.bf16.mxu0 %v2193
        %3232 = vmatpush1.bf16.msra.mxu0 %v2192
        %3233 = vmatprep.subr.bf16.mxu0 %v2185
        %3234 = vmatpush1.bf16.msra.mxu0 %v2184
        %3235 = vmatprep.subr.bf16.mxu0 %v2177
        %3236 = vmatpush1.bf16.msra.mxu0 %v2176
        %3237 = vmatprep.subr.bf16.mxu0 %v2169
        %3238 = vmatpush1.bf16.msra.mxu0 %v2168
        %3239 = vmatprep.subr.bf16.mxu0 %v2161
        %3240 = vmatpush1.bf16.msra.mxu0 %v2160
        %3241 = vmatprep.subr.bf16.mxu0 %v2153
        %3242 = vmatpush1.bf16.msra.mxu0 %v2152
        %3243 = vmatprep.subr.bf16.mxu0 %v2273
        %3244 = vmatpush2.bf16.msra.mxu0 %v2272
        %3245 = vmatprep.subr.bf16.mxu0 %v2265
        %3246 = vmatpush2.bf16.msra.mxu0 %v2264
        %3247 = vmatprep.subr.bf16.mxu0 %v2257
        %3248 = vmatpush2.bf16.msra.mxu0 %v2256
        %3249 = vmatprep.subr.bf16.mxu0 %v2249
        %3250 = vmatpush2.bf16.msra.mxu0 %v2248
        %3251 = vmatprep.subr.bf16.mxu0 %v2241
        %3252 = vmatpush2.bf16.msra.mxu0 %v2240
        %3253 = vmatprep.subr.bf16.mxu0 %v2233
        %3254 = vmatpush2.bf16.msra.mxu0 %v2232
        %3255 = vmatprep.subr.bf16.mxu0 %v2225
        %3256 = vmatpush2.bf16.msra.mxu0 %v2224
        %3257 = vmatprep.subr.bf16.mxu0 %v2217
        %3258 = vmatpush2.bf16.msra.mxu0 %v2216
        %3259 = vmatprep.mubr.bf16.mxu0 %v3103
        %3260 = vmatmul.mubr.bf16.gmra.mxu0 %v3102
        %v3261 = vpop.f32.mrf.mxu0
        %v3262 = vadd.f32 0.0, %v3261
        %v3263 = vpop.f32.mrf.mxu0
        %v3264 = vadd.f32 0.0, %v3263
        %v3265 = vpop.f32.mrf.mxu0
        %v3266 = vpop.f32.mrf.mxu0
        %3267 = vdwg.mxu0
        %v3268 = vadd.f32 %v3094, %v3139
        %v3269 = vadd.f32 %v3095, %v3141
        %v3270 = vadd.f32 %v3096, %v3180
        %v3271 = vadd.f32 %v3097, %v3182
        %v3272 = vadd.f32 %v3098, %v3221
        %v3273 = vadd.f32 %v3099, %v3223
        %v3274 = vadd.f32 %v3100, %v3262
        %v3275 = vadd.f32 %v3101, %v3264
        %v3276 = vxor.u32 %v3268, 2147483648
        %v3277 = vxor.u32 %v3269, 2147483648
        %v3278 = vmul.f32 %v3276, 1.442695
        %v3279 = vpow.pop %v3278
        %v3280 = vmul.f32 %v3277, 1.442695
        %v3281 = vpow.pop %v3280
        %v3282 = vadd.f32 %v3279, 1.0
        %v3283 = vadd.f32 %v3281, 1.0
        %v3284 = vrcp.pop %v3282
        %v3285 = vmul.f32 1.0, %v3284
        %v3286 = vrcp.pop %v3283
        %v3287 = vmul.f32 1.0, %v3286
        %v3288 = vxor.u32 %v3270, 2147483648
        %v3289 = vxor.u32 %v3271, 2147483648
        %v3290 = vmul.f32 %v3288, 1.442695
        %v3291 = vpow.pop %v3290
        %v3292 = vmul.f32 %v3289, 1.442695
        %v3293 = vpow.pop %v3292
        %v3294 = vadd.f32 %v3291, 1.0
        %v3295 = vadd.f32 %v3293, 1.0
        %v3296 = vrcp.pop %v3294
        %v3297 = vmul.f32 1.0, %v3296
        %v3298 = vrcp.pop %v3295
        %v3299 = vmul.f32 1.0, %v3298
        %v3300 = vtanh.pop %v3272
        %v3301 = vtanh.pop %v3273
        %v3302 = vxor.u32 %v3274, 2147483648
        %v3303 = vxor.u32 %v3275, 2147483648
        %v3304 = vmul.f32 %v3302, 1.442695
        %v3305 = vpow.pop %v3304
        %v3306 = vmul.f32 %v3303, 1.442695
        %v3307 = vpow.pop %v3306
        %v3308 = vadd.f32 %v3305, 1.0
        %v3309 = vadd.f32 %v3307, 1.0
        %v3310 = vrcp.pop %v3308
        %v3311 = vmul.f32 1.0, %v3310
        %v3312 = vrcp.pop %v3309
        %v3313 = vmul.f32 1.0, %v3312
        %v3314 = vmul.f32 %v3297, %v3084
        %v3315 = vmul.f32 %v3299, %v3085
        %v3316 = vmul.f32 %v3285, %v3300
        %v3317 = vmul.f32 %v3287, %v3301
        %v3318 = vadd.f32 %v3314, %v3316
        %v3319 = vadd.f32 %v3315, %v3317
        %v3320 = vtanh.pop %v3318
        %v3321 = vtanh.pop %v3319
        %v3322 = vmul.f32 %v3311, %v3320
        %v3323 = vmul.f32 %v3313, %v3321
        %s3324 = scalar_lea.vmem %s4, 64
        %3325 = vst [vmem:[%s3324] sm:$0xff] %v3322
        %3326 = vst [vmem:[%s3324 + $0x8] sm:$0xff] %v3323
        %s3327 = scalar_lea.vmem [#allocation2], 320
        %v3328 = vld [vmem:[%s3327] sm:$0xff]
        %v3329 = vld [vmem:[%s3327 + $0x8] sm:$0xff]
        %v3330 = vld [vmem:[%s3327 + $0x10] sm:$0xff]
        %v3331 = vld [vmem:[%s3327 + $0x18] sm:$0xff]
        %v3332 = vld [vmem:[%s3327 + $0x20] sm:$0xff]
        %v3333 = vld [vmem:[%s3327 + $0x28] sm:$0xff]
        %v3334 = vld [vmem:[%s3327 + $0x30] sm:$0xff]
        %v3335 = vld [vmem:[%s3327 + $0x38] sm:$0xff]
        %v3336 = vpack.c.bf16 %v3322, %v3322
        %v3337 = vpack.c.bf16 %v3323, %v3323
        %3338 = vmatprep.subr.bf16.mxu0 %v2203
        %3339 = vmatpush1.bf16.msra.mxu0 %v2202
        %3340 = vmatprep.subr.bf16.mxu0 %v2195
        %3341 = vmatpush1.bf16.msra.mxu0 %v2194
        %3342 = vmatprep.subr.bf16.mxu0 %v2187
        %3343 = vmatpush1.bf16.msra.mxu0 %v2186
        %3344 = vmatprep.subr.bf16.mxu0 %v2179
        %3345 = vmatpush1.bf16.msra.mxu0 %v2178
        %3346 = vmatprep.subr.bf16.mxu0 %v2171
        %3347 = vmatpush1.bf16.msra.mxu0 %v2170
        %3348 = vmatprep.subr.bf16.mxu0 %v2163
        %3349 = vmatpush1.bf16.msra.mxu0 %v2162
        %3350 = vmatprep.subr.bf16.mxu0 %v2155
        %3351 = vmatpush1.bf16.msra.mxu0 %v2154
        %3352 = vmatprep.subr.bf16.mxu0 %v2147
        %3353 = vmatpush1.bf16.msra.mxu0 %v2146
        %3354 = vmatprep.subr.bf16.mxu0 %v2267
        %3355 = vmatpush2.bf16.msra.mxu0 %v2266
        %3356 = vmatprep.subr.bf16.mxu0 %v2259
        %3357 = vmatpush2.bf16.msra.mxu0 %v2258
        %3358 = vmatprep.subr.bf16.mxu0 %v2251
        %3359 = vmatpush2.bf16.msra.mxu0 %v2250
        %3360 = vmatprep.subr.bf16.mxu0 %v2243
        %3361 = vmatpush2.bf16.msra.mxu0 %v2242
        %3362 = vmatprep.subr.bf16.mxu0 %v2235
        %3363 = vmatpush2.bf16.msra.mxu0 %v2234
        %3364 = vmatprep.subr.bf16.mxu0 %v2227
        %3365 = vmatpush2.bf16.msra.mxu0 %v2226
        %3366 = vmatprep.subr.bf16.mxu0 %v2219
        %3367 = vmatpush2.bf16.msra.mxu0 %v2218
        %3368 = vmatprep.subr.bf16.mxu0 %v2211
        %3369 = vmatpush2.bf16.msra.mxu0 %v2210
        %3370 = vmatprep.mubr.bf16.mxu0 %v3337
        %3371 = vmatmul.mubr.bf16.gmra.mxu0 %v3336
        %v3372 = vpop.f32.mrf.mxu0
        %v3373 = vadd.f32 0.0, %v3372
        %v3374 = vpop.f32.mrf.mxu0
        %v3375 = vadd.f32 0.0, %v3374
        %v3376 = vpop.f32.mrf.mxu0
        %v3377 = vpop.f32.mrf.mxu0
        %3378 = vdwg.mxu0
        %3379 = vmatprep.subr.bf16.mxu0 %v2205
        %3380 = vmatpush1.bf16.msra.mxu0 %v2204
        %3381 = vmatprep.subr.bf16.mxu0 %v2197
        %3382 = vmatpush1.bf16.msra.mxu0 %v2196
        %3383 = vmatprep.subr.bf16.mxu0 %v2189
        %3384 = vmatpush1.bf16.msra.mxu0 %v2188
        %3385 = vmatprep.subr.bf16.mxu0 %v2181
        %3386 = vmatpush1.bf16.msra.mxu0 %v2180
        %3387 = vmatprep.subr.bf16.mxu0 %v2173
        %3388 = vmatpush1.bf16.msra.mxu0 %v2172
        %3389 = vmatprep.subr.bf16.mxu0 %v2165
        %3390 = vmatpush1.bf16.msra.mxu0 %v2164
        %3391 = vmatprep.subr.bf16.mxu0 %v2157
        %3392 = vmatpush1.bf16.msra.mxu0 %v2156
        %3393 = vmatprep.subr.bf16.mxu0 %v2149
        %3394 = vmatpush1.bf16.msra.mxu0 %v2148
        %3395 = vmatprep.subr.bf16.mxu0 %v2269
        %3396 = vmatpush2.bf16.msra.mxu0 %v2268
        %3397 = vmatprep.subr.bf16.mxu0 %v2261
        %3398 = vmatpush2.bf16.msra.mxu0 %v2260
        %3399 = vmatprep.subr.bf16.mxu0 %v2253
        %3400 = vmatpush2.bf16.msra.mxu0 %v2252
        %3401 = vmatprep.subr.bf16.mxu0 %v2245
        %3402 = vmatpush2.bf16.msra.mxu0 %v2244
        %3403 = vmatprep.subr.bf16.mxu0 %v2237
        %3404 = vmatpush2.bf16.msra.mxu0 %v2236
        %3405 = vmatprep.subr.bf16.mxu0 %v2229
        %3406 = vmatpush2.bf16.msra.mxu0 %v2228
        %3407 = vmatprep.subr.bf16.mxu0 %v2221
        %3408 = vmatpush2.bf16.msra.mxu0 %v2220
        %3409 = vmatprep.subr.bf16.mxu0 %v2213
        %3410 = vmatpush2.bf16.msra.mxu0 %v2212
        %3411 = vmatprep.mubr.bf16.mxu0 %v3337
        %3412 = vmatmul.mubr.bf16.gmra.mxu0 %v3336
        %v3413 = vpop.f32.mrf.mxu0
        %v3414 = vadd.f32 0.0, %v3413
        %v3415 = vpop.f32.mrf.mxu0
        %v3416 = vadd.f32 0.0, %v3415
        %v3417 = vpop.f32.mrf.mxu0
        %v3418 = vpop.f32.mrf.mxu0
        %3419 = vdwg.mxu0
        %3420 = vmatprep.subr.bf16.mxu0 %v2207
        %3421 = vmatpush1.bf16.msra.mxu0 %v2206
        %3422 = vmatprep.subr.bf16.mxu0 %v2199
        %3423 = vmatpush1.bf16.msra.mxu0 %v2198
        %3424 = vmatprep.subr.bf16.mxu0 %v2191
        %3425 = vmatpush1.bf16.msra.mxu0 %v2190
        %3426 = vmatprep.subr.bf16.mxu0 %v2183
        %3427 = vmatpush1.bf16.msra.mxu0 %v2182
        %3428 = vmatprep.subr.bf16.mxu0 %v2175
        %3429 = vmatpush1.bf16.msra.mxu0 %v2174
        %3430 = vmatprep.subr.bf16.mxu0 %v2167
        %3431 = vmatpush1.bf16.msra.mxu0 %v2166
        %3432 = vmatprep.subr.bf16.mxu0 %v2159
        %3433 = vmatpush1.bf16.msra.mxu0 %v2158
        %3434 = vmatprep.subr.bf16.mxu0 %v2151
        %3435 = vmatpush1.bf16.msra.mxu0 %v2150
        %3436 = vmatprep.subr.bf16.mxu0 %v2271
        %3437 = vmatpush2.bf16.msra.mxu0 %v2270
        %3438 = vmatprep.subr.bf16.mxu0 %v2263
        %3439 = vmatpush2.bf16.msra.mxu0 %v2262
        %3440 = vmatprep.subr.bf16.mxu0 %v2255
        %3441 = vmatpush2.bf16.msra.mxu0 %v2254
        %3442 = vmatprep.subr.bf16.mxu0 %v2247
        %3443 = vmatpush2.bf16.msra.mxu0 %v2246
        %3444 = vmatprep.subr.bf16.mxu0 %v2239
        %3445 = vmatpush2.bf16.msra.mxu0 %v2238
        %3446 = vmatprep.subr.bf16.mxu0 %v2231
        %3447 = vmatpush2.bf16.msra.mxu0 %v2230
        %3448 = vmatprep.subr.bf16.mxu0 %v2223
        %3449 = vmatpush2.bf16.msra.mxu0 %v2222
        %3450 = vmatprep.subr.bf16.mxu0 %v2215
        %3451 = vmatpush2.bf16.msra.mxu0 %v2214
        %3452 = vmatprep.mubr.bf16.mxu0 %v3337
        %3453 = vmatmul.mubr.bf16.gmra.mxu0 %v3336
        %v3454 = vpop.f32.mrf.mxu0
        %v3455 = vadd.f32 0.0, %v3454
        %v3456 = vpop.f32.mrf.mxu0
        %v3457 = vadd.f32 0.0, %v3456
        %v3458 = vpop.f32.mrf.mxu0
        %v3459 = vpop.f32.mrf.mxu0
        %3460 = vdwg.mxu0
        %3461 = vmatprep.subr.bf16.mxu0 %v2209
        %3462 = vmatpush1.bf16.msra.mxu0 %v2208
        %3463 = vmatprep.subr.bf16.mxu0 %v2201
        %3464 = vmatpush1.bf16.msra.mxu0 %v2200
        %3465 = vmatprep.subr.bf16.mxu0 %v2193
        %3466 = vmatpush1.bf16.msra.mxu0 %v2192
        %3467 = vmatprep.subr.bf16.mxu0 %v2185
        %3468 = vmatpush1.bf16.msra.mxu0 %v2184
        %3469 = vmatprep.subr.bf16.mxu0 %v2177
        %3470 = vmatpush1.bf16.msra.mxu0 %v2176
        %3471 = vmatprep.subr.bf16.mxu0 %v2169
        %3472 = vmatpush1.bf16.msra.mxu0 %v2168
        %3473 = vmatprep.subr.bf16.mxu0 %v2161
        %3474 = vmatpush1.bf16.msra.mxu0 %v2160
        %3475 = vmatprep.subr.bf16.mxu0 %v2153
        %3476 = vmatpush1.bf16.msra.mxu0 %v2152
        %3477 = vmatprep.subr.bf16.mxu0 %v2273
        %3478 = vmatpush2.bf16.msra.mxu0 %v2272
        %3479 = vmatprep.subr.bf16.mxu0 %v2265
        %3480 = vmatpush2.bf16.msra.mxu0 %v2264
        %3481 = vmatprep.subr.bf16.mxu0 %v2257
        %3482 = vmatpush2.bf16.msra.mxu0 %v2256
        %3483 = vmatprep.subr.bf16.mxu0 %v2249
        %3484 = vmatpush2.bf16.msra.mxu0 %v2248
        %3485 = vmatprep.subr.bf16.mxu0 %v2241
        %3486 = vmatpush2.bf16.msra.mxu0 %v2240
        %3487 = vmatprep.subr.bf16.mxu0 %v2233
        %3488 = vmatpush2.bf16.msra.mxu0 %v2232
        %3489 = vmatprep.subr.bf16.mxu0 %v2225
        %3490 = vmatpush2.bf16.msra.mxu0 %v2224
        %3491 = vmatprep.subr.bf16.mxu0 %v2217
        %3492 = vmatpush2.bf16.msra.mxu0 %v2216
        %3493 = vmatprep.mubr.bf16.mxu0 %v3337
        %3494 = vmatmul.mubr.bf16.gmra.mxu0 %v3336
        %v3495 = vpop.f32.mrf.mxu0
        %v3496 = vadd.f32 0.0, %v3495
        %v3497 = vpop.f32.mrf.mxu0
        %v3498 = vadd.f32 0.0, %v3497
        %v3499 = vpop.f32.mrf.mxu0
        %v3500 = vpop.f32.mrf.mxu0
        %3501 = vdwg.mxu0
        %v3502 = vadd.f32 %v3328, %v3373
        %v3503 = vadd.f32 %v3329, %v3375
        %v3504 = vadd.f32 %v3330, %v3414
        %v3505 = vadd.f32 %v3331, %v3416
        %v3506 = vadd.f32 %v3332, %v3455
        %v3507 = vadd.f32 %v3333, %v3457
        %v3508 = vadd.f32 %v3334, %v3496
        %v3509 = vadd.f32 %v3335, %v3498
        %v3510 = vxor.u32 %v3502, 2147483648
        %v3511 = vxor.u32 %v3503, 2147483648
        %v3512 = vmul.f32 %v3510, 1.442695
        %v3513 = vpow.pop %v3512
        %v3514 = vmul.f32 %v3511, 1.442695
        %v3515 = vpow.pop %v3514
        %v3516 = vadd.f32 %v3513, 1.0
        %v3517 = vadd.f32 %v3515, 1.0
        %v3518 = vrcp.pop %v3516
        %v3519 = vmul.f32 1.0, %v3518
        %v3520 = vrcp.pop %v3517
        %v3521 = vmul.f32 1.0, %v3520
        %v3522 = vxor.u32 %v3504, 2147483648
        %v3523 = vxor.u32 %v3505, 2147483648
        %v3524 = vmul.f32 %v3522, 1.442695
        %v3525 = vpow.pop %v3524
        %v3526 = vmul.f32 %v3523, 1.442695
        %v3527 = vpow.pop %v3526
        %v3528 = vadd.f32 %v3525, 1.0
        %v3529 = vadd.f32 %v3527, 1.0
        %v3530 = vrcp.pop %v3528
        %v3531 = vmul.f32 1.0, %v3530
        %v3532 = vrcp.pop %v3529
        %v3533 = vmul.f32 1.0, %v3532
        %v3534 = vtanh.pop %v3506
        %v3535 = vtanh.pop %v3507
        %v3536 = vxor.u32 %v3508, 2147483648
        %v3537 = vxor.u32 %v3509, 2147483648
        %v3538 = vmul.f32 %v3536, 1.442695
        %v3539 = vpow.pop %v3538
        %v3540 = vmul.f32 %v3537, 1.442695
        %v3541 = vpow.pop %v3540
        %v3542 = vadd.f32 %v3539, 1.0
        %v3543 = vadd.f32 %v3541, 1.0
        %v3544 = vrcp.pop %v3542
        %v3545 = vmul.f32 1.0, %v3544
        %v3546 = vrcp.pop %v3543
        %v3547 = vmul.f32 1.0, %v3546
        %v3548 = vmul.f32 %v3531, %v3318
        %v3549 = vmul.f32 %v3533, %v3319
        %v3550 = vmul.f32 %v3519, %v3534
        %v3551 = vmul.f32 %v3521, %v3535
        %v3552 = vadd.f32 %v3548, %v3550
        %v3553 = vadd.f32 %v3549, %v3551
        %v3554 = vtanh.pop %v3552
        %v3555 = vtanh.pop %v3553
        %v3556 = vmul.f32 %v3545, %v3554
        %v3557 = vmul.f32 %v3547, %v3555
        %s3558 = scalar_lea.vmem %s4, 80
        %3559 = vst [vmem:[%s3558] sm:$0xff] %v3556
        %3560 = vst [vmem:[%s3558 + $0x8] sm:$0xff] %v3557
        %s3561 = scalar_lea.vmem [#allocation2], 384
        %v3562 = vld [vmem:[%s3561] sm:$0xff]
        %v3563 = vld [vmem:[%s3561 + $0x8] sm:$0xff]
        %v3564 = vld [vmem:[%s3561 + $0x10] sm:$0xff]
        %v3565 = vld [vmem:[%s3561 + $0x18] sm:$0xff]
        %v3566 = vld [vmem:[%s3561 + $0x20] sm:$0xff]
        %v3567 = vld [vmem:[%s3561 + $0x28] sm:$0xff]
        %v3568 = vld [vmem:[%s3561 + $0x30] sm:$0xff]
        %v3569 = vld [vmem:[%s3561 + $0x38] sm:$0xff]
        %v3570 = vpack.c.bf16 %v3556, %v3556
        %v3571 = vpack.c.bf16 %v3557, %v3557
        %3572 = vmatprep.subr.bf16.mxu0 %v2203
        %3573 = vmatpush1.bf16.msra.mxu0 %v2202
        %3574 = vmatprep.subr.bf16.mxu0 %v2195
        %3575 = vmatpush1.bf16.msra.mxu0 %v2194
        %3576 = vmatprep.subr.bf16.mxu0 %v2187
        %3577 = vmatpush1.bf16.msra.mxu0 %v2186
        %3578 = vmatprep.subr.bf16.mxu0 %v2179
        %3579 = vmatpush1.bf16.msra.mxu0 %v2178
        %3580 = vmatprep.subr.bf16.mxu0 %v2171
        %3581 = vmatpush1.bf16.msra.mxu0 %v2170
        %3582 = vmatprep.subr.bf16.mxu0 %v2163
        %3583 = vmatpush1.bf16.msra.mxu0 %v2162
        %3584 = vmatprep.subr.bf16.mxu0 %v2155
        %3585 = vmatpush1.bf16.msra.mxu0 %v2154
        %3586 = vmatprep.subr.bf16.mxu0 %v2147
        %3587 = vmatpush1.bf16.msra.mxu0 %v2146
        %3588 = vmatprep.subr.bf16.mxu0 %v2267
        %3589 = vmatpush2.bf16.msra.mxu0 %v2266
        %3590 = vmatprep.subr.bf16.mxu0 %v2259
        %3591 = vmatpush2.bf16.msra.mxu0 %v2258
        %3592 = vmatprep.subr.bf16.mxu0 %v2251
        %3593 = vmatpush2.bf16.msra.mxu0 %v2250
        %3594 = vmatprep.subr.bf16.mxu0 %v2243
        %3595 = vmatpush2.bf16.msra.mxu0 %v2242
        %3596 = vmatprep.subr.bf16.mxu0 %v2235
        %3597 = vmatpush2.bf16.msra.mxu0 %v2234
        %3598 = vmatprep.subr.bf16.mxu0 %v2227
        %3599 = vmatpush2.bf16.msra.mxu0 %v2226
        %3600 = vmatprep.subr.bf16.mxu0 %v2219
        %3601 = vmatpush2.bf16.msra.mxu0 %v2218
        %3602 = vmatprep.subr.bf16.mxu0 %v2211
        %3603 = vmatpush2.bf16.msra.mxu0 %v2210
        %3604 = vmatprep.mubr.bf16.mxu0 %v3571
        %3605 = vmatmul.mubr.bf16.gmra.mxu0 %v3570
        %v3606 = vpop.f32.mrf.mxu0
        %v3607 = vadd.f32 0.0, %v3606
        %v3608 = vpop.f32.mrf.mxu0
        %v3609 = vadd.f32 0.0, %v3608
        %v3610 = vpop.f32.mrf.mxu0
        %v3611 = vpop.f32.mrf.mxu0
        %3612 = vdwg.mxu0
        %3613 = vmatprep.subr.bf16.mxu0 %v2205
        %3614 = vmatpush1.bf16.msra.mxu0 %v2204
        %3615 = vmatprep.subr.bf16.mxu0 %v2197
        %3616 = vmatpush1.bf16.msra.mxu0 %v2196
        %3617 = vmatprep.subr.bf16.mxu0 %v2189
        %3618 = vmatpush1.bf16.msra.mxu0 %v2188
        %3619 = vmatprep.subr.bf16.mxu0 %v2181
        %3620 = vmatpush1.bf16.msra.mxu0 %v2180
        %3621 = vmatprep.subr.bf16.mxu0 %v2173
        %3622 = vmatpush1.bf16.msra.mxu0 %v2172
        %3623 = vmatprep.subr.bf16.mxu0 %v2165
        %3624 = vmatpush1.bf16.msra.mxu0 %v2164
        %3625 = vmatprep.subr.bf16.mxu0 %v2157
        %3626 = vmatpush1.bf16.msra.mxu0 %v2156
        %3627 = vmatprep.subr.bf16.mxu0 %v2149
        %3628 = vmatpush1.bf16.msra.mxu0 %v2148
        %3629 = vmatprep.subr.bf16.mxu0 %v2269
        %3630 = vmatpush2.bf16.msra.mxu0 %v2268
        %3631 = vmatprep.subr.bf16.mxu0 %v2261
        %3632 = vmatpush2.bf16.msra.mxu0 %v2260
        %3633 = vmatprep.subr.bf16.mxu0 %v2253
        %3634 = vmatpush2.bf16.msra.mxu0 %v2252
        %3635 = vmatprep.subr.bf16.mxu0 %v2245
        %3636 = vmatpush2.bf16.msra.mxu0 %v2244
        %3637 = vmatprep.subr.bf16.mxu0 %v2237
        %3638 = vmatpush2.bf16.msra.mxu0 %v2236
        %3639 = vmatprep.subr.bf16.mxu0 %v2229
        %3640 = vmatpush2.bf16.msra.mxu0 %v2228
        %3641 = vmatprep.subr.bf16.mxu0 %v2221
        %3642 = vmatpush2.bf16.msra.mxu0 %v2220
        %3643 = vmatprep.subr.bf16.mxu0 %v2213
        %3644 = vmatpush2.bf16.msra.mxu0 %v2212
        %3645 = vmatprep.mubr.bf16.mxu0 %v3571
        %3646 = vmatmul.mubr.bf16.gmra.mxu0 %v3570
        %v3647 = vpop.f32.mrf.mxu0
        %v3648 = vadd.f32 0.0, %v3647
        %v3649 = vpop.f32.mrf.mxu0
        %v3650 = vadd.f32 0.0, %v3649
        %v3651 = vpop.f32.mrf.mxu0
        %v3652 = vpop.f32.mrf.mxu0
        %3653 = vdwg.mxu0
        %3654 = vmatprep.subr.bf16.mxu0 %v2207
        %3655 = vmatpush1.bf16.msra.mxu0 %v2206
        %3656 = vmatprep.subr.bf16.mxu0 %v2199
        %3657 = vmatpush1.bf16.msra.mxu0 %v2198
        %3658 = vmatprep.subr.bf16.mxu0 %v2191
        %3659 = vmatpush1.bf16.msra.mxu0 %v2190
        %3660 = vmatprep.subr.bf16.mxu0 %v2183
        %3661 = vmatpush1.bf16.msra.mxu0 %v2182
        %3662 = vmatprep.subr.bf16.mxu0 %v2175
        %3663 = vmatpush1.bf16.msra.mxu0 %v2174
        %3664 = vmatprep.subr.bf16.mxu0 %v2167
        %3665 = vmatpush1.bf16.msra.mxu0 %v2166
        %3666 = vmatprep.subr.bf16.mxu0 %v2159
        %3667 = vmatpush1.bf16.msra.mxu0 %v2158
        %3668 = vmatprep.subr.bf16.mxu0 %v2151
        %3669 = vmatpush1.bf16.msra.mxu0 %v2150
        %3670 = vmatprep.subr.bf16.mxu0 %v2271
        %3671 = vmatpush2.bf16.msra.mxu0 %v2270
        %3672 = vmatprep.subr.bf16.mxu0 %v2263
        %3673 = vmatpush2.bf16.msra.mxu0 %v2262
        %3674 = vmatprep.subr.bf16.mxu0 %v2255
        %3675 = vmatpush2.bf16.msra.mxu0 %v2254
        %3676 = vmatprep.subr.bf16.mxu0 %v2247
        %3677 = vmatpush2.bf16.msra.mxu0 %v2246
        %3678 = vmatprep.subr.bf16.mxu0 %v2239
        %3679 = vmatpush2.bf16.msra.mxu0 %v2238
        %3680 = vmatprep.subr.bf16.mxu0 %v2231
        %3681 = vmatpush2.bf16.msra.mxu0 %v2230
        %3682 = vmatprep.subr.bf16.mxu0 %v2223
        %3683 = vmatpush2.bf16.msra.mxu0 %v2222
        %3684 = vmatprep.subr.bf16.mxu0 %v2215
        %3685 = vmatpush2.bf16.msra.mxu0 %v2214
        %3686 = vmatprep.mubr.bf16.mxu0 %v3571
        %3687 = vmatmul.mubr.bf16.gmra.mxu0 %v3570
        %v3688 = vpop.f32.mrf.mxu0
        %v3689 = vadd.f32 0.0, %v3688
        %v3690 = vpop.f32.mrf.mxu0
        %v3691 = vadd.f32 0.0, %v3690
        %v3692 = vpop.f32.mrf.mxu0
        %v3693 = vpop.f32.mrf.mxu0
        %3694 = vdwg.mxu0
        %3695 = vmatprep.subr.bf16.mxu0 %v2209
        %3696 = vmatpush1.bf16.msra.mxu0 %v2208
        %3697 = vmatprep.subr.bf16.mxu0 %v2201
        %3698 = vmatpush1.bf16.msra.mxu0 %v2200
        %3699 = vmatprep.subr.bf16.mxu0 %v2193
        %3700 = vmatpush1.bf16.msra.mxu0 %v2192
        %3701 = vmatprep.subr.bf16.mxu0 %v2185
        %3702 = vmatpush1.bf16.msra.mxu0 %v2184
        %3703 = vmatprep.subr.bf16.mxu0 %v2177
        %3704 = vmatpush1.bf16.msra.mxu0 %v2176
        %3705 = vmatprep.subr.bf16.mxu0 %v2169
        %3706 = vmatpush1.bf16.msra.mxu0 %v2168
        %3707 = vmatprep.subr.bf16.mxu0 %v2161
        %3708 = vmatpush1.bf16.msra.mxu0 %v2160
        %3709 = vmatprep.subr.bf16.mxu0 %v2153
        %3710 = vmatpush1.bf16.msra.mxu0 %v2152
        %3711 = vmatprep.subr.bf16.mxu0 %v2273
        %3712 = vmatpush2.bf16.msra.mxu0 %v2272
        %3713 = vmatprep.subr.bf16.mxu0 %v2265
        %3714 = vmatpush2.bf16.msra.mxu0 %v2264
        %3715 = vmatprep.subr.bf16.mxu0 %v2257
        %3716 = vmatpush2.bf16.msra.mxu0 %v2256
        %3717 = vmatprep.subr.bf16.mxu0 %v2249
        %3718 = vmatpush2.bf16.msra.mxu0 %v2248
        %3719 = vmatprep.subr.bf16.mxu0 %v2241
        %3720 = vmatpush2.bf16.msra.mxu0 %v2240
        %3721 = vmatprep.subr.bf16.mxu0 %v2233
        %3722 = vmatpush2.bf16.msra.mxu0 %v2232
        %3723 = vmatprep.subr.bf16.mxu0 %v2225
        %3724 = vmatpush2.bf16.msra.mxu0 %v2224
        %3725 = vmatprep.subr.bf16.mxu0 %v2217
        %3726 = vmatpush2.bf16.msra.mxu0 %v2216
        %3727 = vmatprep.mubr.bf16.mxu0 %v3571
        %3728 = vmatmul.mubr.bf16.gmra.mxu0 %v3570
        %v3729 = vpop.f32.mrf.mxu0
        %v3730 = vadd.f32 0.0, %v3729
        %v3731 = vpop.f32.mrf.mxu0
        %v3732 = vadd.f32 0.0, %v3731
        %v3733 = vpop.f32.mrf.mxu0
        %v3734 = vpop.f32.mrf.mxu0
        %3735 = vdwg.mxu0
        %v3736 = vadd.f32 %v3562, %v3607
        %v3737 = vadd.f32 %v3563, %v3609
        %v3738 = vadd.f32 %v3564, %v3648
        %v3739 = vadd.f32 %v3565, %v3650
        %v3740 = vadd.f32 %v3566, %v3689
        %v3741 = vadd.f32 %v3567, %v3691
        %v3742 = vadd.f32 %v3568, %v3730
        %v3743 = vadd.f32 %v3569, %v3732
        %v3744 = vxor.u32 %v3736, 2147483648
        %v3745 = vxor.u32 %v3737, 2147483648
        %v3746 = vmul.f32 %v3744, 1.442695
        %v3747 = vpow.pop %v3746
        %v3748 = vmul.f32 %v3745, 1.442695
        %v3749 = vpow.pop %v3748
        %v3750 = vadd.f32 %v3747, 1.0
        %v3751 = vadd.f32 %v3749, 1.0
        %v3752 = vrcp.pop %v3750
        %v3753 = vmul.f32 1.0, %v3752
        %v3754 = vrcp.pop %v3751
        %v3755 = vmul.f32 1.0, %v3754
        %v3756 = vxor.u32 %v3738, 2147483648
        %v3757 = vxor.u32 %v3739, 2147483648
        %v3758 = vmul.f32 %v3756, 1.442695
        %v3759 = vpow.pop %v3758
        %v3760 = vmul.f32 %v3757, 1.442695
        %v3761 = vpow.pop %v3760
        %v3762 = vadd.f32 %v3759, 1.0
        %v3763 = vadd.f32 %v3761, 1.0
        %v3764 = vrcp.pop %v3762
        %v3765 = vmul.f32 1.0, %v3764
        %v3766 = vrcp.pop %v3763
        %v3767 = vmul.f32 1.0, %v3766
        %v3768 = vtanh.pop %v3740
        %v3769 = vtanh.pop %v3741
        %v3770 = vxor.u32 %v3742, 2147483648
        %v3771 = vxor.u32 %v3743, 2147483648
        %v3772 = vmul.f32 %v3770, 1.442695
        %v3773 = vpow.pop %v3772
        %v3774 = vmul.f32 %v3771, 1.442695
        %v3775 = vpow.pop %v3774
        %v3776 = vadd.f32 %v3773, 1.0
        %v3777 = vadd.f32 %v3775, 1.0
        %v3778 = vrcp.pop %v3776
        %v3779 = vmul.f32 1.0, %v3778
        %v3780 = vrcp.pop %v3777
        %v3781 = vmul.f32 1.0, %v3780
        %v3782 = vmul.f32 %v3765, %v3552
        %v3783 = vmul.f32 %v3767, %v3553
        %v3784 = vmul.f32 %v3753, %v3768
        %v3785 = vmul.f32 %v3755, %v3769
        %v3786 = vadd.f32 %v3782, %v3784
        %v3787 = vadd.f32 %v3783, %v3785
        %v3788 = vtanh.pop %v3786
        %v3789 = vtanh.pop %v3787
        %v3790 = vmul.f32 %v3779, %v3788
        %v3791 = vmul.f32 %v3781, %v3789
        %s3792 = scalar_lea.vmem %s4, 96
        %3793 = vst [vmem:[%s3792] sm:$0xff] %v3790
        %3794 = vst [vmem:[%s3792 + $0x8] sm:$0xff] %v3791
        %s3795 = scalar_lea.vmem [#allocation2], 448
        %v3796 = vld [vmem:[%s3795] sm:$0xff]
        %v3797 = vld [vmem:[%s3795 + $0x8] sm:$0xff]
        %v3798 = vld [vmem:[%s3795 + $0x10] sm:$0xff]
        %v3799 = vld [vmem:[%s3795 + $0x18] sm:$0xff]
        %v3800 = vld [vmem:[%s3795 + $0x20] sm:$0xff]
        %v3801 = vld [vmem:[%s3795 + $0x28] sm:$0xff]
        %v3802 = vld [vmem:[%s3795 + $0x30] sm:$0xff]
        %v3803 = vld [vmem:[%s3795 + $0x38] sm:$0xff]
        %v3804 = vpack.c.bf16 %v3790, %v3790
        %v3805 = vpack.c.bf16 %v3791, %v3791
        %3806 = vmatprep.subr.bf16.mxu0 %v2203
        %3807 = vmatpush1.bf16.msra.mxu0 %v2202
        %3808 = vmatprep.subr.bf16.mxu0 %v2195
        %3809 = vmatpush1.bf16.msra.mxu0 %v2194
        %3810 = vmatprep.subr.bf16.mxu0 %v2187
        %3811 = vmatpush1.bf16.msra.mxu0 %v2186
        %3812 = vmatprep.subr.bf16.mxu0 %v2179
        %3813 = vmatpush1.bf16.msra.mxu0 %v2178
        %3814 = vmatprep.subr.bf16.mxu0 %v2171
        %3815 = vmatpush1.bf16.msra.mxu0 %v2170
        %3816 = vmatprep.subr.bf16.mxu0 %v2163
        %3817 = vmatpush1.bf16.msra.mxu0 %v2162
        %3818 = vmatprep.subr.bf16.mxu0 %v2155
        %3819 = vmatpush1.bf16.msra.mxu0 %v2154
        %3820 = vmatprep.subr.bf16.mxu0 %v2147
        %3821 = vmatpush1.bf16.msra.mxu0 %v2146
        %3822 = vmatprep.subr.bf16.mxu0 %v2267
        %3823 = vmatpush2.bf16.msra.mxu0 %v2266
        %3824 = vmatprep.subr.bf16.mxu0 %v2259
        %3825 = vmatpush2.bf16.msra.mxu0 %v2258
        %3826 = vmatprep.subr.bf16.mxu0 %v2251
        %3827 = vmatpush2.bf16.msra.mxu0 %v2250
        %3828 = vmatprep.subr.bf16.mxu0 %v2243
        %3829 = vmatpush2.bf16.msra.mxu0 %v2242
        %3830 = vmatprep.subr.bf16.mxu0 %v2235
        %3831 = vmatpush2.bf16.msra.mxu0 %v2234
        %3832 = vmatprep.subr.bf16.mxu0 %v2227
        %3833 = vmatpush2.bf16.msra.mxu0 %v2226
        %3834 = vmatprep.subr.bf16.mxu0 %v2219
        %3835 = vmatpush2.bf16.msra.mxu0 %v2218
        %3836 = vmatprep.subr.bf16.mxu0 %v2211
        %3837 = vmatpush2.bf16.msra.mxu0 %v2210
        %3838 = vmatprep.mubr.bf16.mxu0 %v3805
        %3839 = vmatmul.mubr.bf16.gmra.mxu0 %v3804
        %v3840 = vpop.f32.mrf.mxu0
        %v3841 = vadd.f32 0.0, %v3840
        %v3842 = vpop.f32.mrf.mxu0
        %v3843 = vadd.f32 0.0, %v3842
        %v3844 = vpop.f32.mrf.mxu0
        %v3845 = vpop.f32.mrf.mxu0
        %3846 = vdwg.mxu0
        %3847 = vmatprep.subr.bf16.mxu0 %v2205
        %3848 = vmatpush1.bf16.msra.mxu0 %v2204
        %3849 = vmatprep.subr.bf16.mxu0 %v2197
        %3850 = vmatpush1.bf16.msra.mxu0 %v2196
        %3851 = vmatprep.subr.bf16.mxu0 %v2189
        %3852 = vmatpush1.bf16.msra.mxu0 %v2188
        %3853 = vmatprep.subr.bf16.mxu0 %v2181
        %3854 = vmatpush1.bf16.msra.mxu0 %v2180
        %3855 = vmatprep.subr.bf16.mxu0 %v2173
        %3856 = vmatpush1.bf16.msra.mxu0 %v2172
        %3857 = vmatprep.subr.bf16.mxu0 %v2165
        %3858 = vmatpush1.bf16.msra.mxu0 %v2164
        %3859 = vmatprep.subr.bf16.mxu0 %v2157
        %3860 = vmatpush1.bf16.msra.mxu0 %v2156
        %3861 = vmatprep.subr.bf16.mxu0 %v2149
        %3862 = vmatpush1.bf16.msra.mxu0 %v2148
        %3863 = vmatprep.subr.bf16.mxu0 %v2269
        %3864 = vmatpush2.bf16.msra.mxu0 %v2268
        %3865 = vmatprep.subr.bf16.mxu0 %v2261
        %3866 = vmatpush2.bf16.msra.mxu0 %v2260
        %3867 = vmatprep.subr.bf16.mxu0 %v2253
        %3868 = vmatpush2.bf16.msra.mxu0 %v2252
        %3869 = vmatprep.subr.bf16.mxu0 %v2245
        %3870 = vmatpush2.bf16.msra.mxu0 %v2244
        %3871 = vmatprep.subr.bf16.mxu0 %v2237
        %3872 = vmatpush2.bf16.msra.mxu0 %v2236
        %3873 = vmatprep.subr.bf16.mxu0 %v2229
        %3874 = vmatpush2.bf16.msra.mxu0 %v2228
        %3875 = vmatprep.subr.bf16.mxu0 %v2221
        %3876 = vmatpush2.bf16.msra.mxu0 %v2220
        %3877 = vmatprep.subr.bf16.mxu0 %v2213
        %3878 = vmatpush2.bf16.msra.mxu0 %v2212
        %3879 = vmatprep.mubr.bf16.mxu0 %v3805
        %3880 = vmatmul.mubr.bf16.gmra.mxu0 %v3804
        %v3881 = vpop.f32.mrf.mxu0
        %v3882 = vadd.f32 0.0, %v3881
        %v3883 = vpop.f32.mrf.mxu0
        %v3884 = vadd.f32 0.0, %v3883
        %v3885 = vpop.f32.mrf.mxu0
        %v3886 = vpop.f32.mrf.mxu0
        %3887 = vdwg.mxu0
        %3888 = vmatprep.subr.bf16.mxu0 %v2207
        %3889 = vmatpush1.bf16.msra.mxu0 %v2206
        %3890 = vmatprep.subr.bf16.mxu0 %v2199
        %3891 = vmatpush1.bf16.msra.mxu0 %v2198
        %3892 = vmatprep.subr.bf16.mxu0 %v2191
        %3893 = vmatpush1.bf16.msra.mxu0 %v2190
        %3894 = vmatprep.subr.bf16.mxu0 %v2183
        %3895 = vmatpush1.bf16.msra.mxu0 %v2182
        %3896 = vmatprep.subr.bf16.mxu0 %v2175
        %3897 = vmatpush1.bf16.msra.mxu0 %v2174
        %3898 = vmatprep.subr.bf16.mxu0 %v2167
        %3899 = vmatpush1.bf16.msra.mxu0 %v2166
        %3900 = vmatprep.subr.bf16.mxu0 %v2159
        %3901 = vmatpush1.bf16.msra.mxu0 %v2158
        %3902 = vmatprep.subr.bf16.mxu0 %v2151
        %3903 = vmatpush1.bf16.msra.mxu0 %v2150
        %3904 = vmatprep.subr.bf16.mxu0 %v2271
        %3905 = vmatpush2.bf16.msra.mxu0 %v2270
        %3906 = vmatprep.subr.bf16.mxu0 %v2263
        %3907 = vmatpush2.bf16.msra.mxu0 %v2262
        %3908 = vmatprep.subr.bf16.mxu0 %v2255
        %3909 = vmatpush2.bf16.msra.mxu0 %v2254
        %3910 = vmatprep.subr.bf16.mxu0 %v2247
        %3911 = vmatpush2.bf16.msra.mxu0 %v2246
        %3912 = vmatprep.subr.bf16.mxu0 %v2239
        %3913 = vmatpush2.bf16.msra.mxu0 %v2238
        %3914 = vmatprep.subr.bf16.mxu0 %v2231
        %3915 = vmatpush2.bf16.msra.mxu0 %v2230
        %3916 = vmatprep.subr.bf16.mxu0 %v2223
        %3917 = vmatpush2.bf16.msra.mxu0 %v2222
        %3918 = vmatprep.subr.bf16.mxu0 %v2215
        %3919 = vmatpush2.bf16.msra.mxu0 %v2214
        %3920 = vmatprep.mubr.bf16.mxu0 %v3805
        %3921 = vmatmul.mubr.bf16.gmra.mxu0 %v3804
        %v3922 = vpop.f32.mrf.mxu0
        %v3923 = vadd.f32 0.0, %v3922
        %v3924 = vpop.f32.mrf.mxu0
        %v3925 = vadd.f32 0.0, %v3924
        %v3926 = vpop.f32.mrf.mxu0
        %v3927 = vpop.f32.mrf.mxu0
        %3928 = vdwg.mxu0
        %3929 = vmatprep.subr.bf16.mxu0 %v2209
        %3930 = vmatpush1.bf16.msra.mxu0 %v2208
        %3931 = vmatprep.subr.bf16.mxu0 %v2201
        %3932 = vmatpush1.bf16.msra.mxu0 %v2200
        %3933 = vmatprep.subr.bf16.mxu0 %v2193
        %3934 = vmatpush1.bf16.msra.mxu0 %v2192
        %3935 = vmatprep.subr.bf16.mxu0 %v2185
        %3936 = vmatpush1.bf16.msra.mxu0 %v2184
        %3937 = vmatprep.subr.bf16.mxu0 %v2177
        %3938 = vmatpush1.bf16.msra.mxu0 %v2176
        %3939 = vmatprep.subr.bf16.mxu0 %v2169
        %3940 = vmatpush1.bf16.msra.mxu0 %v2168
        %3941 = vmatprep.subr.bf16.mxu0 %v2161
        %3942 = vmatpush1.bf16.msra.mxu0 %v2160
        %3943 = vmatprep.subr.bf16.mxu0 %v2153
        %3944 = vmatpush1.bf16.msra.mxu0 %v2152
        %3945 = vmatprep.subr.bf16.mxu0 %v2273
        %3946 = vmatpush2.bf16.msra.mxu0 %v2272
        %3947 = vmatprep.subr.bf16.mxu0 %v2265
        %3948 = vmatpush2.bf16.msra.mxu0 %v2264
        %3949 = vmatprep.subr.bf16.mxu0 %v2257
        %3950 = vmatpush2.bf16.msra.mxu0 %v2256
        %3951 = vmatprep.subr.bf16.mxu0 %v2249
        %3952 = vmatpush2.bf16.msra.mxu0 %v2248
        %3953 = vmatprep.subr.bf16.mxu0 %v2241
        %3954 = vmatpush2.bf16.msra.mxu0 %v2240
        %3955 = vmatprep.subr.bf16.mxu0 %v2233
        %3956 = vmatpush2.bf16.msra.mxu0 %v2232
        %3957 = vmatprep.subr.bf16.mxu0 %v2225
        %3958 = vmatpush2.bf16.msra.mxu0 %v2224
        %3959 = vmatprep.subr.bf16.mxu0 %v2217
        %3960 = vmatpush2.bf16.msra.mxu0 %v2216
        %3961 = vmatprep.mubr.bf16.mxu0 %v3805
        %3962 = vmatmul.mubr.bf16.gmra.mxu0 %v3804
        %v3963 = vpop.f32.mrf.mxu0
        %v3964 = vadd.f32 0.0, %v3963
        %v3965 = vpop.f32.mrf.mxu0
        %v3966 = vadd.f32 0.0, %v3965
        %v3967 = vpop.f32.mrf.mxu0
        %v3968 = vpop.f32.mrf.mxu0
        %3969 = vdwg.mxu0
        %v3970 = vadd.f32 %v3796, %v3841
        %v3971 = vadd.f32 %v3797, %v3843
        %v3972 = vadd.f32 %v3798, %v3882
        %v3973 = vadd.f32 %v3799, %v3884
        %v3974 = vadd.f32 %v3800, %v3923
        %v3975 = vadd.f32 %v3801, %v3925
        %v3976 = vadd.f32 %v3802, %v3964
        %v3977 = vadd.f32 %v3803, %v3966
        %v3978 = vxor.u32 %v3970, 2147483648
        %v3979 = vxor.u32 %v3971, 2147483648
        %v3980 = vmul.f32 %v3978, 1.442695
        %v3981 = vpow.pop %v3980
        %v3982 = vmul.f32 %v3979, 1.442695
        %v3983 = vpow.pop %v3982
        %v3984 = vadd.f32 %v3981, 1.0
        %v3985 = vadd.f32 %v3983, 1.0
        %v3986 = vrcp.pop %v3984
        %v3987 = vmul.f32 1.0, %v3986
        %v3988 = vrcp.pop %v3985
        %v3989 = vmul.f32 1.0, %v3988
        %v3990 = vxor.u32 %v3972, 2147483648
        %v3991 = vxor.u32 %v3973, 2147483648
        %v3992 = vmul.f32 %v3990, 1.442695
        %v3993 = vpow.pop %v3992
        %v3994 = vmul.f32 %v3991, 1.442695
        %v3995 = vpow.pop %v3994
        %v3996 = vadd.f32 %v3993, 1.0
        %v3997 = vadd.f32 %v3995, 1.0
        %v3998 = vrcp.pop %v3996
        %v3999 = vmul.f32 1.0, %v3998
        %v4000 = vrcp.pop %v3997
        %v4001 = vmul.f32 1.0, %v4000
        %v4002 = vtanh.pop %v3974
        %v4003 = vtanh.pop %v3975
        %v4004 = vxor.u32 %v3976, 2147483648
        %v4005 = vxor.u32 %v3977, 2147483648
        %v4006 = vmul.f32 %v4004, 1.442695
        %v4007 = vpow.pop %v4006
        %v4008 = vmul.f32 %v4005, 1.442695
        %v4009 = vpow.pop %v4008
        %v4010 = vadd.f32 %v4007, 1.0
        %v4011 = vadd.f32 %v4009, 1.0
        %v4012 = vrcp.pop %v4010
        %v4013 = vmul.f32 1.0, %v4012
        %v4014 = vrcp.pop %v4011
        %v4015 = vmul.f32 1.0, %v4014
        %v4016 = vmul.f32 %v3999, %v3786
        %v4017 = vmul.f32 %v4001, %v3787
        %v4018 = vmul.f32 %v3987, %v4002
        %v4019 = vmul.f32 %v3989, %v4003
        %v4020 = vadd.f32 %v4016, %v4018
        %v4021 = vadd.f32 %v4017, %v4019
        %v4022 = vtanh.pop %v4020
        %v4023 = vtanh.pop %v4021
        %v4024 = vmul.f32 %v4013, %v4022
        %v4025 = vmul.f32 %v4015, %v4023
        %s4026 = scalar_lea.vmem %s4, 112
        %4027 = vst [vmem:[%s4026] sm:$0xff] %v4024
        %4028 = vst [vmem:[%s4026 + $0x8] sm:$0xff] %v4025
        %4029 = vst [vmem:[%s351] sm:$0xff] %v4024
        %4030 = vst [vmem:[%s351 + $0x8] sm:$0xff] %v4025
        %4031 = vst [vmem:[%s356] sm:$0xff] %v4020
        %4032 = vst [vmem:[%s356 + $0x8] sm:$0xff] %v4021
        %p4033 = scmp.lt.s32.totalorder %s24, 2
        %s4034 = scalar_select %p4033, %s24, 2
        %s4035 = smul.addr %s4034, 2
        %s4036 = smul.addr %s4035, 8
        %s4037 = scalar_lea.vmem %s5, %s4036
        %p4038 = scmp.lt.s32.totalorder %s24, 2
        %s4039 = scalar_select %p4038, %s24, 2
        %s4040 = smul.addr %s4039, 2
        %s4041 = smul.addr %s4040, 8
        %s4042 = scalar_lea.vmem %s6, %s4041
        // Predicated region
        $region53: #{encoder_forward.1} parent=35 // pred_check
          %p4043 = pneg %p136
        $region54: #{encoder_forward.1} parent=35 // pred_check_branch
          %4045 = sbr.rel (%p4043) target = $region56
        $region55: #{encoder_forward.1} parent=35 // pred_region
          _
        $region56: #{encoder_forward.1} parent=35 // pred_fallthru
          _
        // Predicated region
        $region57: #{encoder_forward.1} parent=35 // pred_check
          %p4046 = pneg %p162
        $region58: #{encoder_forward.1} parent=35 // pred_check_branch
          %4048 = sbr.rel (%p4046) target = $region60
        $region59: #{encoder_forward.1} parent=35 // pred_region
          _
        $region60: #{encoder_forward.1} parent=35 // pred_fallthru
          _
        // Predicated region
        $region61: #{encoder_forward.1} parent=35 // pred_check
          %p4049 = pneg %p188
        $region62: #{encoder_forward.1} parent=35 // pred_check_branch
          %4051 = sbr.rel (%p4049) target = $region64
        $region63: #{encoder_forward.1} parent=35 // pred_region
          _
        $region64: #{encoder_forward.1} parent=35 // pred_fallthru
          _
        // Predicated region
        $region65: #{encoder_forward.1} parent=35 // pred_check
          %p4052 = pneg %p136
        $region66: #{encoder_forward.1} parent=35 // pred_check_branch
          %4054 = sbr.rel (%p4052) target = $region68
        $region67: #{encoder_forward.1} parent=35 // pred_region
          _
        $region68: #{encoder_forward.1} parent=35 // pred_fallthru
          _
      $region36: #{encoder_forward.1} parent=5 // pred_fallthru
        _
      %p4055 = scmp.le.s32.totalorder 2, %s19
      // Predicated region
      $region69: #{encoder_forward.1} parent=5 // pred_check
        %p4056 = pneg %p4055
      $region70: #{encoder_forward.1} parent=5 // pred_check_branch
        %4058 = sbr.rel (%p4056) target = $region72
      $region71: #{encoder_forward.1} parent=5 // pred_region
        %s4059 = ssub.s32 %s19, 2
        // Predicated region
        $region73: #{encoder_forward.1} parent=71 // pred_check
          %p4060 = pneg %p168
        $region74: #{encoder_forward.1} parent=71 // pred_check_branch
          %4062 = sbr.rel (%p4060) target = $region76
        $region75: #{encoder_forward.1} parent=71 // pred_region
          %p4063 = scmp.lt.s32.totalorder %s25, 2
          %s4064 = scalar_select %p4063, %s25, 2
          %s4065 = smul.addr %s4064, 2
          %s4066 = smul.addr %s4065, 8
          %s4067 = scalar_lea.vmem %s5, %s4066
        $region76: #{encoder_forward.1} parent=71 // pred_fallthru
          _
        // Predicated region
        $region77: #{encoder_forward.1} parent=71 // pred_check
          %p4068 = pneg %p194
        $region78: #{encoder_forward.1} parent=71 // pred_check_branch
          %4070 = sbr.rel (%p4068) target = $region80
        $region79: #{encoder_forward.1} parent=71 // pred_region
          %p4071 = scmp.lt.s32.totalorder %s25, 2
          %s4072 = scalar_select %p4071, %s25, 2
          %s4073 = smul.addr %s4072, 2
          %s4074 = smul.addr %s4073, 8
          %s4075 = scalar_lea.vmem %s6, %s4074
        $region80: #{encoder_forward.1} parent=71 // pred_fallthru
          _
      $region72: #{encoder_forward.1} parent=5 // pred_fallthru
        _
    $region6: #{encoder_forward.1} parent=1 // loop_footer
      %s23 = sadd.s32 1, %s19
    $region7: #{encoder_forward.1} parent=1 // loop_footer_branch
      %18 = sbr.rel target = $region3
    $region8: #{encoder_forward.1} parent=1 // loop_exit
      _
    %4076 = vsyncpa [#allocation4], 1
    %s4077 = scalar_lea.sflag [#allocation4], 1
    %4078 = vsyncpa %s4077, 1
    %4079 = vsyncpa [#allocation6], 1
    %s4080 = scalar_lea.sflag [#allocation6], 1
    %4081 = vsyncpa %s4080, 1

</llo_original>
